<compile_context>
chip_gen: v5e
topology: v5e:2x2
jax: 0.10.0
libtpu: 0.0.40
codegen_flags: <defaults>
</compile_context>

<pallas_src>
import jax
import jax.numpy as jnp
from jax.experimental import pallas as pl
from jax.experimental.pallas import tpu as pltpu

IN_DIM = 180                                    # hardcoded in the PyTorch __init__
PAD_IN = 256                                    # lane-aligned K for the first matmul
DIMS = [IN_DIM, 256, 512, 1024, 512, 256, 8]    # encoder path used by forward()
NDIMS = DIMS[1:]                                # [256, 512, 1024, 512, 256, 8]
KDIMS = [PAD_IN] + DIMS[1:-1]                   # K dims as the kernel sees them
OUT_PAD = 128                                   # lane-dense padded width of layer 6
GB_COLS = 1024                                  # packed gamma/beta/bias table width
BN_EPS = 1e-5
N_LAYERS = 6


def simplenet_kernel(x_ref, w1, w2, w3, w4, w5, w6, gb_ref, out_ref):
    """One grid step = one independent BN batch (group) through the 6-layer MLP:
    5 x (Linear[no bias] -> folded train-mode BN -> ReLU) + Linear(+bias, N padded)."""
    w_refs = (w1, w2, w3, w4, w5, w6)
    gb = gb_ref[...]                               # (11, 1024) f32: gamma/beta pairs + b6
    h = x_ref[...]                                 # (GB, PAD_IN) f32

    for i in range(5):
        # bf16 MXU matmul with f32 accumulation.  Bias omitted: training-mode BN's
        # batch-mean subtraction cancels a constant per-feature bias exactly.
        z = jnp.dot(h.astype(jnp.bfloat16), w_refs[i][...],
                    preferred_element_type=jnp.float32)
        n = NDIMS[i]
        gamma = gb[2 * i:2 * i + 1, :n]
        beta = gb[2 * i + 1:2 * i + 2, :n]
        # One-pass BN stats (E[z^2]-mu^2, clamped): one fewer VPU pass over z and
        # half the cross-sublane reductions.  Cancellation is benign in f32 here.
        mu = jnp.mean(z, axis=0, keepdims=True)
        ez2 = jnp.mean(z * z, axis=0, keepdims=True)
        var = jnp.maximum(ez2 - mu * mu, 0.0)       # biased batch variance
        s = gamma * jax.lax.rsqrt(var + BN_EPS)
        t = beta - mu * s
        h = jnp.maximum(z * s + t, 0.0)

    z = jnp.dot(h.astype(jnp.bfloat16), w6[...], preferred_element_type=jnp.float32)
    out_ref[...] = (z + gb[10:11, :OUT_PAD]).astype(out_ref.dtype)


def init_params(key):
    """PyTorch-style init (f32 master copies) for the 6 encoder layers."""
    Ws, Bs = [], []
    for li in range(N_LAYERS):
        fan_in, fan_out = DIMS[li], DIMS[li + 1]
        key, kw, kb = jax.random.split(key, 3)
        bound = 1.0 / (fan_in ** 0.5)
        Ws.append(jax.random.uniform(kw, (fan_in, fan_out), jnp.float32, -bound, bound))
        Bs.append(jax.random.uniform(kb, (1, fan_out), jnp.float32, -bound, bound))
    gammas = [jnp.ones((1, DIMS[i + 1]), jnp.float32) for i in range(5)]
    betas = [jnp.zeros((1, DIMS[i + 1]), jnp.float32) for i in range(5)]
    return Ws, Bs, gammas, betas


def pack_kernel_params(Ws, Bs, gammas, betas):
    """Kernel parameter set: bf16 weights (W1 K-padded 180->256, W6 N-padded 8->128)
    and ONE packed (11, 1024) f32 table holding gamma1,beta1,...,gamma5,beta5,b6.
    Layer 1-5 biases are dropped (cancelled exactly by train-mode BN)."""
    w_bf16 = []
    for i, w in enumerate(Ws):
        if i == 0:
            w = jnp.pad(w, ((0, PAD_IN - IN_DIM), (0, 0)))
        if i == N_LAYERS - 1:
            w = jnp.pad(w, ((0, 0), (0, OUT_PAD - NDIMS[-1])))
        w_bf16.append(w.astype(jnp.bfloat16))

    gb = jnp.zeros((11, GB_COLS), jnp.float32)
    for i in range(5):
        gb = gb.at[2 * i, :NDIMS[i]].set(gammas[i][0])
        gb = gb.at[2 * i + 1, :NDIMS[i]].set(betas[i][0])
    gb = gb.at[10, :NDIMS[-1]].set(Bs[5][0])
    return w_bf16, gb


def simplenet_forward_groups(x, kernel_params):
    """x: (G, GB, ...) -> (G, GB, 8).  Each group g is one independent SimpleNet
    forward pass (one training-mode BN batch per group)."""
    w_bf16, gb = kernel_params
    G, GB = x.shape[0], x.shape[1]
    assert GB % 8 == 0, "per-group batch must be a multiple of 8 (sublane tiling)"
    x2 = x.reshape(G * GB, -1).astype(jnp.float32)       # x.view(x.size(0), -1) per group
    assert x2.shape[1] == IN_DIM
    x_pad = jnp.pad(x2, ((0, 0), (0, PAD_IN - IN_DIM)))  # zero K-pad: exact

    w_ndims = [NDIMS[i] if i < 5 else OUT_PAD for i in range(N_LAYERS)]

    # Constant index maps -> weights + BN/bias table are DMA'd once and stay
    # resident in VMEM across all grid steps (per TensorCore under megacore).
    w_specs = [pl.BlockSpec((KDIMS[i], w_ndims[i]), lambda g: (0, 0))
               for i in range(N_LAYERS)]
    in_specs = ([pl.BlockSpec((GB, PAD_IN), lambda g: (g, 0))]        # x: new block per step
                + w_specs
                + [pl.BlockSpec((11, GB_COLS), lambda g: (0, 0))])    # packed BN/bias table
    out_spec = pl.BlockSpec((GB, OUT_PAD), lambda g: (g, 0))          # lane-dense stores

    flops = 2 * G * GB * sum(k * n for k, n in zip(KDIMS, w_ndims))
    weight_bytes = sum(k * n * 2 for k, n in zip(KDIMS, w_ndims))
    io_bytes = x_pad.size * 4 + G * GB * OUT_PAD * 4 + 11 * GB_COLS * 4
    cost = pl.CostEstimate(flops=int(flops),
                           transcendentals=int(G * sum(NDIMS[:5])),
                           bytes_accessed=int(weight_bytes + io_bytes))

    out = pl.pallas_call(
        simplenet_kernel,
        out_shape=jax.ShapeDtypeStruct((G * GB, OUT_PAD), jnp.float32),
        grid=(G,),
        in_specs=in_specs,
        out_specs=out_spec,
        compiler_params=pltpu.CompilerParams(
            dimension_semantics=("parallel",),          # v7x: shard groups over both TCs
            vmem_limit_bytes=16 * 1024 * 1024),         # footprint ~6 MB, keep headroom
        cost_estimate=cost,
    )(x_pad, *w_bf16, gb)

    return out[:, :NDIMS[-1]].reshape(G, GB, NDIMS[-1])


def simplenet_forward(x, kernel_params):
    """Single-BN-batch forward, identical to the module's forward(x)."""
    return simplenet_forward_groups(x[None], kernel_params)[0]


def reference_kernel_math(xg, kernel_params):
    """Pure-JAX replica of exactly what the kernel computes for one group."""
    w_bf16, gb = kernel_params
    GB = xg.shape[0]
    h = jnp.pad(xg.reshape(GB, -1).astype(jnp.float32), ((0, 0), (0, PAD_IN - IN_DIM)))
    for i in range(5):
        z = jnp.dot(h.astype(jnp.bfloat16), w_bf16[i], preferred_element_type=jnp.float32)
        n = NDIMS[i]
        gamma = gb[2 * i:2 * i + 1, :n]
        beta = gb[2 * i + 1:2 * i + 2, :n]
        mu = jnp.mean(z, axis=0, keepdims=True)
        var = jnp.maximum(jnp.mean(z * z, axis=0, keepdims=True) - mu * mu, 0.0)
        s = gamma * jax.lax.rsqrt(var + BN_EPS)
        h = jnp.maximum(z * s + (beta - mu * s), 0.0)
    z = jnp.dot(h.astype(jnp.bfloat16), w_bf16[5], preferred_element_type=jnp.float32)
    return (z + gb[10:11, :OUT_PAD])[:, :NDIMS[-1]]


def reference_module_f32(xg, Ws, Bs, gammas, betas):
    """f32 reference reproducing the PyTorch module's forward exactly for one batch
    (Linear+bias, training-mode BatchNorm1d, ReLU; final Linear+bias)."""
    B = xg.shape[0]
    h = xg.reshape(B, -1).astype(jnp.float32)
    for i in range(5):
        z = h @ Ws[i] + Bs[i]
        mu = jnp.mean(z, axis=0, keepdims=True)
        var = jnp.mean(jnp.square(z - mu), axis=0, keepdims=True)
        h = jnp.maximum((z - mu) / jnp.sqrt(var + BN_EPS) * gammas[i] + betas[i], 0.0)
    return h @ Ws[5] + Bs[5]


if __name__ == "__main__":
    key = jax.random.PRNGKey(0)
    k_param, k_x = jax.random.split(key)

    Ws, Bs, gammas, betas = init_params(k_param)
    kparams = pack_kernel_params(Ws, Bs, gammas, betas)

    # 4 independent groups x batch 8; each (8, 4, 45) group is flattened to (8, 180)
    # and normalized as its own training-mode BN batch (matching the module forward).
    G, GB = 4, 8
    x = jax.random.normal(k_x, (G, GB, 4, 45), jnp.float32)

    out = jax.block_until_ready(simplenet_forward_groups(x, kparams))
    assert out.shape == (G, GB, 8), out.shape

    # 1) Tight check against a pure-JAX replica of the kernel's exact math.
    ref_k = jnp.stack([reference_kernel_math(x[g], kparams) for g in range(G)])
    assert jnp.allclose(out, ref_k, atol=5e-3, rtol=5e-3), float(jnp.max(jnp.abs(out - ref_k)))

    # 2) Semantic check against the original f32 module forward per group (difference
    #    is only bf16 quantization in the matmuls; bias removal + zero padding are exact).
    ref_f = jnp.stack([reference_module_f32(x[g], Ws, Bs, gammas, betas) for g in range(G)])
    rel = float(jnp.linalg.norm(out - ref_f) / (jnp.linalg.norm(ref_f) + 1e-12))
    assert rel < 7.5e-2, rel

    print("KERNEL_OK")
</pallas_src>

<mosaic_0001>
module attributes {stable_mosaic.version = 11 : i64} {
  func.func @simplenet_kernel(%arg0: i32, %arg1: memref<8x256xf32, #tpu.memory_space<vmem>>, %arg2: memref<256x256xbf16, #tpu.memory_space<vmem>>, %arg3: memref<256x512xbf16, #tpu.memory_space<vmem>>, %arg4: memref<512x1024xbf16, #tpu.memory_space<vmem>>, %arg5: memref<1024x512xbf16, #tpu.memory_space<vmem>>, %arg6: memref<512x256xbf16, #tpu.memory_space<vmem>>, %arg7: memref<256x128xbf16, #tpu.memory_space<vmem>>, %arg8: memref<11x1024xf32, #tpu.memory_space<vmem>>, %arg9: memref<8x128xf32, #tpu.memory_space<vmem>>) attributes {dimension_semantics = [#tpu.dimension_semantics<parallel>], iteration_bounds = array<i64: 4>, scalar_prefetch = 0 : i64, scratch_operands = 0 : i64, tpu.core_type = #tpu.core_type<tc>, window_params = [{transform_indices = @transform_0, window_bounds = array<i64: 8, 256>}, {pipeline_mode = #tpu.pipeline_mode<synchronous>, transform_indices = @transform_1, window_bounds = array<i64: 256, 256>}, {pipeline_mode = #tpu.pipeline_mode<synchronous>, transform_indices = @transform_2, window_bounds = array<i64: 256, 512>}, {pipeline_mode = #tpu.pipeline_mode<synchronous>, transform_indices = @transform_3, window_bounds = array<i64: 512, 1024>}, {pipeline_mode = #tpu.pipeline_mode<synchronous>, transform_indices = @transform_4, window_bounds = array<i64: 1024, 512>}, {pipeline_mode = #tpu.pipeline_mode<synchronous>, transform_indices = @transform_5, window_bounds = array<i64: 512, 256>}, {pipeline_mode = #tpu.pipeline_mode<synchronous>, transform_indices = @transform_6, window_bounds = array<i64: 256, 128>}, {pipeline_mode = #tpu.pipeline_mode<synchronous>, transform_indices = @transform_7, window_bounds = array<i64: 11, 1024>}, {transform_indices = @transform_8, window_bounds = array<i64: 8, 128>}]} {
    %c0 = arith.constant 0 : index
    %c0_0 = arith.constant 0 : index
    %0 = vector.load %arg8[%c0, %c0_0] : memref<11x1024xf32, #tpu.memory_space<vmem>>, vector<11x1024xf32>
    %c0_1 = arith.constant 0 : index
    %c0_2 = arith.constant 0 : index
    %1 = vector.load %arg1[%c0_1, %c0_2] : memref<8x256xf32, #tpu.memory_space<vmem>>, vector<8x256xf32>
    %2 = arith.truncf %1 : vector<8x256xf32> to vector<8x256xbf16>
    %c0_3 = arith.constant 0 : index
    %c0_4 = arith.constant 0 : index
    %3 = vector.load %arg2[%c0_3, %c0_4] : memref<256x256xbf16, #tpu.memory_space<vmem>>, vector<256x256xbf16>
    %cst = arith.constant dense<0.000000e+00> : vector<8x256xf32>
    %4 = tpu.matmul %2, %3, %cst {dimension_numbers = #tpu.dot_dimension_numbers<[1], [0], [0], [1], [0, 0, 1, 1], [], []>} : vector<8x256xbf16>, vector<256x256xbf16>, vector<8x256xf32> -> vector<8x256xf32>
    %5 = vector.extract_strided_slice %0 {offsets = [0, 0], sizes = [1, 256], strides = [1, 1]} : vector<11x1024xf32> to vector<1x256xf32>
    %6 = vector.extract_strided_slice %0 {offsets = [1, 0], sizes = [1, 256], strides = [1, 1]} : vector<11x1024xf32> to vector<1x256xf32>
    %cst_5 = arith.constant dense<0.000000e+00> : vector<256xf32>
    %7 = vector.multi_reduction <add>, %4, %cst_5 [0] : vector<8x256xf32> to vector<256xf32>
    %8 = vector.shape_cast %7 : vector<256xf32> to vector<1x256xf32>
    %cst_6 = arith.constant 8.000000e+00 : f32
    %9 = vector.broadcast %cst_6 : f32 to vector<1x256xf32>
    %10 = arith.divf %8, %9 : vector<1x256xf32>
    %11 = arith.mulf %4, %4 : vector<8x256xf32>
    %cst_7 = arith.constant dense<0.000000e+00> : vector<256xf32>
    %12 = vector.multi_reduction <add>, %11, %cst_7 [0] : vector<8x256xf32> to vector<256xf32>
    %13 = vector.shape_cast %12 : vector<256xf32> to vector<1x256xf32>
    %cst_8 = arith.constant 8.000000e+00 : f32
    %14 = vector.broadcast %cst_8 : f32 to vector<1x256xf32>
    %15 = arith.divf %13, %14 : vector<1x256xf32>
    %16 = arith.mulf %10, %10 : vector<1x256xf32>
    %17 = arith.subf %15, %16 : vector<1x256xf32>
    %cst_9 = arith.constant 0.000000e+00 : f32
    %18 = vector.broadcast %cst_9 : f32 to vector<1x256xf32>
    %19 = arith.maximumf %17, %18 : vector<1x256xf32>
    %cst_10 = arith.constant 9.99999974E-6 : f32
    %20 = vector.broadcast %cst_10 : f32 to vector<1x256xf32>
    %21 = arith.addf %19, %20 : vector<1x256xf32>
    %22 = math.rsqrt %21 : vector<1x256xf32>
    %23 = arith.mulf %5, %22 : vector<1x256xf32>
    %24 = arith.mulf %10, %23 : vector<1x256xf32>
    %25 = arith.subf %6, %24 : vector<1x256xf32>
    %26 = vector.broadcast %23 : vector<1x256xf32> to vector<8x256xf32>
    %27 = arith.mulf %4, %26 : vector<8x256xf32>
    %28 = vector.broadcast %25 : vector<1x256xf32> to vector<8x256xf32>
    %29 = arith.addf %27, %28 : vector<8x256xf32>
    %cst_11 = arith.constant 0.000000e+00 : f32
    %30 = vector.broadcast %cst_11 : f32 to vector<8x256xf32>
    %31 = arith.maximumf %29, %30 : vector<8x256xf32>
    %32 = arith.truncf %31 : vector<8x256xf32> to vector<8x256xbf16>
    %c0_12 = arith.constant 0 : index
    %c0_13 = arith.constant 0 : index
    %33 = vector.load %arg3[%c0_12, %c0_13] : memref<256x512xbf16, #tpu.memory_space<vmem>>, vector<256x512xbf16>
    %cst_14 = arith.constant dense<0.000000e+00> : vector<8x512xf32>
    %34 = tpu.matmul %32, %33, %cst_14 {dimension_numbers = #tpu.dot_dimension_numbers<[1], [0], [0], [1], [0, 0, 1, 1], [], []>} : vector<8x256xbf16>, vector<256x512xbf16>, vector<8x512xf32> -> vector<8x512xf32>
    %35 = vector.extract_strided_slice %0 {offsets = [2, 0], sizes = [1, 512], strides = [1, 1]} : vector<11x1024xf32> to vector<1x512xf32>
    %36 = vector.extract_strided_slice %0 {offsets = [3, 0], sizes = [1, 512], strides = [1, 1]} : vector<11x1024xf32> to vector<1x512xf32>
    %cst_15 = arith.constant dense<0.000000e+00> : vector<512xf32>
    %37 = vector.multi_reduction <add>, %34, %cst_15 [0] : vector<8x512xf32> to vector<512xf32>
    %38 = vector.shape_cast %37 : vector<512xf32> to vector<1x512xf32>
    %cst_16 = arith.constant 8.000000e+00 : f32
    %39 = vector.broadcast %cst_16 : f32 to vector<1x512xf32>
    %40 = arith.divf %38, %39 : vector<1x512xf32>
    %41 = arith.mulf %34, %34 : vector<8x512xf32>
    %cst_17 = arith.constant dense<0.000000e+00> : vector<512xf32>
    %42 = vector.multi_reduction <add>, %41, %cst_17 [0] : vector<8x512xf32> to vector<512xf32>
    %43 = vector.shape_cast %42 : vector<512xf32> to vector<1x512xf32>
    %cst_18 = arith.constant 8.000000e+00 : f32
    %44 = vector.broadcast %cst_18 : f32 to vector<1x512xf32>
    %45 = arith.divf %43, %44 : vector<1x512xf32>
    %46 = arith.mulf %40, %40 : vector<1x512xf32>
    %47 = arith.subf %45, %46 : vector<1x512xf32>
    %cst_19 = arith.constant 0.000000e+00 : f32
    %48 = vector.broadcast %cst_19 : f32 to vector<1x512xf32>
    %49 = arith.maximumf %47, %48 : vector<1x512xf32>
    %cst_20 = arith.constant 9.99999974E-6 : f32
    %50 = vector.broadcast %cst_20 : f32 to vector<1x512xf32>
    %51 = arith.addf %49, %50 : vector<1x512xf32>
    %52 = math.rsqrt %51 : vector<1x512xf32>
    %53 = arith.mulf %35, %52 : vector<1x512xf32>
    %54 = arith.mulf %40, %53 : vector<1x512xf32>
    %55 = arith.subf %36, %54 : vector<1x512xf32>
    %56 = vector.broadcast %53 : vector<1x512xf32> to vector<8x512xf32>
    %57 = arith.mulf %34, %56 : vector<8x512xf32>
    %58 = vector.broadcast %55 : vector<1x512xf32> to vector<8x512xf32>
    %59 = arith.addf %57, %58 : vector<8x512xf32>
    %cst_21 = arith.constant 0.000000e+00 : f32
    %60 = vector.broadcast %cst_21 : f32 to vector<8x512xf32>
    %61 = arith.maximumf %59, %60 : vector<8x512xf32>
    %62 = arith.truncf %61 : vector<8x512xf32> to vector<8x512xbf16>
    %c0_22 = arith.constant 0 : index
    %c0_23 = arith.constant 0 : index
    %63 = vector.load %arg4[%c0_22, %c0_23] : memref<512x1024xbf16, #tpu.memory_space<vmem>>, vector<512x1024xbf16>
    %cst_24 = arith.constant dense<0.000000e+00> : vector<8x1024xf32>
    %64 = tpu.matmul %62, %63, %cst_24 {dimension_numbers = #tpu.dot_dimension_numbers<[1], [0], [0], [1], [0, 0, 1, 1], [], []>} : vector<8x512xbf16>, vector<512x1024xbf16>, vector<8x1024xf32> -> vector<8x1024xf32>
    %65 = vector.extract_strided_slice %0 {offsets = [4, 0], sizes = [1, 1024], strides = [1, 1]} : vector<11x1024xf32> to vector<1x1024xf32>
    %66 = vector.extract_strided_slice %0 {offsets = [5, 0], sizes = [1, 1024], strides = [1, 1]} : vector<11x1024xf32> to vector<1x1024xf32>
    %cst_25 = arith.constant dense<0.000000e+00> : vector<1024xf32>
    %67 = vector.multi_reduction <add>, %64, %cst_25 [0] : vector<8x1024xf32> to vector<1024xf32>
    %68 = vector.shape_cast %67 : vector<1024xf32> to vector<1x1024xf32>
    %cst_26 = arith.constant 8.000000e+00 : f32
    %69 = vector.broadcast %cst_26 : f32 to vector<1x1024xf32>
    %70 = arith.divf %68, %69 : vector<1x1024xf32>
    %71 = arith.mulf %64, %64 : vector<8x1024xf32>
    %cst_27 = arith.constant dense<0.000000e+00> : vector<1024xf32>
    %72 = vector.multi_reduction <add>, %71, %cst_27 [0] : vector<8x1024xf32> to vector<1024xf32>
    %73 = vector.shape_cast %72 : vector<1024xf32> to vector<1x1024xf32>
    %cst_28 = arith.constant 8.000000e+00 : f32
    %74 = vector.broadcast %cst_28 : f32 to vector<1x1024xf32>
    %75 = arith.divf %73, %74 : vector<1x1024xf32>
    %76 = arith.mulf %70, %70 : vector<1x1024xf32>
    %77 = arith.subf %75, %76 : vector<1x1024xf32>
    %cst_29 = arith.constant 0.000000e+00 : f32
    %78 = vector.broadcast %cst_29 : f32 to vector<1x1024xf32>
    %79 = arith.maximumf %77, %78 : vector<1x1024xf32>
    %cst_30 = arith.constant 9.99999974E-6 : f32
    %80 = vector.broadcast %cst_30 : f32 to vector<1x1024xf32>
    %81 = arith.addf %79, %80 : vector<1x1024xf32>
    %82 = math.rsqrt %81 : vector<1x1024xf32>
    %83 = arith.mulf %65, %82 : vector<1x1024xf32>
    %84 = arith.mulf %70, %83 : vector<1x1024xf32>
    %85 = arith.subf %66, %84 : vector<1x1024xf32>
    %86 = vector.broadcast %83 : vector<1x1024xf32> to vector<8x1024xf32>
    %87 = arith.mulf %64, %86 : vector<8x1024xf32>
    %88 = vector.broadcast %85 : vector<1x1024xf32> to vector<8x1024xf32>
    %89 = arith.addf %87, %88 : vector<8x1024xf32>
    %cst_31 = arith.constant 0.000000e+00 : f32
    %90 = vector.broadcast %cst_31 : f32 to vector<8x1024xf32>
    %91 = arith.maximumf %89, %90 : vector<8x1024xf32>
    %92 = arith.truncf %91 : vector<8x1024xf32> to vector<8x1024xbf16>
    %c0_32 = arith.constant 0 : index
    %c0_33 = arith.constant 0 : index
    %93 = vector.load %arg5[%c0_32, %c0_33] : memref<1024x512xbf16, #tpu.memory_space<vmem>>, vector<1024x512xbf16>
    %cst_34 = arith.constant dense<0.000000e+00> : vector<8x512xf32>
    %94 = tpu.matmul %92, %93, %cst_34 {dimension_numbers = #tpu.dot_dimension_numbers<[1], [0], [0], [1], [0, 0, 1, 1], [], []>} : vector<8x1024xbf16>, vector<1024x512xbf16>, vector<8x512xf32> -> vector<8x512xf32>
    %95 = vector.extract_strided_slice %0 {offsets = [6, 0], sizes = [1, 512], strides = [1, 1]} : vector<11x1024xf32> to vector<1x512xf32>
    %96 = vector.extract_strided_slice %0 {offsets = [7, 0], sizes = [1, 512], strides = [1, 1]} : vector<11x1024xf32> to vector<1x512xf32>
    %cst_35 = arith.constant dense<0.000000e+00> : vector<512xf32>
    %97 = vector.multi_reduction <add>, %94, %cst_35 [0] : vector<8x512xf32> to vector<512xf32>
    %98 = vector.shape_cast %97 : vector<512xf32> to vector<1x512xf32>
    %cst_36 = arith.constant 8.000000e+00 : f32
    %99 = vector.broadcast %cst_36 : f32 to vector<1x512xf32>
    %100 = arith.divf %98, %99 : vector<1x512xf32>
    %101 = arith.mulf %94, %94 : vector<8x512xf32>
    %cst_37 = arith.constant dense<0.000000e+00> : vector<512xf32>
    %102 = vector.multi_reduction <add>, %101, %cst_37 [0] : vector<8x512xf32> to vector<512xf32>
    %103 = vector.shape_cast %102 : vector<512xf32> to vector<1x512xf32>
    %cst_38 = arith.constant 8.000000e+00 : f32
    %104 = vector.broadcast %cst_38 : f32 to vector<1x512xf32>
    %105 = arith.divf %103, %104 : vector<1x512xf32>
    %106 = arith.mulf %100, %100 : vector<1x512xf32>
    %107 = arith.subf %105, %106 : vector<1x512xf32>
    %cst_39 = arith.constant 0.000000e+00 : f32
    %108 = vector.broadcast %cst_39 : f32 to vector<1x512xf32>
    %109 = arith.maximumf %107, %108 : vector<1x512xf32>
    %cst_40 = arith.constant 9.99999974E-6 : f32
    %110 = vector.broadcast %cst_40 : f32 to vector<1x512xf32>
    %111 = arith.addf %109, %110 : vector<1x512xf32>
    %112 = math.rsqrt %111 : vector<1x512xf32>
    %113 = arith.mulf %95, %112 : vector<1x512xf32>
    %114 = arith.mulf %100, %113 : vector<1x512xf32>
    %115 = arith.subf %96, %114 : vector<1x512xf32>
    %116 = vector.broadcast %113 : vector<1x512xf32> to vector<8x512xf32>
    %117 = arith.mulf %94, %116 : vector<8x512xf32>
    %118 = vector.broadcast %115 : vector<1x512xf32> to vector<8x512xf32>
    %119 = arith.addf %117, %118 : vector<8x512xf32>
    %cst_41 = arith.constant 0.000000e+00 : f32
    %120 = vector.broadcast %cst_41 : f32 to vector<8x512xf32>
    %121 = arith.maximumf %119, %120 : vector<8x512xf32>
    %122 = arith.truncf %121 : vector<8x512xf32> to vector<8x512xbf16>
    %c0_42 = arith.constant 0 : index
    %c0_43 = arith.constant 0 : index
    %123 = vector.load %arg6[%c0_42, %c0_43] : memref<512x256xbf16, #tpu.memory_space<vmem>>, vector<512x256xbf16>
    %cst_44 = arith.constant dense<0.000000e+00> : vector<8x256xf32>
    %124 = tpu.matmul %122, %123, %cst_44 {dimension_numbers = #tpu.dot_dimension_numbers<[1], [0], [0], [1], [0, 0, 1, 1], [], []>} : vector<8x512xbf16>, vector<512x256xbf16>, vector<8x256xf32> -> vector<8x256xf32>
    %125 = vector.extract_strided_slice %0 {offsets = [8, 0], sizes = [1, 256], strides = [1, 1]} : vector<11x1024xf32> to vector<1x256xf32>
    %126 = vector.extract_strided_slice %0 {offsets = [9, 0], sizes = [1, 256], strides = [1, 1]} : vector<11x1024xf32> to vector<1x256xf32>
    %cst_45 = arith.constant dense<0.000000e+00> : vector<256xf32>
    %127 = vector.multi_reduction <add>, %124, %cst_45 [0] : vector<8x256xf32> to vector<256xf32>
    %128 = vector.shape_cast %127 : vector<256xf32> to vector<1x256xf32>
    %cst_46 = arith.constant 8.000000e+00 : f32
    %129 = vector.broadcast %cst_46 : f32 to vector<1x256xf32>
    %130 = arith.divf %128, %129 : vector<1x256xf32>
    %131 = arith.mulf %124, %124 : vector<8x256xf32>
    %cst_47 = arith.constant dense<0.000000e+00> : vector<256xf32>
    %132 = vector.multi_reduction <add>, %131, %cst_47 [0] : vector<8x256xf32> to vector<256xf32>
    %133 = vector.shape_cast %132 : vector<256xf32> to vector<1x256xf32>
    %cst_48 = arith.constant 8.000000e+00 : f32
    %134 = vector.broadcast %cst_48 : f32 to vector<1x256xf32>
    %135 = arith.divf %133, %134 : vector<1x256xf32>
    %136 = arith.mulf %130, %130 : vector<1x256xf32>
    %137 = arith.subf %135, %136 : vector<1x256xf32>
    %cst_49 = arith.constant 0.000000e+00 : f32
    %138 = vector.broadcast %cst_49 : f32 to vector<1x256xf32>
    %139 = arith.maximumf %137, %138 : vector<1x256xf32>
    %cst_50 = arith.constant 9.99999974E-6 : f32
    %140 = vector.broadcast %cst_50 : f32 to vector<1x256xf32>
    %141 = arith.addf %139, %140 : vector<1x256xf32>
    %142 = math.rsqrt %141 : vector<1x256xf32>
    %143 = arith.mulf %125, %142 : vector<1x256xf32>
    %144 = arith.mulf %130, %143 : vector<1x256xf32>
    %145 = arith.subf %126, %144 : vector<1x256xf32>
    %146 = vector.broadcast %143 : vector<1x256xf32> to vector<8x256xf32>
    %147 = arith.mulf %124, %146 : vector<8x256xf32>
    %148 = vector.broadcast %145 : vector<1x256xf32> to vector<8x256xf32>
    %149 = arith.addf %147, %148 : vector<8x256xf32>
    %cst_51 = arith.constant 0.000000e+00 : f32
    %150 = vector.broadcast %cst_51 : f32 to vector<8x256xf32>
    %151 = arith.maximumf %149, %150 : vector<8x256xf32>
    %152 = arith.truncf %151 : vector<8x256xf32> to vector<8x256xbf16>
    %c0_52 = arith.constant 0 : index
    %c0_53 = arith.constant 0 : index
    %153 = vector.load %arg7[%c0_52, %c0_53] : memref<256x128xbf16, #tpu.memory_space<vmem>>, vector<256x128xbf16>
    %cst_54 = arith.constant dense<0.000000e+00> : vector<8x128xf32>
    %154 = tpu.matmul %152, %153, %cst_54 {dimension_numbers = #tpu.dot_dimension_numbers<[1], [0], [0], [1], [0, 0, 1, 1], [], []>} : vector<8x256xbf16>, vector<256x128xbf16>, vector<8x128xf32> -> vector<8x128xf32>
    %155 = vector.extract_strided_slice %0 {offsets = [10, 0], sizes = [1, 128], strides = [1, 1]} : vector<11x1024xf32> to vector<1x128xf32>
    %156 = vector.broadcast %155 : vector<1x128xf32> to vector<8x128xf32>
    %157 = arith.addf %154, %156 : vector<8x128xf32>
    %c0_55 = arith.constant 0 : index
    %c0_56 = arith.constant 0 : index
    %158 = vector.load %arg9[%c0_55, %c0_56] : memref<8x128xf32, #tpu.memory_space<vmem>>, vector<8x128xf32>
    tpu.vector_store %arg9[%c0_55, %c0_56], %157 {strides = array<i32>} : memref<8x128xf32, #tpu.memory_space<vmem>>, vector<8x128xf32>,
    return
  }
  func.func @transform_0(%arg0: i32) -> (i32, i32) {
    %c0_i32 = arith.constant 0 : i32
    %c0_i32_0 = arith.constant 0 : i32
    return %arg0, %c0_i32 : i32, i32
  }
  func.func @transform_1(%arg0: i32) -> (i32, i32) {
    %c0_i32 = arith.constant 0 : i32
    %c0_i32_0 = arith.constant 0 : i32
    %c0_i32_1 = arith.constant 0 : i32
    return %c0_i32, %c0_i32_0 : i32, i32
  }
  func.func @transform_2(%arg0: i32) -> (i32, i32) {
    %c0_i32 = arith.constant 0 : i32
    %c0_i32_0 = arith.constant 0 : i32
    %c0_i32_1 = arith.constant 0 : i32
    return %c0_i32, %c0_i32_0 : i32, i32
  }
  func.func @transform_3(%arg0: i32) -> (i32, i32) {
    %c0_i32 = arith.constant 0 : i32
    %c0_i32_0 = arith.constant 0 : i32
    %c0_i32_1 = arith.constant 0 : i32
    return %c0_i32, %c0_i32_0 : i32, i32
  }
  func.func @transform_4(%arg0: i32) -> (i32, i32) {
    %c0_i32 = arith.constant 0 : i32
    %c0_i32_0 = arith.constant 0 : i32
    %c0_i32_1 = arith.constant 0 : i32
    return %c0_i32, %c0_i32_0 : i32, i32
  }
  func.func @transform_5(%arg0: i32) -> (i32, i32) {
    %c0_i32 = arith.constant 0 : i32
    %c0_i32_0 = arith.constant 0 : i32
    %c0_i32_1 = arith.constant 0 : i32
    return %c0_i32, %c0_i32_0 : i32, i32
  }
  func.func @transform_6(%arg0: i32) -> (i32, i32) {
    %c0_i32 = arith.constant 0 : i32
    %c0_i32_0 = arith.constant 0 : i32
    %c0_i32_1 = arith.constant 0 : i32
    return %c0_i32, %c0_i32_0 : i32, i32
  }
  func.func @transform_7(%arg0: i32) -> (i32, i32) {
    %c0_i32 = arith.constant 0 : i32
    %c0_i32_0 = arith.constant 0 : i32
    %c0_i32_1 = arith.constant 0 : i32
    return %c0_i32, %c0_i32_0 : i32, i32
  }
  func.func @transform_8(%arg0: i32) -> (i32, i32) {
    %c0_i32 = arith.constant 0 : i32
    %c0_i32_0 = arith.constant 0 : i32
    return %arg0, %c0_i32 : i32, i32
  }
}

</mosaic_0001>

<llo_original>
// kernel: tpu_custom_call.1
$region0: #{tpu_custom_call.1}
  #allocation0 [shape = 'u32[]', space=smem, size = 0x4, offset = 0x4, fixed_abs, tag = 'smem constant byte address 0x4 - core index']
  #allocation1 [shape = 'u32[72,128]{1,0:T(1,128)}', space=vmem, size = 0x9000, scoped, tag = 'internal scratch']
  %s0 = inlined_call_operand.hbm [shape: f32[32,256], index: 0, kind: input, shape index: {}]
  %s1 = inlined_call_operand.hbm [shape: bf16[256,256], index: 1, kind: input, shape index: {}]
  %s2 = inlined_call_operand.hbm [shape: bf16[256,512], index: 2, kind: input, shape index: {}]
  %s3 = inlined_call_operand.hbm [shape: bf16[512,1024], index: 3, kind: input, shape index: {}]
  %s4 = inlined_call_operand.hbm [shape: bf16[1024,512], index: 4, kind: input, shape index: {}]
  %s5 = inlined_call_operand.hbm [shape: bf16[512,256], index: 5, kind: input, shape index: {}]
  %s6 = inlined_call_operand.hbm [shape: bf16[256,128], index: 6, kind: input, shape index: {}]
  %s7 = inlined_call_operand.hbm [shape: f32[11,1024], index: 7, kind: input, shape index: {}]
  %s8 = inlined_call_operand.hbm [shape: f32[32,128], index: 8, kind: output, shape index: {}]
  %s9 = sld [smem:[#allocation0]]
  $region97: #{tpu_custom_call.1} parent=0
    _
  %s11 = ssub.s32 1, %s9
  %s12 = scalar_select 0, %s11, %s9
  $region1: #{tpu_custom_call.1} parent=0
    #allocation2 [shape = 'u8[16384]{0}', space=vmem, size = 0x4000, scoped, tag = 'input window, operand 0']
    #allocation3 [shape = 's32[2]{0}', space=sflag, size = 0x8, scoped, tag = 'scoped memory for tpu_custom_call.1']
    #allocation4 [shape = 's32[2]{0}', space=sflag, size = 0x8, scoped, tag = 'scoped memory for tpu_custom_call.1']
    #allocation5 [shape = 'u8[131072]{0}', space=vmem, size = 0x20000, scoped, tag = 'input window, operand 1, single buffered']
    #allocation6 [shape = 's32[1]{0}', space=sflag, size = 0x4, scoped, tag = 'scoped memory for tpu_custom_call.1']
    #allocation7 [shape = 'u8[262144]{0}', space=vmem, size = 0x40000, scoped, tag = 'input window, operand 2, single buffered']
    #allocation8 [shape = 'u8[1048576]{0}', space=vmem, size = 0x100000, scoped, tag = 'input window, operand 3, single buffered']
    #allocation9 [shape = 's32[1]{0}', space=sflag, size = 0x4, scoped, tag = 'scoped memory for tpu_custom_call.1']
    #allocation10 [shape = 'u8[1048576]{0}', space=vmem, size = 0x100000, scoped, tag = 'input window, operand 4, single buffered']
    #allocation11 [shape = 'u8[262144]{0}', space=vmem, size = 0x40000, scoped, tag = 'input window, operand 5, single buffered']
    #allocation12 [shape = 's32[1]{0}', space=sflag, size = 0x4, scoped, tag = 'scoped memory for tpu_custom_call.1']
    #allocation13 [shape = 'u8[65536]{0}', space=vmem, size = 0x10000, scoped, tag = 'input window, operand 6, single buffered']
    #allocation14 [shape = 'u8[65536]{0}', space=vmem, size = 0x10000, scoped, tag = 'input window, operand 7, single buffered']
    #allocation15 [shape = 's32[1]{0}', space=sflag, size = 0x4, scoped, tag = 'scoped memory for tpu_custom_call.1']
    #allocation16 [shape = 'u8[8192]{0}', space=vmem, size = 0x2000, scoped, tag = 'output window, operand 0']
    %13 = vsyncpa [#allocation3], 0
    %s14 = scalar_lea.sflag [#allocation3], 1
    %15 = vsyncpa %s14, 0
    %16 = vsyncpa [#allocation6], 0
    %17 = vsyncpa [#allocation9], 0
    %18 = vsyncpa [#allocation12], 0
    %19 = vsyncpa [#allocation15], 0
    %20 = vsyncpa [#allocation4], 0
    %s21 = scalar_lea.sflag [#allocation4], 1
    %22 = vsyncpa %s21, 0
    loop: start=0, step=1, limit=6
    $region2: #{tpu_custom_call.1} parent=1 // loop_pre_header
      _
    $region3: #{tpu_custom_call.1} parent=1 // loop_header
      %s24 = sphi 0, %s28
      %p25 = scmp.ge.s32.totalorder %s24, 6
      %s34 = sphi 0, %s36
      %s37 = sphi 0, %s34
      %s38 = sphi 0, %s37
      %s54 = sphi 0, %s38
      %s58 = sphi 0, %s58
      %s60 = sphi 0, %s58
      %s61 = sphi 0, %s60
      %s75 = sphi 0, %s61
      %s79 = sphi 0, %s79
      %s81 = sphi 0, %s79
      %s82 = sphi 0, %s81
      %s96 = sphi 0, %s82
      %s100 = sphi 0, %s100
      %s102 = sphi 0, %s100
      %s103 = sphi 0, %s102
      %s117 = sphi 0, %s103
      %s121 = sphi 0, %s121
      %s123 = sphi 0, %s121
      %s124 = sphi 0, %s123
      %s138 = sphi 0, %s124
      %s142 = sphi 0, %s142
      %s144 = sphi 0, %s142
      %s145 = sphi 0, %s144
      %s159 = sphi 0, %s145
      %s163 = sphi 0, %s163
      %s165 = sphi 0, %s163
      %s166 = sphi 0, %s165
      %s180 = sphi 0, %s166
      %s184 = sphi 0, %s184
      %s186 = sphi 0, %s184
      %s187 = sphi 0, %s186
      %s201 = sphi 0, %s187
      %s207 = sphi 0, %s209
      %s210 = sphi 0, %s207
      %s211 = sphi 0, %s210
      %s227 = sphi 0, %s211
    $region4: #{tpu_custom_call.1} parent=1 // loop_header_branch
      %27 = sbr.rel (%p25) target = $region8
    $region5: #{tpu_custom_call.1} parent=1 // loop_body
      %s29 = ssub.s32 %s24, 1
      %s30 = ssub.s32 %s24, 2
      %s31 = sadd.s32 %s24, 1
      %s32 = ssub.s32 %s24, %s31
      %p33 = scmp.eq.s32.totalorder %s32, 0
      %s35 = sadd.s32 %s34, 1
      %s36 = scalar_select %p33, %s34, %s35
      %p39 = pneg %p33
      %p40 = scmp.eq.s32.totalorder %s24, 3
      %p41 = por %p39, %p40
      %p42 = scmp.ne.s32.totalorder %s34, %s37
      %p43 = scmp.eq.s32.totalorder %s24, 0
      %p44 = por %p42, %p43
      %p45 = scmp.ne.s32.totalorder %s34, %s37
      %p46 = scmp.eq.s32.totalorder %s29, 3
      %p47 = por %p45, %p46
      %p48 = scmp.ne.s32.totalorder %s37, %s38
      %p49 = scmp.eq.s32.totalorder %s29, 0
      %p50 = por %p48, %p49
      %p51 = scmp.ne.s32.totalorder %s37, %s38
      %p52 = scmp.eq.s32.totalorder %s30, 3
      %p53 = por %p51, %p52
      %p55 = scmp.ne.s32.totalorder %s38, %s54
      %p56 = scmp.eq.s32.totalorder %s30, 0
      %p57 = por %p55, %p56
      %s59 = sadd.s32 %s58, 1
      %p62 = scmp.eq.s32.totalorder %s24, 3
      %p63 = scmp.ne.s32.totalorder %s58, %s60
      %p64 = scmp.eq.s32.totalorder %s24, 0
      %p65 = por %p63, %p64
      %p66 = scmp.ne.s32.totalorder %s58, %s60
      %p67 = scmp.eq.s32.totalorder %s29, 3
      %p68 = por %p66, %p67
      %p69 = scmp.ne.s32.totalorder %s60, %s61
      %p70 = scmp.eq.s32.totalorder %s29, 0
      %p71 = por %p69, %p70
      %p72 = scmp.ne.s32.totalorder %s60, %s61
      %p73 = scmp.eq.s32.totalorder %s30, 3
      %p74 = por %p72, %p73
      %p76 = scmp.ne.s32.totalorder %s61, %s75
      %p77 = scmp.eq.s32.totalorder %s30, 0
      %p78 = por %p76, %p77
      %s80 = sadd.s32 %s79, 1
      %p83 = scmp.eq.s32.totalorder %s24, 3
      %p84 = scmp.ne.s32.totalorder %s79, %s81
      %p85 = scmp.eq.s32.totalorder %s24, 0
      %p86 = por %p84, %p85
      %p87 = scmp.ne.s32.totalorder %s79, %s81
      %p88 = scmp.eq.s32.totalorder %s29, 3
      %p89 = por %p87, %p88
      %p90 = scmp.ne.s32.totalorder %s81, %s82
      %p91 = scmp.eq.s32.totalorder %s29, 0
      %p92 = por %p90, %p91
      %p93 = scmp.ne.s32.totalorder %s81, %s82
      %p94 = scmp.eq.s32.totalorder %s30, 3
      %p95 = por %p93, %p94
      %p97 = scmp.ne.s32.totalorder %s82, %s96
      %p98 = scmp.eq.s32.totalorder %s30, 0
      %p99 = por %p97, %p98
      %s101 = sadd.s32 %s100, 1
      %p104 = scmp.eq.s32.totalorder %s24, 3
      %p105 = scmp.ne.s32.totalorder %s100, %s102
      %p106 = scmp.eq.s32.totalorder %s24, 0
      %p107 = por %p105, %p106
      %p108 = scmp.ne.s32.totalorder %s100, %s102
      %p109 = scmp.eq.s32.totalorder %s29, 3
      %p110 = por %p108, %p109
      %p111 = scmp.ne.s32.totalorder %s102, %s103
      %p112 = scmp.eq.s32.totalorder %s29, 0
      %p113 = por %p111, %p112
      %p114 = scmp.ne.s32.totalorder %s102, %s103
      %p115 = scmp.eq.s32.totalorder %s30, 3
      %p116 = por %p114, %p115
      %p118 = scmp.ne.s32.totalorder %s103, %s117
      %p119 = scmp.eq.s32.totalorder %s30, 0
      %p120 = por %p118, %p119
      %s122 = sadd.s32 %s121, 1
      %p125 = scmp.eq.s32.totalorder %s24, 3
      %p126 = scmp.ne.s32.totalorder %s121, %s123
      %p127 = scmp.eq.s32.totalorder %s24, 0
      %p128 = por %p126, %p127
      %p129 = scmp.ne.s32.totalorder %s121, %s123
      %p130 = scmp.eq.s32.totalorder %s29, 3
      %p131 = por %p129, %p130
      %p132 = scmp.ne.s32.totalorder %s123, %s124
      %p133 = scmp.eq.s32.totalorder %s29, 0
      %p134 = por %p132, %p133
      %p135 = scmp.ne.s32.totalorder %s123, %s124
      %p136 = scmp.eq.s32.totalorder %s30, 3
      %p137 = por %p135, %p136
      %p139 = scmp.ne.s32.totalorder %s124, %s138
      %p140 = scmp.eq.s32.totalorder %s30, 0
      %p141 = por %p139, %p140
      %s143 = sadd.s32 %s142, 1
      %p146 = scmp.eq.s32.totalorder %s24, 3
      %p147 = scmp.ne.s32.totalorder %s142, %s144
      %p148 = scmp.eq.s32.totalorder %s24, 0
      %p149 = por %p147, %p148
      %p150 = scmp.ne.s32.totalorder %s142, %s144
      %p151 = scmp.eq.s32.totalorder %s29, 3
      %p152 = por %p150, %p151
      %p153 = scmp.ne.s32.totalorder %s144, %s145
      %p154 = scmp.eq.s32.totalorder %s29, 0
      %p155 = por %p153, %p154
      %p156 = scmp.ne.s32.totalorder %s144, %s145
      %p157 = scmp.eq.s32.totalorder %s30, 3
      %p158 = por %p156, %p157
      %p160 = scmp.ne.s32.totalorder %s145, %s159
      %p161 = scmp.eq.s32.totalorder %s30, 0
      %p162 = por %p160, %p161
      %s164 = sadd.s32 %s163, 1
      %p167 = scmp.eq.s32.totalorder %s24, 3
      %p168 = scmp.ne.s32.totalorder %s163, %s165
      %p169 = scmp.eq.s32.totalorder %s24, 0
      %p170 = por %p168, %p169
      %p171 = scmp.ne.s32.totalorder %s163, %s165
      %p172 = scmp.eq.s32.totalorder %s29, 3
      %p173 = por %p171, %p172
      %p174 = scmp.ne.s32.totalorder %s165, %s166
      %p175 = scmp.eq.s32.totalorder %s29, 0
      %p176 = por %p174, %p175
      %p177 = scmp.ne.s32.totalorder %s165, %s166
      %p178 = scmp.eq.s32.totalorder %s30, 3
      %p179 = por %p177, %p178
      %p181 = scmp.ne.s32.totalorder %s166, %s180
      %p182 = scmp.eq.s32.totalorder %s30, 0
      %p183 = por %p181, %p182
      %s185 = sadd.s32 %s184, 1
      %p188 = scmp.eq.s32.totalorder %s24, 3
      %p189 = scmp.ne.s32.totalorder %s184, %s186
      %p190 = scmp.eq.s32.totalorder %s24, 0
      %p191 = por %p189, %p190
      %p192 = scmp.ne.s32.totalorder %s184, %s186
      %p193 = scmp.eq.s32.totalorder %s29, 3
      %p194 = por %p192, %p193
      %p195 = scmp.ne.s32.totalorder %s186, %s187
      %p196 = scmp.eq.s32.totalorder %s29, 0
      %p197 = por %p195, %p196
      %p198 = scmp.ne.s32.totalorder %s186, %s187
      %p199 = scmp.eq.s32.totalorder %s30, 3
      %p200 = por %p198, %p199
      %p202 = scmp.ne.s32.totalorder %s187, %s201
      %p203 = scmp.eq.s32.totalorder %s30, 0
      %p204 = por %p202, %p203
      %s205 = ssub.s32 %s24, %s31
      %p206 = scmp.eq.s32.totalorder %s205, 0
      %s208 = sadd.s32 %s207, 1
      %s209 = scalar_select %p206, %s207, %s208
      %p212 = pneg %p206
      %p213 = scmp.eq.s32.totalorder %s24, 3
      %p214 = por %p212, %p213
      %p215 = scmp.ne.s32.totalorder %s207, %s210
      %p216 = scmp.eq.s32.totalorder %s24, 0
      %p217 = por %p215, %p216
      %p218 = scmp.ne.s32.totalorder %s207, %s210
      %p219 = scmp.eq.s32.totalorder %s29, 3
      %p220 = por %p218, %p219
      %p221 = scmp.ne.s32.totalorder %s210, %s211
      %p222 = scmp.eq.s32.totalorder %s29, 0
      %p223 = por %p221, %p222
      %p224 = scmp.ne.s32.totalorder %s210, %s211
      %p225 = scmp.eq.s32.totalorder %s30, 3
      %p226 = por %p224, %p225
      %p228 = scmp.ne.s32.totalorder %s211, %s227
      %p229 = scmp.eq.s32.totalorder %s30, 0
      %p230 = por %p228, %p229
      %p231 = scmp.le.s32.totalorder 1, %s24
      %p232 = scmp.lt.s32.totalorder %s24, 5
      %p233 = pnand %p231, %p232
      %p234 = pneg %p233
      // Predicated region
      $region9: #{tpu_custom_call.1} parent=5 // pred_check
        _
      $region10: #{tpu_custom_call.1} parent=5 // pred_check_branch
        %236 = sbr.rel (%p233) target = $region12
      $region11: #{tpu_custom_call.1} parent=5 // pred_region
        %s237 = ssub.s32 %s24, 1
        // Predicated region
        $region13: #{tpu_custom_call.1} parent=11 // pred_check
          %p238 = pneg %p71
        $region14: #{tpu_custom_call.1} parent=11 // pred_check_branch
          %240 = sbr.rel (%p238) target = $region16
        $region15: #{tpu_custom_call.1} parent=11 // pred_region
          %242 = vsyncadd [#allocation6], 0
          %s243 = sshll.u32 %s1, 4
          %s244 = int_to_ptr.hbm [resolvable:$true] %s243
          %s245 = sshll.u32 [#allocation5], 4
          %s246 = int_to_ptr.vmem [resolvable:$true] %s245
          %251 = dma.hbm_to_vmem [thread:$0]  %s244, 4096, %s246, [#allocation6], 128, 128, 8
        $region16: #{tpu_custom_call.1} parent=11 // pred_fallthru
          _
        // Predicated region
        $region17: #{tpu_custom_call.1} parent=11 // pred_check
          %p252 = pneg %p92
        $region18: #{tpu_custom_call.1} parent=11 // pred_check_branch
          %254 = sbr.rel (%p252) target = $region20
        $region19: #{tpu_custom_call.1} parent=11 // pred_region
          %256 = vsyncadd [#allocation6], 0
          %s257 = sshll.u32 %s2, 4
          %s258 = int_to_ptr.hbm [resolvable:$true] %s257
          %s259 = sshll.u32 [#allocation7], 4
          %s260 = int_to_ptr.vmem [resolvable:$true] %s259
          %265 = dma.hbm_to_vmem [thread:$0]  %s258, 8192, %s260, [#allocation6], 256, 256, 16
        $region20: #{tpu_custom_call.1} parent=11 // pred_fallthru
          _
        // Predicated region
        $region21: #{tpu_custom_call.1} parent=11 // pred_check
          %p266 = pneg %p113
        $region22: #{tpu_custom_call.1} parent=11 // pred_check_branch
          %268 = sbr.rel (%p266) target = $region24
        $region23: #{tpu_custom_call.1} parent=11 // pred_region
          %270 = vsyncadd [#allocation9], 0
          %s271 = sshll.u32 %s3, 4
          %s272 = int_to_ptr.hbm [resolvable:$true] %s271
          %s273 = sshll.u32 [#allocation8], 4
          %s274 = int_to_ptr.vmem [resolvable:$true] %s273
          %279 = dma.hbm_to_vmem [thread:$0]  %s272, 32768, %s274, [#allocation9], 512, 512, 32
        $region24: #{tpu_custom_call.1} parent=11 // pred_fallthru
          _
        // Predicated region
        $region25: #{tpu_custom_call.1} parent=11 // pred_check
          %p280 = pneg %p134
        $region26: #{tpu_custom_call.1} parent=11 // pred_check_branch
          %282 = sbr.rel (%p280) target = $region28
        $region27: #{tpu_custom_call.1} parent=11 // pred_region
          %284 = vsyncadd [#allocation9], 0
          %s285 = sshll.u32 %s4, 4
          %s286 = int_to_ptr.hbm [resolvable:$true] %s285
          %s287 = sshll.u32 [#allocation10], 4
          %s288 = int_to_ptr.vmem [resolvable:$true] %s287
          %293 = dma.hbm_to_vmem [thread:$0]  %s286, 32768, %s288, [#allocation9], 256, 256, 16
        $region28: #{tpu_custom_call.1} parent=11 // pred_fallthru
          _
        // Predicated region
        $region29: #{tpu_custom_call.1} parent=11 // pred_check
          %p294 = pneg %p155
        $region30: #{tpu_custom_call.1} parent=11 // pred_check_branch
          %296 = sbr.rel (%p294) target = $region32
        $region31: #{tpu_custom_call.1} parent=11 // pred_region
          %298 = vsyncadd [#allocation12], 0
          %s299 = sshll.u32 %s5, 4
          %s300 = int_to_ptr.hbm [resolvable:$true] %s299
          %s301 = sshll.u32 [#allocation11], 4
          %s302 = int_to_ptr.vmem [resolvable:$true] %s301
          %307 = dma.hbm_to_vmem [thread:$0]  %s300, 8192, %s302, [#allocation12], 128, 128, 8
        $region32: #{tpu_custom_call.1} parent=11 // pred_fallthru
          _
        // Predicated region
        $region33: #{tpu_custom_call.1} parent=11 // pred_check
          %p308 = pneg %p176
        $region34: #{tpu_custom_call.1} parent=11 // pred_check_branch
          %310 = sbr.rel (%p308) target = $region36
        $region35: #{tpu_custom_call.1} parent=11 // pred_region
          %312 = vsyncadd [#allocation12], 0
          %s313 = sshll.u32 %s6, 4
          %s314 = int_to_ptr.hbm [resolvable:$true] %s313
          %s315 = sshll.u32 [#allocation13], 4
          %s316 = int_to_ptr.vmem [resolvable:$true] %s315
          %321 = dma.hbm_to_vmem [thread:$0]  %s314, 2048, %s316, [#allocation12], 64, 64, 4
        $region36: #{tpu_custom_call.1} parent=11 // pred_fallthru
          _
        // Predicated region
        $region37: #{tpu_custom_call.1} parent=11 // pred_check
          %p322 = pneg %p197
        $region38: #{tpu_custom_call.1} parent=11 // pred_check_branch
          %324 = sbr.rel (%p322) target = $region40
        $region39: #{tpu_custom_call.1} parent=11 // pred_region
          %326 = vsyncadd [#allocation15], 0
          %s327 = sshll.u32 %s7, 4
          %s328 = int_to_ptr.hbm [resolvable:$true] %s327
          %s329 = sshll.u32 [#allocation14], 4
          %s330 = int_to_ptr.vmem [resolvable:$true] %s329
          %335 = dma.hbm_to_vmem [thread:$0]  %s328, 2048, %s330, [#allocation15], 1024, 1024, 64
        $region40: #{tpu_custom_call.1} parent=11 // pred_fallthru
          _
      $region12: #{tpu_custom_call.1} parent=5 // pred_fallthru
        _
      %p336 = scmp.lt.s32.totalorder %s24, 4
      // Predicated region
      $region41: #{tpu_custom_call.1} parent=5 // pred_check
        %p337 = pneg %p336
      $region42: #{tpu_custom_call.1} parent=5 // pred_check_branch
        %339 = sbr.rel (%p337) target = $region44
      $region43: #{tpu_custom_call.1} parent=5 // pred_region
        // Predicated region
        $region45: #{tpu_custom_call.1} parent=43 // pred_check
          %p340 = pneg %p44
        $region46: #{tpu_custom_call.1} parent=43 // pred_check_branch
          %342 = sbr.rel (%p340) target = $region48
        $region47: #{tpu_custom_call.1} parent=43 // pred_region
          %s343 = sand.u32 %s34, 1
          %s344 = scalar_lea.sflag [#allocation3], %s343
          %s345 = sand.u32 %s34, 1
          %s346 = smul.addr %s345, 16
          %s347 = scalar_lea.vmem [#allocation2], %s346
          %349 = vsyncadd %s344, 0
          %s350 = smul.addr %s24, 2
          %s351 = smul.addr %s350, 8
          %s352 = scalar_lea.hbm %s0, %s351
          %s354 = sshll.u32 %s352, 4
          %s355 = int_to_ptr.hbm [resolvable:$true] %s354
          %s356 = sshll.u32 %s347, 4
          %s357 = int_to_ptr.vmem [resolvable:$true] %s356
          %359 = dma.hbm_to_vmem [thread:$0]  %s355, 256, %s357, %s344
        $region48: #{tpu_custom_call.1} parent=43 // pred_fallthru
          _
      $region44: #{tpu_custom_call.1} parent=5 // pred_fallthru
        _
      %p360 = scmp.le.s32.totalorder 1, %s24
      %p361 = scmp.lt.s32.totalorder %s24, 5
      %p362 = pnand %p360, %p361
      %p363 = pneg %p362
      // Predicated region
      $region49: #{tpu_custom_call.1} parent=5 // pred_check
        _
      $region50: #{tpu_custom_call.1} parent=5 // pred_check_branch
        %365 = sbr.rel (%p362) target = $region52
      $region51: #{tpu_custom_call.1} parent=5 // pred_region
        %s366 = ssub.s32 %s24, 1
        %s367 = sand.u32 %s37, 1
        %s368 = scalar_lea.sflag [#allocation3], %s367
        %s369 = sand.u32 %s37, 1
        %s370 = smul.addr %s369, 16
        %s371 = scalar_lea.vmem [#allocation2], %s370
        // Predicated region
        $region53: #{tpu_custom_call.1} parent=51 // pred_check
          %p372 = pneg %p50
        $region54: #{tpu_custom_call.1} parent=51 // pred_check_branch
          %374 = sbr.rel (%p372) target = $region56
        $region55: #{tpu_custom_call.1} parent=51 // pred_region
          %376 = dma.done %s368, 256
        $region56: #{tpu_custom_call.1} parent=51 // pred_fallthru
          _
        // Predicated region
        $region57: #{tpu_custom_call.1} parent=51 // pred_check
          %p377 = pneg %p71
        $region58: #{tpu_custom_call.1} parent=51 // pred_check_branch
          %379 = sbr.rel (%p377) target = $region60
        $region59: #{tpu_custom_call.1} parent=51 // pred_region
          %381 = dma.done [#allocation6], 4096
        $region60: #{tpu_custom_call.1} parent=51 // pred_fallthru
          _
        // Predicated region
        $region61: #{tpu_custom_call.1} parent=51 // pred_check
          %p382 = pneg %p92
        $region62: #{tpu_custom_call.1} parent=51 // pred_check_branch
          %384 = sbr.rel (%p382) target = $region64
        $region63: #{tpu_custom_call.1} parent=51 // pred_region
          %386 = dma.done [#allocation6], 8192
        $region64: #{tpu_custom_call.1} parent=51 // pred_fallthru
          _
        // Predicated region
        $region65: #{tpu_custom_call.1} parent=51 // pred_check
          %p387 = pneg %p113
        $region66: #{tpu_custom_call.1} parent=51 // pred_check_branch
          %389 = sbr.rel (%p387) target = $region68
        $region67: #{tpu_custom_call.1} parent=51 // pred_region
          %391 = dma.done [#allocation9], 32768
        $region68: #{tpu_custom_call.1} parent=51 // pred_fallthru
          _
        // Predicated region
        $region69: #{tpu_custom_call.1} parent=51 // pred_check
          %p392 = pneg %p134
        $region70: #{tpu_custom_call.1} parent=51 // pred_check_branch
          %394 = sbr.rel (%p392) target = $region72
        $region71: #{tpu_custom_call.1} parent=51 // pred_region
          %396 = dma.done [#allocation9], 32768
        $region72: #{tpu_custom_call.1} parent=51 // pred_fallthru
          _
        // Predicated region
        $region73: #{tpu_custom_call.1} parent=51 // pred_check
          %p397 = pneg %p155
        $region74: #{tpu_custom_call.1} parent=51 // pred_check_branch
          %399 = sbr.rel (%p397) target = $region76
        $region75: #{tpu_custom_call.1} parent=51 // pred_region
          %401 = dma.done [#allocation12], 8192
        $region76: #{tpu_custom_call.1} parent=51 // pred_fallthru
          _
        // Predicated region
        $region77: #{tpu_custom_call.1} parent=51 // pred_check
          %p402 = pneg %p176
        $region78: #{tpu_custom_call.1} parent=51 // pred_check_branch
          %404 = sbr.rel (%p402) target = $region80
        $region79: #{tpu_custom_call.1} parent=51 // pred_region
          %406 = dma.done [#allocation12], 2048
        $region80: #{tpu_custom_call.1} parent=51 // pred_fallthru
          _
        // Predicated region
        $region81: #{tpu_custom_call.1} parent=51 // pred_check
          %p407 = pneg %p197
        $region82: #{tpu_custom_call.1} parent=51 // pred_check_branch
          %409 = sbr.rel (%p407) target = $region84
        $region83: #{tpu_custom_call.1} parent=51 // pred_region
          %411 = dma.done [#allocation15], 2048
        $region84: #{tpu_custom_call.1} parent=51 // pred_fallthru
          _
        %s412 = sand.u32 %s37, 1
        %s413 = scalar_lea.sflag [#allocation3], %s412
        %s414 = sand.u32 %s37, 1
        %s415 = smul.addr %s414, 16
        %s416 = scalar_lea.vmem [#allocation2], %s415
        %p417 = pneg %p50
        %p418 = pneg %p47
        %p419 = pneg %p71
        %p420 = pneg %p68
        %p421 = pneg %p92
        %p422 = pneg %p89
        %p423 = pneg %p113
        %p424 = pneg %p110
        %p425 = pneg %p134
        %p426 = pneg %p131
        %p427 = pneg %p155
        %p428 = pneg %p152
        %p429 = pneg %p176
        %p430 = pneg %p173
        %p431 = pneg %p197
        %p432 = pneg %p194
        %p433 = pneg %p223
        %p434 = pneg %p220
        %s435 = sand.u32 %s210, 1
        %s436 = scalar_lea.sflag [#allocation4], %s435
        %s437 = sand.u32 %s210, 1
        %s438 = smul.addr %s437, 8
        %s439 = scalar_lea.vmem [#allocation16], %s438
        %v440 = vld [vmem:[#allocation14] sm:$0xff]
        %v441 = vld [vmem:[#allocation14 + $0x8] sm:$0xff]
        %v442 = vld [vmem:[#allocation14 + $0x10] sm:$0xff]
        %v443 = vld [vmem:[#allocation14 + $0x18] sm:$0xff]
        %v444 = vld [vmem:[#allocation14 + $0x20] sm:$0xff]
        %v445 = vld [vmem:[#allocation14 + $0x28] sm:$0xff]
        %v446 = vld [vmem:[#allocation14 + $0x30] sm:$0xff]
        %v447 = vld [vmem:[#allocation14 + $0x38] sm:$0xff]
        %v448 = vld [vmem:[#allocation14 + $0x40] sm:$0x7]
        %v449 = vld [vmem:[#allocation14 + $0x48] sm:$0x7]
        %v450 = vld [vmem:[%s371] sm:$0xff]
        %v451 = vld [vmem:[%s371 + $0x8] sm:$0xff]
        %v452 = vpack.c.bf16 %v450, %v450
        %v453 = vpack.c.bf16 %v451, %v451
        %v454 = vld [vmem:[#allocation5] sm:$0xff]
        %v455 = vld [vmem:[#allocation5 + $0x8] sm:$0xff]
        %v456 = vld [vmem:[#allocation5 + $0x10] sm:$0xff]
        %v457 = vld [vmem:[#allocation5 + $0x18] sm:$0xff]
        %v458 = vld [vmem:[#allocation5 + $0x20] sm:$0xff]
        %v459 = vld [vmem:[#allocation5 + $0x28] sm:$0xff]
        %v460 = vld [vmem:[#allocation5 + $0x30] sm:$0xff]
        %v461 = vld [vmem:[#allocation5 + $0x38] sm:$0xff]
        %v462 = vld [vmem:[#allocation5 + $0x40] sm:$0xff]
        %v463 = vld [vmem:[#allocation5 + $0x48] sm:$0xff]
        %v464 = vld [vmem:[#allocation5 + $0x50] sm:$0xff]
        %v465 = vld [vmem:[#allocation5 + $0x58] sm:$0xff]
        %v466 = vld [vmem:[#allocation5 + $0x60] sm:$0xff]
        %v467 = vld [vmem:[#allocation5 + $0x68] sm:$0xff]
        %v468 = vld [vmem:[#allocation5 + $0x70] sm:$0xff]
        %v469 = vld [vmem:[#allocation5 + $0x78] sm:$0xff]
        %v470 = vld [vmem:[#allocation5 + $0x80] sm:$0xff]
        %v471 = vld [vmem:[#allocation5 + $0x88] sm:$0xff]
        %v472 = vld [vmem:[#allocation5 + $0x90] sm:$0xff]
        %v473 = vld [vmem:[#allocation5 + $0x98] sm:$0xff]
        %v474 = vld [vmem:[#allocation5 + $0xa0] sm:$0xff]
        %v475 = vld [vmem:[#allocation5 + $0xa8] sm:$0xff]
        %v476 = vld [vmem:[#allocation5 + $0xb0] sm:$0xff]
        %v477 = vld [vmem:[#allocation5 + $0xb8] sm:$0xff]
        %v478 = vld [vmem:[#allocation5 + $0xc0] sm:$0xff]
        %v479 = vld [vmem:[#allocation5 + $0xc8] sm:$0xff]
        %v480 = vld [vmem:[#allocation5 + $0xd0] sm:$0xff]
        %v481 = vld [vmem:[#allocation5 + $0xd8] sm:$0xff]
        %v482 = vld [vmem:[#allocation5 + $0xe0] sm:$0xff]
        %v483 = vld [vmem:[#allocation5 + $0xe8] sm:$0xff]
        %v484 = vld [vmem:[#allocation5 + $0xf0] sm:$0xff]
        %v485 = vld [vmem:[#allocation5 + $0xf8] sm:$0xff]
        %v518 = vunpack.c.l.b16 %v454
        %v519 = vunpack.c.h.b16 %v454
        %v520 = vunpack.c.l.b16 %v455
        %v521 = vunpack.c.h.b16 %v455
        %v522 = vunpack.c.l.b16 %v456
        %v523 = vunpack.c.h.b16 %v456
        %v524 = vunpack.c.l.b16 %v457
        %v525 = vunpack.c.h.b16 %v457
        %v526 = vunpack.c.l.b16 %v458
        %v527 = vunpack.c.h.b16 %v458
        %v528 = vunpack.c.l.b16 %v459
        %v529 = vunpack.c.h.b16 %v459
        %v530 = vunpack.c.l.b16 %v460
        %v531 = vunpack.c.h.b16 %v460
        %v532 = vunpack.c.l.b16 %v461
        %v533 = vunpack.c.h.b16 %v461
        %v534 = vunpack.c.l.b16 %v462
        %v535 = vunpack.c.h.b16 %v462
        %v536 = vunpack.c.l.b16 %v463
        %v537 = vunpack.c.h.b16 %v463
        %v538 = vunpack.c.l.b16 %v464
        %v539 = vunpack.c.h.b16 %v464
        %v540 = vunpack.c.l.b16 %v465
        %v541 = vunpack.c.h.b16 %v465
        %v542 = vunpack.c.l.b16 %v466
        %v543 = vunpack.c.h.b16 %v466
        %v544 = vunpack.c.l.b16 %v467
        %v545 = vunpack.c.h.b16 %v467
        %v546 = vunpack.c.l.b16 %v468
        %v547 = vunpack.c.h.b16 %v468
        %v548 = vunpack.c.l.b16 %v469
        %v549 = vunpack.c.h.b16 %v469
        %v550 = vunpack.c.l.b16 %v470
        %v551 = vunpack.c.h.b16 %v470
        %v552 = vunpack.c.l.b16 %v471
        %v553 = vunpack.c.h.b16 %v471
        %v554 = vunpack.c.l.b16 %v472
        %v555 = vunpack.c.h.b16 %v472
        %v556 = vunpack.c.l.b16 %v473
        %v557 = vunpack.c.h.b16 %v473
        %v558 = vunpack.c.l.b16 %v474
        %v559 = vunpack.c.h.b16 %v474
        %v560 = vunpack.c.l.b16 %v475
        %v561 = vunpack.c.h.b16 %v475
        %v562 = vunpack.c.l.b16 %v476
        %v563 = vunpack.c.h.b16 %v476
        %v564 = vunpack.c.l.b16 %v477
        %v565 = vunpack.c.h.b16 %v477
        %v566 = vunpack.c.l.b16 %v478
        %v567 = vunpack.c.h.b16 %v478
        %v568 = vunpack.c.l.b16 %v479
        %v569 = vunpack.c.h.b16 %v479
        %v570 = vunpack.c.l.b16 %v480
        %v571 = vunpack.c.h.b16 %v480
        %v572 = vunpack.c.l.b16 %v481
        %v573 = vunpack.c.h.b16 %v481
        %v574 = vunpack.c.l.b16 %v482
        %v575 = vunpack.c.h.b16 %v482
        %v576 = vunpack.c.l.b16 %v483
        %v577 = vunpack.c.h.b16 %v483
        %v578 = vunpack.c.l.b16 %v484
        %v579 = vunpack.c.h.b16 %v484
        %v580 = vunpack.c.l.b16 %v485
        %v581 = vunpack.c.h.b16 %v485
        %v582 = vpack.c.b16 %v520, %v518
        %v583 = vpack.c.b16 %v521, %v519
        %v584 = vpack.c.b16 %v524, %v522
        %v585 = vpack.c.b16 %v525, %v523
        %v586 = vpack.c.b16 %v528, %v526
        %v587 = vpack.c.b16 %v529, %v527
        %v588 = vpack.c.b16 %v532, %v530
        %v589 = vpack.c.b16 %v533, %v531
        %v590 = vpack.c.b16 %v536, %v534
        %v591 = vpack.c.b16 %v537, %v535
        %v592 = vpack.c.b16 %v540, %v538
        %v593 = vpack.c.b16 %v541, %v539
        %v594 = vpack.c.b16 %v544, %v542
        %v595 = vpack.c.b16 %v545, %v543
        %v596 = vpack.c.b16 %v548, %v546
        %v597 = vpack.c.b16 %v549, %v547
        %v598 = vpack.c.b16 %v552, %v550
        %v599 = vpack.c.b16 %v553, %v551
        %v600 = vpack.c.b16 %v556, %v554
        %v601 = vpack.c.b16 %v557, %v555
        %v602 = vpack.c.b16 %v560, %v558
        %v603 = vpack.c.b16 %v561, %v559
        %v604 = vpack.c.b16 %v564, %v562
        %v605 = vpack.c.b16 %v565, %v563
        %v606 = vpack.c.b16 %v568, %v566
        %v607 = vpack.c.b16 %v569, %v567
        %v608 = vpack.c.b16 %v572, %v570
        %v609 = vpack.c.b16 %v573, %v571
        %v610 = vpack.c.b16 %v576, %v574
        %v611 = vpack.c.b16 %v577, %v575
        %v612 = vpack.c.b16 %v580, %v578
        %v613 = vpack.c.b16 %v581, %v579
        %646 = vmatpush.bf16.msra.mxu0 %v596
        %647 = vmatpush.bf16.msra.mxu0 %v594
        %648 = vmatpush.bf16.msra.mxu0 %v592
        %649 = vmatpush.bf16.msra.mxu0 %v590
        %650 = vmatpush.bf16.msra.mxu0 %v588
        %651 = vmatpush.bf16.msra.mxu0 %v586
        %652 = vmatpush.bf16.msra.mxu0 %v584
        %653 = vmatpush.bf16.msra.mxu0 %v582
        %654 = vmatmul.bf16.gmra.mxu0 %v452
        %v655 = vpop.f32.mrf.mxu0
        %v656 = vadd.f32 0.0, %v655
        %v657 = vpop.f32.mrf.mxu0
        %658 = vdwg.mxu0
        %659 = vmatpush.bf16.msra.mxu0 %v612
        %660 = vmatpush.bf16.msra.mxu0 %v610
        %661 = vmatpush.bf16.msra.mxu0 %v608
        %662 = vmatpush.bf16.msra.mxu0 %v606
        %663 = vmatpush.bf16.msra.mxu0 %v604
        %664 = vmatpush.bf16.msra.mxu0 %v602
        %665 = vmatpush.bf16.msra.mxu0 %v600
        %666 = vmatpush.bf16.msra.mxu0 %v598
        %667 = vmatmul.bf16.gmra.mxu0 %v453
        %v668 = vpop.f32.mrf.mxu0
        %v669 = vadd.f32 %v656, %v668
        %v670 = vpop.f32.mrf.mxu0
        %671 = vdwg.mxu0
        %672 = vmatpush.bf16.msra.mxu0 %v597
        %673 = vmatpush.bf16.msra.mxu0 %v595
        %674 = vmatpush.bf16.msra.mxu0 %v593
        %675 = vmatpush.bf16.msra.mxu0 %v591
        %676 = vmatpush.bf16.msra.mxu0 %v589
        %677 = vmatpush.bf16.msra.mxu0 %v587
        %678 = vmatpush.bf16.msra.mxu0 %v585
        %679 = vmatpush.bf16.msra.mxu0 %v583
        %680 = vmatmul.bf16.gmra.mxu0 %v452
        %v681 = vpop.f32.mrf.mxu0
        %v682 = vadd.f32 0.0, %v681
        %v683 = vpop.f32.mrf.mxu0
        %684 = vdwg.mxu0
        %685 = vmatpush.bf16.msra.mxu0 %v613
        %686 = vmatpush.bf16.msra.mxu0 %v611
        %687 = vmatpush.bf16.msra.mxu0 %v609
        %688 = vmatpush.bf16.msra.mxu0 %v607
        %689 = vmatpush.bf16.msra.mxu0 %v605
        %690 = vmatpush.bf16.msra.mxu0 %v603
        %691 = vmatpush.bf16.msra.mxu0 %v601
        %692 = vmatpush.bf16.msra.mxu0 %v599
        %693 = vmatmul.bf16.gmra.mxu0 %v453
        %v694 = vpop.f32.mrf.mxu0
        %v695 = vadd.f32 %v682, %v694
        %v696 = vpop.f32.mrf.mxu0
        %697 = vdwg.mxu0
        %v698 = vrot.slane %v669, 4
        %v699 = vadd.f32 %v669, %v698
        %v700 = vrot.slane %v699, 2
        %v701 = vadd.f32 %v699, %v700
        %v702 = vrot.slane %v701, 1
        %v703 = vadd.f32 %v701, %v702
        %v704 = vrot.slane %v695, 4
        %v705 = vadd.f32 %v695, %v704
        %v706 = vrot.slane %v705, 2
        %v707 = vadd.f32 %v705, %v706
        %v708 = vrot.slane %v707, 1
        %v709 = vadd.f32 %v707, %v708
        %v710 = vrcp.pop 8.0
        %v711 = vmul.f32 8.0, %v710
        %v712 = vsub.f32 1.0, %v711
        %v713 = vmul.f32 %v710, %v712
        %v714 = vadd.f32 %v710, %v713
        %vm715 = vweird.f32 %v710
        %v716 = vsel %vm715, %v710, %v714
        %v717 = vmul.f32 %v703, %v716
        %v718 = vmul.f32 %v709, %v716
        %v719 = vmul.f32 %v669, %v669
        %v720 = vmul.f32 %v695, %v695
        %v721 = vrot.slane %v719, 4
        %v722 = vadd.f32 %v719, %v721
        %v723 = vrot.slane %v722, 2
        %v724 = vadd.f32 %v722, %v723
        %v725 = vrot.slane %v724, 1
        %v726 = vadd.f32 %v724, %v725
        %v727 = vrot.slane %v720, 4
        %v728 = vadd.f32 %v720, %v727
        %v729 = vrot.slane %v728, 2
        %v730 = vadd.f32 %v728, %v729
        %v731 = vrot.slane %v730, 1
        %v732 = vadd.f32 %v730, %v731
        %v733 = vmul.f32 %v726, %v716
        %v734 = vmul.f32 %v732, %v716
        %v735 = vmul.f32 %v717, %v717
        %v736 = vmul.f32 %v718, %v718
        %v737 = vsub.f32 %v733, %v735
        %v738 = vsub.f32 %v734, %v736
        %v739 = vmax.f32 %v737, 0.0
        %v740 = vmax.f32 %v738, 0.0
        %v741 = vadd.f32 %v739, 1e-05
        %v742 = vadd.f32 %v740, 1e-05
        %v743 = vrsqrt.pop %v741
        %v744 = vmul.f32 %v743, %v741
        %v745 = vmul.f32 %v744, %v743
        %v746 = vmul.f32 0.5, %v745
        %v747 = vsub.f32 1.5, %v746
        %v748 = vmul.f32 %v743, %v747
        %vm749 = vweird.f32 %v741
        %vm750 = vweird.f32 %v743
        %vm751 = vmor %vm749, %vm750
        %v752 = vsel %vm751, %v743, %v748
        %v753 = vrsqrt.pop %v742
        %v754 = vmul.f32 %v753, %v742
        %v755 = vmul.f32 %v754, %v753
        %v756 = vmul.f32 0.5, %v755
        %v757 = vsub.f32 1.5, %v756
        %v758 = vmul.f32 %v753, %v757
        %vm759 = vweird.f32 %v742
        %vm760 = vweird.f32 %v753
        %vm761 = vmor %vm759, %vm760
        %v762 = vsel %vm761, %v753, %v758
        %v763 = vmul.f32 %v440, %v752
        %v764 = vmul.f32 %v441, %v762
        %v765 = vmul.f32 %v717, %v763
        %v766 = vmul.f32 %v718, %v764
        %v769 = vrot.slane %v765, 7
        %v770 = vrot.slane %v766, 7
        %v773 = vsub.f32 %v440, %v769
        %v774 = vsub.f32 %v441, %v770
        %v775 = vperm.slane %v763, 0
        %v776 = vperm.slane %v764, 0
        %v777 = vmul.f32 %v669, %v775
        %v778 = vmul.f32 %v695, %v776
        %v779 = vperm.slane %v773, 1
        %v780 = vperm.slane %v774, 1
        %v781 = vadd.f32 %v777, %v779
        %v782 = vadd.f32 %v778, %v780
        %v783 = vmax.f32 %v781, 0.0
        %v784 = vmax.f32 %v782, 0.0
        %v785 = vpack.c.bf16 %v783, %v783
        %v786 = vpack.c.bf16 %v784, %v784
        %v787 = vld [vmem:[#allocation7] sm:$0xff]
        %v788 = vld [vmem:[#allocation7 + $0x8] sm:$0xff]
        %v789 = vld [vmem:[#allocation7 + $0x10] sm:$0xff]
        %v790 = vld [vmem:[#allocation7 + $0x18] sm:$0xff]
        %v791 = vld [vmem:[#allocation7 + $0x20] sm:$0xff]
        %v792 = vld [vmem:[#allocation7 + $0x28] sm:$0xff]
        %v793 = vld [vmem:[#allocation7 + $0x30] sm:$0xff]
        %v794 = vld [vmem:[#allocation7 + $0x38] sm:$0xff]
        %v795 = vld [vmem:[#allocation7 + $0x40] sm:$0xff]
        %v796 = vld [vmem:[#allocation7 + $0x48] sm:$0xff]
        %v797 = vld [vmem:[#allocation7 + $0x50] sm:$0xff]
        %v798 = vld [vmem:[#allocation7 + $0x58] sm:$0xff]
        %v799 = vld [vmem:[#allocation7 + $0x60] sm:$0xff]
        %v800 = vld [vmem:[#allocation7 + $0x68] sm:$0xff]
        %v801 = vld [vmem:[#allocation7 + $0x70] sm:$0xff]
        %v802 = vld [vmem:[#allocation7 + $0x78] sm:$0xff]
        %v803 = vld [vmem:[#allocation7 + $0x80] sm:$0xff]
        %v804 = vld [vmem:[#allocation7 + $0x88] sm:$0xff]
        %v805 = vld [vmem:[#allocation7 + $0x90] sm:$0xff]
        %v806 = vld [vmem:[#allocation7 + $0x98] sm:$0xff]
        %v807 = vld [vmem:[#allocation7 + $0xa0] sm:$0xff]
        %v808 = vld [vmem:[#allocation7 + $0xa8] sm:$0xff]
        %v809 = vld [vmem:[#allocation7 + $0xb0] sm:$0xff]
        %v810 = vld [vmem:[#allocation7 + $0xb8] sm:$0xff]
        %v811 = vld [vmem:[#allocation7 + $0xc0] sm:$0xff]
        %v812 = vld [vmem:[#allocation7 + $0xc8] sm:$0xff]
        %v813 = vld [vmem:[#allocation7 + $0xd0] sm:$0xff]
        %v814 = vld [vmem:[#allocation7 + $0xd8] sm:$0xff]
        %v815 = vld [vmem:[#allocation7 + $0xe0] sm:$0xff]
        %v816 = vld [vmem:[#allocation7 + $0xe8] sm:$0xff]
        %v817 = vld [vmem:[#allocation7 + $0xf0] sm:$0xff]
        %v818 = vld [vmem:[#allocation7 + $0xf8] sm:$0xff]
        %v819 = vld [vmem:[#allocation7 + $0x100] sm:$0xff]
        %v820 = vld [vmem:[#allocation7 + $0x108] sm:$0xff]
        %v821 = vld [vmem:[#allocation7 + $0x110] sm:$0xff]
        %v822 = vld [vmem:[#allocation7 + $0x118] sm:$0xff]
        %v823 = vld [vmem:[#allocation7 + $0x120] sm:$0xff]
        %v824 = vld [vmem:[#allocation7 + $0x128] sm:$0xff]
        %v825 = vld [vmem:[#allocation7 + $0x130] sm:$0xff]
        %v826 = vld [vmem:[#allocation7 + $0x138] sm:$0xff]
        %v827 = vld [vmem:[#allocation7 + $0x140] sm:$0xff]
        %v828 = vld [vmem:[#allocation7 + $0x148] sm:$0xff]
        %v829 = vld [vmem:[#allocation7 + $0x150] sm:$0xff]
        %v830 = vld [vmem:[#allocation7 + $0x158] sm:$0xff]
        %v831 = vld [vmem:[#allocation7 + $0x160] sm:$0xff]
        %v832 = vld [vmem:[#allocation7 + $0x168] sm:$0xff]
        %v833 = vld [vmem:[#allocation7 + $0x170] sm:$0xff]
        %v834 = vld [vmem:[#allocation7 + $0x178] sm:$0xff]
        %v835 = vld [vmem:[#allocation7 + $0x180] sm:$0xff]
        %v836 = vld [vmem:[#allocation7 + $0x188] sm:$0xff]
        %v837 = vld [vmem:[#allocation7 + $0x190] sm:$0xff]
        %v838 = vld [vmem:[#allocation7 + $0x198] sm:$0xff]
        %v839 = vld [vmem:[#allocation7 + $0x1a0] sm:$0xff]
        %v840 = vld [vmem:[#allocation7 + $0x1a8] sm:$0xff]
        %v841 = vld [vmem:[#allocation7 + $0x1b0] sm:$0xff]
        %v842 = vld [vmem:[#allocation7 + $0x1b8] sm:$0xff]
        %v843 = vld [vmem:[#allocation7 + $0x1c0] sm:$0xff]
        %v844 = vld [vmem:[#allocation7 + $0x1c8] sm:$0xff]
        %v845 = vld [vmem:[#allocation7 + $0x1d0] sm:$0xff]
        %v846 = vld [vmem:[#allocation7 + $0x1d8] sm:$0xff]
        %v847 = vld [vmem:[#allocation7 + $0x1e0] sm:$0xff]
        %v848 = vld [vmem:[#allocation7 + $0x1e8] sm:$0xff]
        %v849 = vld [vmem:[#allocation7 + $0x1f0] sm:$0xff]
        %v850 = vld [vmem:[#allocation7 + $0x1f8] sm:$0xff]
        %v915 = vunpack.c.l.b16 %v787
        %v916 = vunpack.c.h.b16 %v787
        %v917 = vunpack.c.l.b16 %v788
        %v918 = vunpack.c.h.b16 %v788
        %v919 = vunpack.c.l.b16 %v789
        %v920 = vunpack.c.h.b16 %v789
        %v921 = vunpack.c.l.b16 %v790
        %v922 = vunpack.c.h.b16 %v790
        %v923 = vunpack.c.l.b16 %v791
        %v924 = vunpack.c.h.b16 %v791
        %v925 = vunpack.c.l.b16 %v792
        %v926 = vunpack.c.h.b16 %v792
        %v927 = vunpack.c.l.b16 %v793
        %v928 = vunpack.c.h.b16 %v793
        %v929 = vunpack.c.l.b16 %v794
        %v930 = vunpack.c.h.b16 %v794
        %v931 = vunpack.c.l.b16 %v795
        %v932 = vunpack.c.h.b16 %v795
        %v933 = vunpack.c.l.b16 %v796
        %v934 = vunpack.c.h.b16 %v796
        %v935 = vunpack.c.l.b16 %v797
        %v936 = vunpack.c.h.b16 %v797
        %v937 = vunpack.c.l.b16 %v798
        %v938 = vunpack.c.h.b16 %v798
        %v939 = vunpack.c.l.b16 %v799
        %v940 = vunpack.c.h.b16 %v799
        %v941 = vunpack.c.l.b16 %v800
        %v942 = vunpack.c.h.b16 %v800
        %v943 = vunpack.c.l.b16 %v801
        %v944 = vunpack.c.h.b16 %v801
        %v945 = vunpack.c.l.b16 %v802
        %v946 = vunpack.c.h.b16 %v802
        %v947 = vunpack.c.l.b16 %v803
        %v948 = vunpack.c.h.b16 %v803
        %v949 = vunpack.c.l.b16 %v804
        %v950 = vunpack.c.h.b16 %v804
        %v951 = vunpack.c.l.b16 %v805
        %v952 = vunpack.c.h.b16 %v805
        %v953 = vunpack.c.l.b16 %v806
        %v954 = vunpack.c.h.b16 %v806
        %v955 = vunpack.c.l.b16 %v807
        %v956 = vunpack.c.h.b16 %v807
        %v957 = vunpack.c.l.b16 %v808
        %v958 = vunpack.c.h.b16 %v808
        %v959 = vunpack.c.l.b16 %v809
        %v960 = vunpack.c.h.b16 %v809
        %v961 = vunpack.c.l.b16 %v810
        %v962 = vunpack.c.h.b16 %v810
        %v963 = vunpack.c.l.b16 %v811
        %v964 = vunpack.c.h.b16 %v811
        %v965 = vunpack.c.l.b16 %v812
        %v966 = vunpack.c.h.b16 %v812
        %v967 = vunpack.c.l.b16 %v813
        %v968 = vunpack.c.h.b16 %v813
        %v969 = vunpack.c.l.b16 %v814
        %v970 = vunpack.c.h.b16 %v814
        %v971 = vunpack.c.l.b16 %v815
        %v972 = vunpack.c.h.b16 %v815
        %v973 = vunpack.c.l.b16 %v816
        %v974 = vunpack.c.h.b16 %v816
        %v975 = vunpack.c.l.b16 %v817
        %v976 = vunpack.c.h.b16 %v817
        %v977 = vunpack.c.l.b16 %v818
        %v978 = vunpack.c.h.b16 %v818
        %v979 = vunpack.c.l.b16 %v819
        %v980 = vunpack.c.h.b16 %v819
        %v981 = vunpack.c.l.b16 %v820
        %v982 = vunpack.c.h.b16 %v820
        %v983 = vunpack.c.l.b16 %v821
        %v984 = vunpack.c.h.b16 %v821
        %v985 = vunpack.c.l.b16 %v822
        %v986 = vunpack.c.h.b16 %v822
        %v987 = vunpack.c.l.b16 %v823
        %v988 = vunpack.c.h.b16 %v823
        %v989 = vunpack.c.l.b16 %v824
        %v990 = vunpack.c.h.b16 %v824
        %v991 = vunpack.c.l.b16 %v825
        %v992 = vunpack.c.h.b16 %v825
        %v993 = vunpack.c.l.b16 %v826
        %v994 = vunpack.c.h.b16 %v826
        %v995 = vunpack.c.l.b16 %v827
        %v996 = vunpack.c.h.b16 %v827
        %v997 = vunpack.c.l.b16 %v828
        %v998 = vunpack.c.h.b16 %v828
        %v999 = vunpack.c.l.b16 %v829
        %v1000 = vunpack.c.h.b16 %v829
        %v1001 = vunpack.c.l.b16 %v830
        %v1002 = vunpack.c.h.b16 %v830
        %v1003 = vunpack.c.l.b16 %v831
        %v1004 = vunpack.c.h.b16 %v831
        %v1005 = vunpack.c.l.b16 %v832
        %v1006 = vunpack.c.h.b16 %v832
        %v1007 = vunpack.c.l.b16 %v833
        %v1008 = vunpack.c.h.b16 %v833
        %v1009 = vunpack.c.l.b16 %v834
        %v1010 = vunpack.c.h.b16 %v834
        %v1011 = vunpack.c.l.b16 %v835
        %v1012 = vunpack.c.h.b16 %v835
        %v1013 = vunpack.c.l.b16 %v836
        %v1014 = vunpack.c.h.b16 %v836
        %v1015 = vunpack.c.l.b16 %v837
        %v1016 = vunpack.c.h.b16 %v837
        %v1017 = vunpack.c.l.b16 %v838
        %v1018 = vunpack.c.h.b16 %v838
        %v1019 = vunpack.c.l.b16 %v839
        %v1020 = vunpack.c.h.b16 %v839
        %v1021 = vunpack.c.l.b16 %v840
        %v1022 = vunpack.c.h.b16 %v840
        %v1023 = vunpack.c.l.b16 %v841
        %v1024 = vunpack.c.h.b16 %v841
        %v1025 = vunpack.c.l.b16 %v842
        %v1026 = vunpack.c.h.b16 %v842
        %v1027 = vunpack.c.l.b16 %v843
        %v1028 = vunpack.c.h.b16 %v843
        %v1029 = vunpack.c.l.b16 %v844
        %v1030 = vunpack.c.h.b16 %v844
        %v1031 = vunpack.c.l.b16 %v845
        %v1032 = vunpack.c.h.b16 %v845
        %v1033 = vunpack.c.l.b16 %v846
        %v1034 = vunpack.c.h.b16 %v846
        %v1035 = vunpack.c.l.b16 %v847
        %v1036 = vunpack.c.h.b16 %v847
        %v1037 = vunpack.c.l.b16 %v848
        %v1038 = vunpack.c.h.b16 %v848
        %v1039 = vunpack.c.l.b16 %v849
        %v1040 = vunpack.c.h.b16 %v849
        %v1041 = vunpack.c.l.b16 %v850
        %v1042 = vunpack.c.h.b16 %v850
        %v1043 = vpack.c.b16 %v919, %v915
        %v1044 = vpack.c.b16 %v920, %v916
        %v1045 = vpack.c.b16 %v921, %v917
        %v1046 = vpack.c.b16 %v922, %v918
        %v1047 = vpack.c.b16 %v927, %v923
        %v1048 = vpack.c.b16 %v928, %v924
        %v1049 = vpack.c.b16 %v929, %v925
        %v1050 = vpack.c.b16 %v930, %v926
        %v1051 = vpack.c.b16 %v935, %v931
        %v1052 = vpack.c.b16 %v936, %v932
        %v1053 = vpack.c.b16 %v937, %v933
        %v1054 = vpack.c.b16 %v938, %v934
        %v1055 = vpack.c.b16 %v943, %v939
        %v1056 = vpack.c.b16 %v944, %v940
        %v1057 = vpack.c.b16 %v945, %v941
        %v1058 = vpack.c.b16 %v946, %v942
        %v1059 = vpack.c.b16 %v951, %v947
        %v1060 = vpack.c.b16 %v952, %v948
        %v1061 = vpack.c.b16 %v953, %v949
        %v1062 = vpack.c.b16 %v954, %v950
        %v1063 = vpack.c.b16 %v959, %v955
        %v1064 = vpack.c.b16 %v960, %v956
        %v1065 = vpack.c.b16 %v961, %v957
        %v1066 = vpack.c.b16 %v962, %v958
        %v1067 = vpack.c.b16 %v967, %v963
        %v1068 = vpack.c.b16 %v968, %v964
        %v1069 = vpack.c.b16 %v969, %v965
        %v1070 = vpack.c.b16 %v970, %v966
        %v1071 = vpack.c.b16 %v975, %v971
        %v1072 = vpack.c.b16 %v976, %v972
        %v1073 = vpack.c.b16 %v977, %v973
        %v1074 = vpack.c.b16 %v978, %v974
        %v1075 = vpack.c.b16 %v983, %v979
        %v1076 = vpack.c.b16 %v984, %v980
        %v1077 = vpack.c.b16 %v985, %v981
        %v1078 = vpack.c.b16 %v986, %v982
        %v1079 = vpack.c.b16 %v991, %v987
        %v1080 = vpack.c.b16 %v992, %v988
        %v1081 = vpack.c.b16 %v993, %v989
        %v1082 = vpack.c.b16 %v994, %v990
        %v1083 = vpack.c.b16 %v999, %v995
        %v1084 = vpack.c.b16 %v1000, %v996
        %v1085 = vpack.c.b16 %v1001, %v997
        %v1086 = vpack.c.b16 %v1002, %v998
        %v1087 = vpack.c.b16 %v1007, %v1003
        %v1088 = vpack.c.b16 %v1008, %v1004
        %v1089 = vpack.c.b16 %v1009, %v1005
        %v1090 = vpack.c.b16 %v1010, %v1006
        %v1091 = vpack.c.b16 %v1015, %v1011
        %v1092 = vpack.c.b16 %v1016, %v1012
        %v1093 = vpack.c.b16 %v1017, %v1013
        %v1094 = vpack.c.b16 %v1018, %v1014
        %v1095 = vpack.c.b16 %v1023, %v1019
        %v1096 = vpack.c.b16 %v1024, %v1020
        %v1097 = vpack.c.b16 %v1025, %v1021
        %v1098 = vpack.c.b16 %v1026, %v1022
        %v1099 = vpack.c.b16 %v1031, %v1027
        %v1100 = vpack.c.b16 %v1032, %v1028
        %v1101 = vpack.c.b16 %v1033, %v1029
        %v1102 = vpack.c.b16 %v1034, %v1030
        %v1103 = vpack.c.b16 %v1039, %v1035
        %v1104 = vpack.c.b16 %v1040, %v1036
        %v1105 = vpack.c.b16 %v1041, %v1037
        %v1106 = vpack.c.b16 %v1042, %v1038
        %1171 = vmatpush.bf16.msra.mxu0 %v1071
        %1172 = vmatpush.bf16.msra.mxu0 %v1067
        %1173 = vmatpush.bf16.msra.mxu0 %v1063
        %1174 = vmatpush.bf16.msra.mxu0 %v1059
        %1175 = vmatpush.bf16.msra.mxu0 %v1055
        %1176 = vmatpush.bf16.msra.mxu0 %v1051
        %1177 = vmatpush.bf16.msra.mxu0 %v1047
        %1178 = vmatpush.bf16.msra.mxu0 %v1043
        %1179 = vmatmul.bf16.gmra.mxu0 %v785
        %v1180 = vpop.f32.mrf.mxu0
        %v1181 = vadd.f32 0.0, %v1180
        %v1182 = vpop.f32.mrf.mxu0
        %1183 = vdwg.mxu0
        %1184 = vmatpush.bf16.msra.mxu0 %v1103
        %1185 = vmatpush.bf16.msra.mxu0 %v1099
        %1186 = vmatpush.bf16.msra.mxu0 %v1095
        %1187 = vmatpush.bf16.msra.mxu0 %v1091
        %1188 = vmatpush.bf16.msra.mxu0 %v1087
        %1189 = vmatpush.bf16.msra.mxu0 %v1083
        %1190 = vmatpush.bf16.msra.mxu0 %v1079
        %1191 = vmatpush.bf16.msra.mxu0 %v1075
        %1192 = vmatmul.bf16.gmra.mxu0 %v786
        %v1193 = vpop.f32.mrf.mxu0
        %v1194 = vadd.f32 %v1181, %v1193
        %v1195 = vpop.f32.mrf.mxu0
        %1196 = vdwg.mxu0
        %1197 = vmatpush.bf16.msra.mxu0 %v1072
        %1198 = vmatpush.bf16.msra.mxu0 %v1068
        %1199 = vmatpush.bf16.msra.mxu0 %v1064
        %1200 = vmatpush.bf16.msra.mxu0 %v1060
        %1201 = vmatpush.bf16.msra.mxu0 %v1056
        %1202 = vmatpush.bf16.msra.mxu0 %v1052
        %1203 = vmatpush.bf16.msra.mxu0 %v1048
        %1204 = vmatpush.bf16.msra.mxu0 %v1044
        %1205 = vmatmul.bf16.gmra.mxu0 %v785
        %v1206 = vpop.f32.mrf.mxu0
        %v1207 = vadd.f32 0.0, %v1206
        %v1208 = vpop.f32.mrf.mxu0
        %1209 = vdwg.mxu0
        %1210 = vmatpush.bf16.msra.mxu0 %v1104
        %1211 = vmatpush.bf16.msra.mxu0 %v1100
        %1212 = vmatpush.bf16.msra.mxu0 %v1096
        %1213 = vmatpush.bf16.msra.mxu0 %v1092
        %1214 = vmatpush.bf16.msra.mxu0 %v1088
        %1215 = vmatpush.bf16.msra.mxu0 %v1084
        %1216 = vmatpush.bf16.msra.mxu0 %v1080
        %1217 = vmatpush.bf16.msra.mxu0 %v1076
        %1218 = vmatmul.bf16.gmra.mxu0 %v786
        %v1219 = vpop.f32.mrf.mxu0
        %v1220 = vadd.f32 %v1207, %v1219
        %v1221 = vpop.f32.mrf.mxu0
        %1222 = vdwg.mxu0
        %1223 = vmatpush.bf16.msra.mxu0 %v1073
        %1224 = vmatpush.bf16.msra.mxu0 %v1069
        %1225 = vmatpush.bf16.msra.mxu0 %v1065
        %1226 = vmatpush.bf16.msra.mxu0 %v1061
        %1227 = vmatpush.bf16.msra.mxu0 %v1057
        %1228 = vmatpush.bf16.msra.mxu0 %v1053
        %1229 = vmatpush.bf16.msra.mxu0 %v1049
        %1230 = vmatpush.bf16.msra.mxu0 %v1045
        %1231 = vmatmul.bf16.gmra.mxu0 %v785
        %v1232 = vpop.f32.mrf.mxu0
        %v1233 = vadd.f32 0.0, %v1232
        %v1234 = vpop.f32.mrf.mxu0
        %1235 = vdwg.mxu0
        %1236 = vmatpush.bf16.msra.mxu0 %v1105
        %1237 = vmatpush.bf16.msra.mxu0 %v1101
        %1238 = vmatpush.bf16.msra.mxu0 %v1097
        %1239 = vmatpush.bf16.msra.mxu0 %v1093
        %1240 = vmatpush.bf16.msra.mxu0 %v1089
        %1241 = vmatpush.bf16.msra.mxu0 %v1085
        %1242 = vmatpush.bf16.msra.mxu0 %v1081
        %1243 = vmatpush.bf16.msra.mxu0 %v1077
        %1244 = vmatmul.bf16.gmra.mxu0 %v786
        %v1245 = vpop.f32.mrf.mxu0
        %v1246 = vadd.f32 %v1233, %v1245
        %v1247 = vpop.f32.mrf.mxu0
        %1248 = vdwg.mxu0
        %1249 = vmatpush.bf16.msra.mxu0 %v1074
        %1250 = vmatpush.bf16.msra.mxu0 %v1070
        %1251 = vmatpush.bf16.msra.mxu0 %v1066
        %1252 = vmatpush.bf16.msra.mxu0 %v1062
        %1253 = vmatpush.bf16.msra.mxu0 %v1058
        %1254 = vmatpush.bf16.msra.mxu0 %v1054
        %1255 = vmatpush.bf16.msra.mxu0 %v1050
        %1256 = vmatpush.bf16.msra.mxu0 %v1046
        %1257 = vmatmul.bf16.gmra.mxu0 %v785
        %v1258 = vpop.f32.mrf.mxu0
        %v1259 = vadd.f32 0.0, %v1258
        %v1260 = vpop.f32.mrf.mxu0
        %1261 = vdwg.mxu0
        %1262 = vmatpush.bf16.msra.mxu0 %v1106
        %1263 = vmatpush.bf16.msra.mxu0 %v1102
        %1264 = vmatpush.bf16.msra.mxu0 %v1098
        %1265 = vmatpush.bf16.msra.mxu0 %v1094
        %1266 = vmatpush.bf16.msra.mxu0 %v1090
        %1267 = vmatpush.bf16.msra.mxu0 %v1086
        %1268 = vmatpush.bf16.msra.mxu0 %v1082
        %1269 = vmatpush.bf16.msra.mxu0 %v1078
        %1270 = vmatmul.bf16.gmra.mxu0 %v786
        %v1271 = vpop.f32.mrf.mxu0
        %v1272 = vadd.f32 %v1259, %v1271
        %v1273 = vpop.f32.mrf.mxu0
        %1274 = vdwg.mxu0
        %v1275 = vrot.slane %v1194, 4
        %v1276 = vadd.f32 %v1194, %v1275
        %v1277 = vrot.slane %v1276, 2
        %v1278 = vadd.f32 %v1276, %v1277
        %v1279 = vrot.slane %v1278, 1
        %v1280 = vadd.f32 %v1278, %v1279
        %v1281 = vrot.slane %v1220, 4
        %v1282 = vadd.f32 %v1220, %v1281
        %v1283 = vrot.slane %v1282, 2
        %v1284 = vadd.f32 %v1282, %v1283
        %v1285 = vrot.slane %v1284, 1
        %v1286 = vadd.f32 %v1284, %v1285
        %v1287 = vrot.slane %v1246, 4
        %v1288 = vadd.f32 %v1246, %v1287
        %v1289 = vrot.slane %v1288, 2
        %v1290 = vadd.f32 %v1288, %v1289
        %v1291 = vrot.slane %v1290, 1
        %v1292 = vadd.f32 %v1290, %v1291
        %v1293 = vrot.slane %v1272, 4
        %v1294 = vadd.f32 %v1272, %v1293
        %v1295 = vrot.slane %v1294, 2
        %v1296 = vadd.f32 %v1294, %v1295
        %v1297 = vrot.slane %v1296, 1
        %v1298 = vadd.f32 %v1296, %v1297
        %v1299 = vmul.f32 %v1280, %v716
        %v1300 = vmul.f32 %v1286, %v716
        %v1301 = vmul.f32 %v1292, %v716
        %v1302 = vmul.f32 %v1298, %v716
        %v1303 = vmul.f32 %v1194, %v1194
        %v1304 = vmul.f32 %v1220, %v1220
        %v1305 = vmul.f32 %v1246, %v1246
        %v1306 = vmul.f32 %v1272, %v1272
        %v1307 = vrot.slane %v1303, 4
        %v1308 = vadd.f32 %v1303, %v1307
        %v1309 = vrot.slane %v1308, 2
        %v1310 = vadd.f32 %v1308, %v1309
        %v1311 = vrot.slane %v1310, 1
        %v1312 = vadd.f32 %v1310, %v1311
        %v1313 = vrot.slane %v1304, 4
        %v1314 = vadd.f32 %v1304, %v1313
        %v1315 = vrot.slane %v1314, 2
        %v1316 = vadd.f32 %v1314, %v1315
        %v1317 = vrot.slane %v1316, 1
        %v1318 = vadd.f32 %v1316, %v1317
        %v1319 = vrot.slane %v1305, 4
        %v1320 = vadd.f32 %v1305, %v1319
        %v1321 = vrot.slane %v1320, 2
        %v1322 = vadd.f32 %v1320, %v1321
        %v1323 = vrot.slane %v1322, 1
        %v1324 = vadd.f32 %v1322, %v1323
        %v1325 = vrot.slane %v1306, 4
        %v1326 = vadd.f32 %v1306, %v1325
        %v1327 = vrot.slane %v1326, 2
        %v1328 = vadd.f32 %v1326, %v1327
        %v1329 = vrot.slane %v1328, 1
        %v1330 = vadd.f32 %v1328, %v1329
        %v1331 = vmul.f32 %v1312, %v716
        %v1332 = vmul.f32 %v1318, %v716
        %v1333 = vmul.f32 %v1324, %v716
        %v1334 = vmul.f32 %v1330, %v716
        %v1335 = vmul.f32 %v1299, %v1299
        %v1336 = vmul.f32 %v1300, %v1300
        %v1337 = vmul.f32 %v1301, %v1301
        %v1338 = vmul.f32 %v1302, %v1302
        %v1339 = vsub.f32 %v1331, %v1335
        %v1340 = vsub.f32 %v1332, %v1336
        %v1341 = vsub.f32 %v1333, %v1337
        %v1342 = vsub.f32 %v1334, %v1338
        %v1343 = vmax.f32 %v1339, 0.0
        %v1344 = vmax.f32 %v1340, 0.0
        %v1345 = vmax.f32 %v1341, 0.0
        %v1346 = vmax.f32 %v1342, 0.0
        %v1347 = vadd.f32 %v1343, 1e-05
        %v1348 = vadd.f32 %v1344, 1e-05
        %v1349 = vadd.f32 %v1345, 1e-05
        %v1350 = vadd.f32 %v1346, 1e-05
        %v1351 = vrsqrt.pop %v1347
        %v1352 = vmul.f32 %v1351, %v1347
        %v1353 = vmul.f32 %v1352, %v1351
        %v1354 = vmul.f32 0.5, %v1353
        %v1355 = vsub.f32 1.5, %v1354
        %v1356 = vmul.f32 %v1351, %v1355
        %vm1357 = vweird.f32 %v1347
        %vm1358 = vweird.f32 %v1351
        %vm1359 = vmor %vm1357, %vm1358
        %v1360 = vsel %vm1359, %v1351, %v1356
        %v1361 = vrsqrt.pop %v1348
        %v1362 = vmul.f32 %v1361, %v1348
        %v1363 = vmul.f32 %v1362, %v1361
        %v1364 = vmul.f32 0.5, %v1363
        %v1365 = vsub.f32 1.5, %v1364
        %v1366 = vmul.f32 %v1361, %v1365
        %vm1367 = vweird.f32 %v1348
        %vm1368 = vweird.f32 %v1361
        %vm1369 = vmor %vm1367, %vm1368
        %v1370 = vsel %vm1369, %v1361, %v1366
        %v1371 = vrsqrt.pop %v1349
        %v1372 = vmul.f32 %v1371, %v1349
        %v1373 = vmul.f32 %v1372, %v1371
        %v1374 = vmul.f32 0.5, %v1373
        %v1375 = vsub.f32 1.5, %v1374
        %v1376 = vmul.f32 %v1371, %v1375
        %vm1377 = vweird.f32 %v1349
        %vm1378 = vweird.f32 %v1371
        %vm1379 = vmor %vm1377, %vm1378
        %v1380 = vsel %vm1379, %v1371, %v1376
        %v1381 = vrsqrt.pop %v1350
        %v1382 = vmul.f32 %v1381, %v1350
        %v1383 = vmul.f32 %v1382, %v1381
        %v1384 = vmul.f32 0.5, %v1383
        %v1385 = vsub.f32 1.5, %v1384
        %v1386 = vmul.f32 %v1381, %v1385
        %vm1387 = vweird.f32 %v1350
        %vm1388 = vweird.f32 %v1381
        %vm1389 = vmor %vm1387, %vm1388
        %v1390 = vsel %vm1389, %v1381, %v1386
        %v1391 = vmul.f32 %v440, %v1360
        %v1392 = vmul.f32 %v441, %v1370
        %v1393 = vmul.f32 %v442, %v1380
        %v1394 = vmul.f32 %v443, %v1390
        %v1395 = vmul.f32 %v1299, %v1391
        %v1396 = vmul.f32 %v1300, %v1392
        %v1397 = vmul.f32 %v1301, %v1393
        %v1398 = vmul.f32 %v1302, %v1394
        %v1403 = vrot.slane %v1395, 7
        %v1404 = vrot.slane %v1396, 7
        %v1405 = vrot.slane %v1397, 7
        %v1406 = vrot.slane %v1398, 7
        %v1411 = vsub.f32 %v440, %v1403
        %v1412 = vsub.f32 %v441, %v1404
        %v1413 = vsub.f32 %v442, %v1405
        %v1414 = vsub.f32 %v443, %v1406
        %v1415 = vperm.slane %v1391, 2
        %v1416 = vperm.slane %v1392, 2
        %v1417 = vperm.slane %v1393, 2
        %v1418 = vperm.slane %v1394, 2
        %v1419 = vmul.f32 %v1194, %v1415
        %v1420 = vmul.f32 %v1220, %v1416
        %v1421 = vmul.f32 %v1246, %v1417
        %v1422 = vmul.f32 %v1272, %v1418
        %v1423 = vperm.slane %v1411, 3
        %v1424 = vperm.slane %v1412, 3
        %v1425 = vperm.slane %v1413, 3
        %v1426 = vperm.slane %v1414, 3
        %v1427 = vadd.f32 %v1419, %v1423
        %v1428 = vadd.f32 %v1420, %v1424
        %v1429 = vadd.f32 %v1421, %v1425
        %v1430 = vadd.f32 %v1422, %v1426
        %v1431 = vmax.f32 %v1427, 0.0
        %v1432 = vmax.f32 %v1428, 0.0
        %v1433 = vmax.f32 %v1429, 0.0
        %v1434 = vmax.f32 %v1430, 0.0
        %v1435 = vpack.c.bf16 %v1431, %v1431
        %v1436 = vpack.c.bf16 %v1432, %v1432
        %v1437 = vpack.c.bf16 %v1433, %v1433
        %v1438 = vpack.c.bf16 %v1434, %v1434
        %v1439 = vld [vmem:[#allocation8] sm:$0xff]
        %v1440 = vld [vmem:[#allocation8 + $0x8] sm:$0xff]
        %v1441 = vld [vmem:[#allocation8 + $0x10] sm:$0xff]
        %v1442 = vld [vmem:[#allocation8 + $0x18] sm:$0xff]
        %v1443 = vld [vmem:[#allocation8 + $0x20] sm:$0xff]
        %v1444 = vld [vmem:[#allocation8 + $0x28] sm:$0xff]
        %v1445 = vld [vmem:[#allocation8 + $0x30] sm:$0xff]
        %v1446 = vld [vmem:[#allocation8 + $0x38] sm:$0xff]
        %v1447 = vld [vmem:[#allocation8 + $0x40] sm:$0xff]
        %v1448 = vld [vmem:[#allocation8 + $0x48] sm:$0xff]
        %v1449 = vld [vmem:[#allocation8 + $0x50] sm:$0xff]
        %v1450 = vld [vmem:[#allocation8 + $0x58] sm:$0xff]
        %v1451 = vld [vmem:[#allocation8 + $0x60] sm:$0xff]
        %v1452 = vld [vmem:[#allocation8 + $0x68] sm:$0xff]
        %v1453 = vld [vmem:[#allocation8 + $0x70] sm:$0xff]
        %v1454 = vld [vmem:[#allocation8 + $0x78] sm:$0xff]
        %v1455 = vld [vmem:[#allocation8 + $0x80] sm:$0xff]
        %v1456 = vld [vmem:[#allocation8 + $0x88] sm:$0xff]
        %v1457 = vld [vmem:[#allocation8 + $0x90] sm:$0xff]
        %v1458 = vld [vmem:[#allocation8 + $0x98] sm:$0xff]
        %v1459 = vld [vmem:[#allocation8 + $0xa0] sm:$0xff]
        %v1460 = vld [vmem:[#allocation8 + $0xa8] sm:$0xff]
        %v1461 = vld [vmem:[#allocation8 + $0xb0] sm:$0xff]
        %v1462 = vld [vmem:[#allocation8 + $0xb8] sm:$0xff]
        %v1463 = vld [vmem:[#allocation8 + $0xc0] sm:$0xff]
        %v1464 = vld [vmem:[#allocation8 + $0xc8] sm:$0xff]
        %v1465 = vld [vmem:[#allocation8 + $0xd0] sm:$0xff]
        %v1466 = vld [vmem:[#allocation8 + $0xd8] sm:$0xff]
        %v1467 = vld [vmem:[#allocation8 + $0xe0] sm:$0xff]
        %v1468 = vld [vmem:[#allocation8 + $0xe8] sm:$0xff]
        %v1469 = vld [vmem:[#allocation8 + $0xf0] sm:$0xff]
        %v1470 = vld [vmem:[#allocation8 + $0xf8] sm:$0xff]
        %v1471 = vld [vmem:[#allocation8 + $0x100] sm:$0xff]
        %v1472 = vld [vmem:[#allocation8 + $0x108] sm:$0xff]
        %v1473 = vld [vmem:[#allocation8 + $0x110] sm:$0xff]
        %v1474 = vld [vmem:[#allocation8 + $0x118] sm:$0xff]
        %v1475 = vld [vmem:[#allocation8 + $0x120] sm:$0xff]
        %v1476 = vld [vmem:[#allocation8 + $0x128] sm:$0xff]
        %v1477 = vld [vmem:[#allocation8 + $0x130] sm:$0xff]
        %v1478 = vld [vmem:[#allocation8 + $0x138] sm:$0xff]
        %v1479 = vld [vmem:[#allocation8 + $0x140] sm:$0xff]
        %v1480 = vld [vmem:[#allocation8 + $0x148] sm:$0xff]
        %v1481 = vld [vmem:[#allocation8 + $0x150] sm:$0xff]
        %v1482 = vld [vmem:[#allocation8 + $0x158] sm:$0xff]
        %v1483 = vld [vmem:[#allocation8 + $0x160] sm:$0xff]
        %v1484 = vld [vmem:[#allocation8 + $0x168] sm:$0xff]
        %v1485 = vld [vmem:[#allocation8 + $0x170] sm:$0xff]
        %v1486 = vld [vmem:[#allocation8 + $0x178] sm:$0xff]
        %v1487 = vld [vmem:[#allocation8 + $0x180] sm:$0xff]
        %v1488 = vld [vmem:[#allocation8 + $0x188] sm:$0xff]
        %v1489 = vld [vmem:[#allocation8 + $0x190] sm:$0xff]
        %v1490 = vld [vmem:[#allocation8 + $0x198] sm:$0xff]
        %v1491 = vld [vmem:[#allocation8 + $0x1a0] sm:$0xff]
        %v1492 = vld [vmem:[#allocation8 + $0x1a8] sm:$0xff]
        %v1493 = vld [vmem:[#allocation8 + $0x1b0] sm:$0xff]
        %v1494 = vld [vmem:[#allocation8 + $0x1b8] sm:$0xff]
        %v1495 = vld [vmem:[#allocation8 + $0x1c0] sm:$0xff]
        %v1496 = vld [vmem:[#allocation8 + $0x1c8] sm:$0xff]
        %v1497 = vld [vmem:[#allocation8 + $0x1d0] sm:$0xff]
        %v1498 = vld [vmem:[#allocation8 + $0x1d8] sm:$0xff]
        %v1499 = vld [vmem:[#allocation8 + $0x1e0] sm:$0xff]
        %v1500 = vld [vmem:[#allocation8 + $0x1e8] sm:$0xff]
        %v1501 = vld [vmem:[#allocation8 + $0x1f0] sm:$0xff]
        %v1502 = vld [vmem:[#allocation8 + $0x1f8] sm:$0xff]
        %v1503 = vld [vmem:[#allocation8 + $0x200] sm:$0xff]
        %v1504 = vld [vmem:[#allocation8 + $0x208] sm:$0xff]
        %v1505 = vld [vmem:[#allocation8 + $0x210] sm:$0xff]
        %v1506 = vld [vmem:[#allocation8 + $0x218] sm:$0xff]
        %v1507 = vld [vmem:[#allocation8 + $0x220] sm:$0xff]
        %v1508 = vld [vmem:[#allocation8 + $0x228] sm:$0xff]
        %v1509 = vld [vmem:[#allocation8 + $0x230] sm:$0xff]
        %v1510 = vld [vmem:[#allocation8 + $0x238] sm:$0xff]
        %v1511 = vld [vmem:[#allocation8 + $0x240] sm:$0xff]
        %v1512 = vld [vmem:[#allocation8 + $0x248] sm:$0xff]
        %v1513 = vld [vmem:[#allocation8 + $0x250] sm:$0xff]
        %v1514 = vld [vmem:[#allocation8 + $0x258] sm:$0xff]
        %v1515 = vld [vmem:[#allocation8 + $0x260] sm:$0xff]
        %v1516 = vld [vmem:[#allocation8 + $0x268] sm:$0xff]
        %v1517 = vld [vmem:[#allocation8 + $0x270] sm:$0xff]
        %v1518 = vld [vmem:[#allocation8 + $0x278] sm:$0xff]
        %v1519 = vld [vmem:[#allocation8 + $0x280] sm:$0xff]
        %v1520 = vld [vmem:[#allocation8 + $0x288] sm:$0xff]
        %v1521 = vld [vmem:[#allocation8 + $0x290] sm:$0xff]
        %v1522 = vld [vmem:[#allocation8 + $0x298] sm:$0xff]
        %v1523 = vld [vmem:[#allocation8 + $0x2a0] sm:$0xff]
        %v1524 = vld [vmem:[#allocation8 + $0x2a8] sm:$0xff]
        %v1525 = vld [vmem:[#allocation8 + $0x2b0] sm:$0xff]
        %v1526 = vld [vmem:[#allocation8 + $0x2b8] sm:$0xff]
        %v1527 = vld [vmem:[#allocation8 + $0x2c0] sm:$0xff]
        %v1528 = vld [vmem:[#allocation8 + $0x2c8] sm:$0xff]
        %v1529 = vld [vmem:[#allocation8 + $0x2d0] sm:$0xff]
        %v1530 = vld [vmem:[#allocation8 + $0x2d8] sm:$0xff]
        %v1531 = vld [vmem:[#allocation8 + $0x2e0] sm:$0xff]
        %v1532 = vld [vmem:[#allocation8 + $0x2e8] sm:$0xff]
        %v1533 = vld [vmem:[#allocation8 + $0x2f0] sm:$0xff]
        %v1534 = vld [vmem:[#allocation8 + $0x2f8] sm:$0xff]
        %v1535 = vld [vmem:[#allocation8 + $0x300] sm:$0xff]
        %v1536 = vld [vmem:[#allocation8 + $0x308] sm:$0xff]
        %v1537 = vld [vmem:[#allocation8 + $0x310] sm:$0xff]
        %v1538 = vld [vmem:[#allocation8 + $0x318] sm:$0xff]
        %v1539 = vld [vmem:[#allocation8 + $0x320] sm:$0xff]
        %v1540 = vld [vmem:[#allocation8 + $0x328] sm:$0xff]
        %v1541 = vld [vmem:[#allocation8 + $0x330] sm:$0xff]
        %v1542 = vld [vmem:[#allocation8 + $0x338] sm:$0xff]
        %v1543 = vld [vmem:[#allocation8 + $0x340] sm:$0xff]
        %v1544 = vld [vmem:[#allocation8 + $0x348] sm:$0xff]
        %v1545 = vld [vmem:[#allocation8 + $0x350] sm:$0xff]
        %v1546 = vld [vmem:[#allocation8 + $0x358] sm:$0xff]
        %v1547 = vld [vmem:[#allocation8 + $0x360] sm:$0xff]
        %v1548 = vld [vmem:[#allocation8 + $0x368] sm:$0xff]
        %v1549 = vld [vmem:[#allocation8 + $0x370] sm:$0xff]
        %v1550 = vld [vmem:[#allocation8 + $0x378] sm:$0xff]
        %v1551 = vld [vmem:[#allocation8 + $0x380] sm:$0xff]
        %v1552 = vld [vmem:[#allocation8 + $0x388] sm:$0xff]
        %v1553 = vld [vmem:[#allocation8 + $0x390] sm:$0xff]
        %v1554 = vld [vmem:[#allocation8 + $0x398] sm:$0xff]
        %v1555 = vld [vmem:[#allocation8 + $0x3a0] sm:$0xff]
        %v1556 = vld [vmem:[#allocation8 + $0x3a8] sm:$0xff]
        %v1557 = vld [vmem:[#allocation8 + $0x3b0] sm:$0xff]
        %v1558 = vld [vmem:[#allocation8 + $0x3b8] sm:$0xff]
        %v1559 = vld [vmem:[#allocation8 + $0x3c0] sm:$0xff]
        %v1560 = vld [vmem:[#allocation8 + $0x3c8] sm:$0xff]
        %v1561 = vld [vmem:[#allocation8 + $0x3d0] sm:$0xff]
        %v1562 = vld [vmem:[#allocation8 + $0x3d8] sm:$0xff]
        %v1563 = vld [vmem:[#allocation8 + $0x3e0] sm:$0xff]
        %v1564 = vld [vmem:[#allocation8 + $0x3e8] sm:$0xff]
        %v1565 = vld [vmem:[#allocation8 + $0x3f0] sm:$0xff]
        %v1566 = vld [vmem:[#allocation8 + $0x3f8] sm:$0xff]
        %v1567 = vld [vmem:[#allocation8 + $0x400] sm:$0xff]
        %v1568 = vld [vmem:[#allocation8 + $0x408] sm:$0xff]
        %v1569 = vld [vmem:[#allocation8 + $0x410] sm:$0xff]
        %v1570 = vld [vmem:[#allocation8 + $0x418] sm:$0xff]
        %v1571 = vld [vmem:[#allocation8 + $0x420] sm:$0xff]
        %v1572 = vld [vmem:[#allocation8 + $0x428] sm:$0xff]
        %v1573 = vld [vmem:[#allocation8 + $0x430] sm:$0xff]
        %v1574 = vld [vmem:[#allocation8 + $0x438] sm:$0xff]
        %v1575 = vld [vmem:[#allocation8 + $0x440] sm:$0xff]
        %v1576 = vld [vmem:[#allocation8 + $0x448] sm:$0xff]
        %v1577 = vld [vmem:[#allocation8 + $0x450] sm:$0xff]
        %v1578 = vld [vmem:[#allocation8 + $0x458] sm:$0xff]
        %v1579 = vld [vmem:[#allocation8 + $0x460] sm:$0xff]
        %v1580 = vld [vmem:[#allocation8 + $0x468] sm:$0xff]
        %v1581 = vld [vmem:[#allocation8 + $0x470] sm:$0xff]
        %v1582 = vld [vmem:[#allocation8 + $0x478] sm:$0xff]
        %v1583 = vld [vmem:[#allocation8 + $0x480] sm:$0xff]
        %v1584 = vld [vmem:[#allocation8 + $0x488] sm:$0xff]
        %v1585 = vld [vmem:[#allocation8 + $0x490] sm:$0xff]
        %v1586 = vld [vmem:[#allocation8 + $0x498] sm:$0xff]
        %v1587 = vld [vmem:[#allocation8 + $0x4a0] sm:$0xff]
        %v1588 = vld [vmem:[#allocation8 + $0x4a8] sm:$0xff]
        %v1589 = vld [vmem:[#allocation8 + $0x4b0] sm:$0xff]
        %v1590 = vld [vmem:[#allocation8 + $0x4b8] sm:$0xff]
        %v1591 = vld [vmem:[#allocation8 + $0x4c0] sm:$0xff]
        %v1592 = vld [vmem:[#allocation8 + $0x4c8] sm:$0xff]
        %v1593 = vld [vmem:[#allocation8 + $0x4d0] sm:$0xff]
        %v1594 = vld [vmem:[#allocation8 + $0x4d8] sm:$0xff]
        %v1595 = vld [vmem:[#allocation8 + $0x4e0] sm:$0xff]
        %v1596 = vld [vmem:[#allocation8 + $0x4e8] sm:$0xff]
        %v1597 = vld [vmem:[#allocation8 + $0x4f0] sm:$0xff]
        %v1598 = vld [vmem:[#allocation8 + $0x4f8] sm:$0xff]
        %v1599 = vld [vmem:[#allocation8 + $0x500] sm:$0xff]
        %v1600 = vld [vmem:[#allocation8 + $0x508] sm:$0xff]
        %v1601 = vld [vmem:[#allocation8 + $0x510] sm:$0xff]
        %v1602 = vld [vmem:[#allocation8 + $0x518] sm:$0xff]
        %v1603 = vld [vmem:[#allocation8 + $0x520] sm:$0xff]
        %v1604 = vld [vmem:[#allocation8 + $0x528] sm:$0xff]
        %v1605 = vld [vmem:[#allocation8 + $0x530] sm:$0xff]
        %v1606 = vld [vmem:[#allocation8 + $0x538] sm:$0xff]
        %v1607 = vld [vmem:[#allocation8 + $0x540] sm:$0xff]
        %v1608 = vld [vmem:[#allocation8 + $0x548] sm:$0xff]
        %v1609 = vld [vmem:[#allocation8 + $0x550] sm:$0xff]
        %v1610 = vld [vmem:[#allocation8 + $0x558] sm:$0xff]
        %v1611 = vld [vmem:[#allocation8 + $0x560] sm:$0xff]
        %v1612 = vld [vmem:[#allocation8 + $0x568] sm:$0xff]
        %v1613 = vld [vmem:[#allocation8 + $0x570] sm:$0xff]
        %v1614 = vld [vmem:[#allocation8 + $0x578] sm:$0xff]
        %v1615 = vld [vmem:[#allocation8 + $0x580] sm:$0xff]
        %v1616 = vld [vmem:[#allocation8 + $0x588] sm:$0xff]
        %v1617 = vld [vmem:[#allocation8 + $0x590] sm:$0xff]
        %v1618 = vld [vmem:[#allocation8 + $0x598] sm:$0xff]
        %v1619 = vld [vmem:[#allocation8 + $0x5a0] sm:$0xff]
        %v1620 = vld [vmem:[#allocation8 + $0x5a8] sm:$0xff]
        %v1621 = vld [vmem:[#allocation8 + $0x5b0] sm:$0xff]
        %v1622 = vld [vmem:[#allocation8 + $0x5b8] sm:$0xff]
        %v1623 = vld [vmem:[#allocation8 + $0x5c0] sm:$0xff]
        %v1624 = vld [vmem:[#allocation8 + $0x5c8] sm:$0xff]
        %v1625 = vld [vmem:[#allocation8 + $0x5d0] sm:$0xff]
        %v1626 = vld [vmem:[#allocation8 + $0x5d8] sm:$0xff]
        %v1627 = vld [vmem:[#allocation8 + $0x5e0] sm:$0xff]
        %v1628 = vld [vmem:[#allocation8 + $0x5e8] sm:$0xff]
        %v1629 = vld [vmem:[#allocation8 + $0x5f0] sm:$0xff]
        %v1630 = vld [vmem:[#allocation8 + $0x5f8] sm:$0xff]
        %v1631 = vld [vmem:[#allocation8 + $0x600] sm:$0xff]
        %v1632 = vld [vmem:[#allocation8 + $0x608] sm:$0xff]
        %v1633 = vld [vmem:[#allocation8 + $0x610] sm:$0xff]
        %v1634 = vld [vmem:[#allocation8 + $0x618] sm:$0xff]
        %v1635 = vld [vmem:[#allocation8 + $0x620] sm:$0xff]
        %v1636 = vld [vmem:[#allocation8 + $0x628] sm:$0xff]
        %v1637 = vld [vmem:[#allocation8 + $0x630] sm:$0xff]
        %v1638 = vld [vmem:[#allocation8 + $0x638] sm:$0xff]
        %v1639 = vld [vmem:[#allocation8 + $0x640] sm:$0xff]
        %v1640 = vld [vmem:[#allocation8 + $0x648] sm:$0xff]
        %v1641 = vld [vmem:[#allocation8 + $0x650] sm:$0xff]
        %v1642 = vld [vmem:[#allocation8 + $0x658] sm:$0xff]
        %v1643 = vld [vmem:[#allocation8 + $0x660] sm:$0xff]
        %v1644 = vld [vmem:[#allocation8 + $0x668] sm:$0xff]
        %v1645 = vld [vmem:[#allocation8 + $0x670] sm:$0xff]
        %v1646 = vld [vmem:[#allocation8 + $0x678] sm:$0xff]
        %v1647 = vld [vmem:[#allocation8 + $0x680] sm:$0xff]
        %v1648 = vld [vmem:[#allocation8 + $0x688] sm:$0xff]
        %v1649 = vld [vmem:[#allocation8 + $0x690] sm:$0xff]
        %v1650 = vld [vmem:[#allocation8 + $0x698] sm:$0xff]
        %v1651 = vld [vmem:[#allocation8 + $0x6a0] sm:$0xff]
        %v1652 = vld [vmem:[#allocation8 + $0x6a8] sm:$0xff]
        %v1653 = vld [vmem:[#allocation8 + $0x6b0] sm:$0xff]
        %v1654 = vld [vmem:[#allocation8 + $0x6b8] sm:$0xff]
        %v1655 = vld [vmem:[#allocation8 + $0x6c0] sm:$0xff]
        %v1656 = vld [vmem:[#allocation8 + $0x6c8] sm:$0xff]
        %v1657 = vld [vmem:[#allocation8 + $0x6d0] sm:$0xff]
        %v1658 = vld [vmem:[#allocation8 + $0x6d8] sm:$0xff]
        %v1659 = vld [vmem:[#allocation8 + $0x6e0] sm:$0xff]
        %v1660 = vld [vmem:[#allocation8 + $0x6e8] sm:$0xff]
        %v1661 = vld [vmem:[#allocation8 + $0x6f0] sm:$0xff]
        %v1662 = vld [vmem:[#allocation8 + $0x6f8] sm:$0xff]
        %v1663 = vld [vmem:[#allocation8 + $0x700] sm:$0xff]
        %v1664 = vld [vmem:[#allocation8 + $0x708] sm:$0xff]
        %v1665 = vld [vmem:[#allocation8 + $0x710] sm:$0xff]
        %v1666 = vld [vmem:[#allocation8 + $0x718] sm:$0xff]
        %v1667 = vld [vmem:[#allocation8 + $0x720] sm:$0xff]
        %v1668 = vld [vmem:[#allocation8 + $0x728] sm:$0xff]
        %v1669 = vld [vmem:[#allocation8 + $0x730] sm:$0xff]
        %v1670 = vld [vmem:[#allocation8 + $0x738] sm:$0xff]
        %v1671 = vld [vmem:[#allocation8 + $0x740] sm:$0xff]
        %v1672 = vld [vmem:[#allocation8 + $0x748] sm:$0xff]
        %v1673 = vld [vmem:[#allocation8 + $0x750] sm:$0xff]
        %v1674 = vld [vmem:[#allocation8 + $0x758] sm:$0xff]
        %v1675 = vld [vmem:[#allocation8 + $0x760] sm:$0xff]
        %v1676 = vld [vmem:[#allocation8 + $0x768] sm:$0xff]
        %v1677 = vld [vmem:[#allocation8 + $0x770] sm:$0xff]
        %v1678 = vld [vmem:[#allocation8 + $0x778] sm:$0xff]
        %v1679 = vld [vmem:[#allocation8 + $0x780] sm:$0xff]
        %v1680 = vld [vmem:[#allocation8 + $0x788] sm:$0xff]
        %v1681 = vld [vmem:[#allocation8 + $0x790] sm:$0xff]
        %v1682 = vld [vmem:[#allocation8 + $0x798] sm:$0xff]
        %v1683 = vld [vmem:[#allocation8 + $0x7a0] sm:$0xff]
        %v1684 = vld [vmem:[#allocation8 + $0x7a8] sm:$0xff]
        %v1685 = vld [vmem:[#allocation8 + $0x7b0] sm:$0xff]
        %v1686 = vld [vmem:[#allocation8 + $0x7b8] sm:$0xff]
        %v1687 = vld [vmem:[#allocation8 + $0x7c0] sm:$0xff]
        %v1688 = vld [vmem:[#allocation8 + $0x7c8] sm:$0xff]
        %v1689 = vld [vmem:[#allocation8 + $0x7d0] sm:$0xff]
        %v1690 = vld [vmem:[#allocation8 + $0x7d8] sm:$0xff]
        %v1691 = vld [vmem:[#allocation8 + $0x7e0] sm:$0xff]
        %v1692 = vld [vmem:[#allocation8 + $0x7e8] sm:$0xff]
        %v1693 = vld [vmem:[#allocation8 + $0x7f0] sm:$0xff]
        %v1694 = vld [vmem:[#allocation8 + $0x7f8] sm:$0xff]
        %v1951 = vunpack.c.l.b16 %v1439
        %v1952 = vunpack.c.h.b16 %v1439
        %v1953 = vunpack.c.l.b16 %v1440
        %v1954 = vunpack.c.h.b16 %v1440
        %v1955 = vunpack.c.l.b16 %v1441
        %v1956 = vunpack.c.h.b16 %v1441
        %v1957 = vunpack.c.l.b16 %v1442
        %v1958 = vunpack.c.h.b16 %v1442
        %v1959 = vunpack.c.l.b16 %v1443
        %v1960 = vunpack.c.h.b16 %v1443
        %v1961 = vunpack.c.l.b16 %v1444
        %v1962 = vunpack.c.h.b16 %v1444
        %v1963 = vunpack.c.l.b16 %v1445
        %v1964 = vunpack.c.h.b16 %v1445
        %v1965 = vunpack.c.l.b16 %v1446
        %v1966 = vunpack.c.h.b16 %v1446
        %v1967 = vunpack.c.l.b16 %v1447
        %v1968 = vunpack.c.h.b16 %v1447
        %v1969 = vunpack.c.l.b16 %v1448
        %v1970 = vunpack.c.h.b16 %v1448
        %v1971 = vunpack.c.l.b16 %v1449
        %v1972 = vunpack.c.h.b16 %v1449
        %v1973 = vunpack.c.l.b16 %v1450
        %v1974 = vunpack.c.h.b16 %v1450
        %v1975 = vunpack.c.l.b16 %v1451
        %v1976 = vunpack.c.h.b16 %v1451
        %v1977 = vunpack.c.l.b16 %v1452
        %v1978 = vunpack.c.h.b16 %v1452
        %v1979 = vunpack.c.l.b16 %v1453
        %v1980 = vunpack.c.h.b16 %v1453
        %v1981 = vunpack.c.l.b16 %v1454
        %v1982 = vunpack.c.h.b16 %v1454
        %v1983 = vunpack.c.l.b16 %v1455
        %v1984 = vunpack.c.h.b16 %v1455
        %v1985 = vunpack.c.l.b16 %v1456
        %v1986 = vunpack.c.h.b16 %v1456
        %v1987 = vunpack.c.l.b16 %v1457
        %v1988 = vunpack.c.h.b16 %v1457
        %v1989 = vunpack.c.l.b16 %v1458
        %v1990 = vunpack.c.h.b16 %v1458
        %v1991 = vunpack.c.l.b16 %v1459
        %v1992 = vunpack.c.h.b16 %v1459
        %v1993 = vunpack.c.l.b16 %v1460
        %v1994 = vunpack.c.h.b16 %v1460
        %v1995 = vunpack.c.l.b16 %v1461
        %v1996 = vunpack.c.h.b16 %v1461
        %v1997 = vunpack.c.l.b16 %v1462
        %v1998 = vunpack.c.h.b16 %v1462
        %v1999 = vunpack.c.l.b16 %v1463
        %v2000 = vunpack.c.h.b16 %v1463
        %v2001 = vunpack.c.l.b16 %v1464
        %v2002 = vunpack.c.h.b16 %v1464
        %v2003 = vunpack.c.l.b16 %v1465
        %v2004 = vunpack.c.h.b16 %v1465
        %v2005 = vunpack.c.l.b16 %v1466
        %v2006 = vunpack.c.h.b16 %v1466
        %v2007 = vunpack.c.l.b16 %v1467
        %v2008 = vunpack.c.h.b16 %v1467
        %v2009 = vunpack.c.l.b16 %v1468
        %v2010 = vunpack.c.h.b16 %v1468
        %v2011 = vunpack.c.l.b16 %v1469
        %v2012 = vunpack.c.h.b16 %v1469
        %v2013 = vunpack.c.l.b16 %v1470
        %v2014 = vunpack.c.h.b16 %v1470
        %v2015 = vunpack.c.l.b16 %v1471
        %v2016 = vunpack.c.h.b16 %v1471
        %v2017 = vunpack.c.l.b16 %v1472
        %v2018 = vunpack.c.h.b16 %v1472
        %v2019 = vunpack.c.l.b16 %v1473
        %v2020 = vunpack.c.h.b16 %v1473
        %v2021 = vunpack.c.l.b16 %v1474
        %v2022 = vunpack.c.h.b16 %v1474
        %v2023 = vunpack.c.l.b16 %v1475
        %v2024 = vunpack.c.h.b16 %v1475
        %v2025 = vunpack.c.l.b16 %v1476
        %v2026 = vunpack.c.h.b16 %v1476
        %v2027 = vunpack.c.l.b16 %v1477
        %v2028 = vunpack.c.h.b16 %v1477
        %v2029 = vunpack.c.l.b16 %v1478
        %v2030 = vunpack.c.h.b16 %v1478
        %v2031 = vunpack.c.l.b16 %v1479
        %v2032 = vunpack.c.h.b16 %v1479
        %v2033 = vunpack.c.l.b16 %v1480
        %v2034 = vunpack.c.h.b16 %v1480
        %v2035 = vunpack.c.l.b16 %v1481
        %v2036 = vunpack.c.h.b16 %v1481
        %v2037 = vunpack.c.l.b16 %v1482
        %v2038 = vunpack.c.h.b16 %v1482
        %v2039 = vunpack.c.l.b16 %v1483
        %v2040 = vunpack.c.h.b16 %v1483
        %v2041 = vunpack.c.l.b16 %v1484
        %v2042 = vunpack.c.h.b16 %v1484
        %v2043 = vunpack.c.l.b16 %v1485
        %v2044 = vunpack.c.h.b16 %v1485
        %v2045 = vunpack.c.l.b16 %v1486
        %v2046 = vunpack.c.h.b16 %v1486
        %v2047 = vunpack.c.l.b16 %v1487
        %v2048 = vunpack.c.h.b16 %v1487
        %v2049 = vunpack.c.l.b16 %v1488
        %v2050 = vunpack.c.h.b16 %v1488
        %v2051 = vunpack.c.l.b16 %v1489
        %v2052 = vunpack.c.h.b16 %v1489
        %v2053 = vunpack.c.l.b16 %v1490
        %v2054 = vunpack.c.h.b16 %v1490
        %v2055 = vunpack.c.l.b16 %v1491
        %v2056 = vunpack.c.h.b16 %v1491
        %v2057 = vunpack.c.l.b16 %v1492
        %v2058 = vunpack.c.h.b16 %v1492
        %v2059 = vunpack.c.l.b16 %v1493
        %v2060 = vunpack.c.h.b16 %v1493
        %v2061 = vunpack.c.l.b16 %v1494
        %v2062 = vunpack.c.h.b16 %v1494
        %v2063 = vunpack.c.l.b16 %v1495
        %v2064 = vunpack.c.h.b16 %v1495
        %v2065 = vunpack.c.l.b16 %v1496
        %v2066 = vunpack.c.h.b16 %v1496
        %v2067 = vunpack.c.l.b16 %v1497
        %v2068 = vunpack.c.h.b16 %v1497
        %v2069 = vunpack.c.l.b16 %v1498
        %v2070 = vunpack.c.h.b16 %v1498
        %v2071 = vunpack.c.l.b16 %v1499
        %v2072 = vunpack.c.h.b16 %v1499
        %v2073 = vunpack.c.l.b16 %v1500
        %v2074 = vunpack.c.h.b16 %v1500
        %v2075 = vunpack.c.l.b16 %v1501
        %v2076 = vunpack.c.h.b16 %v1501
        %v2077 = vunpack.c.l.b16 %v1502
        %v2078 = vunpack.c.h.b16 %v1502
        %v2079 = vunpack.c.l.b16 %v1503
        %v2080 = vunpack.c.h.b16 %v1503
        %v2081 = vunpack.c.l.b16 %v1504
        %v2082 = vunpack.c.h.b16 %v1504
        %v2083 = vunpack.c.l.b16 %v1505
        %v2084 = vunpack.c.h.b16 %v1505
        %v2085 = vunpack.c.l.b16 %v1506
        %v2086 = vunpack.c.h.b16 %v1506
        %v2087 = vunpack.c.l.b16 %v1507
        %v2088 = vunpack.c.h.b16 %v1507
        %v2089 = vunpack.c.l.b16 %v1508
        %v2090 = vunpack.c.h.b16 %v1508
        %v2091 = vunpack.c.l.b16 %v1509
        %v2092 = vunpack.c.h.b16 %v1509
        %v2093 = vunpack.c.l.b16 %v1510
        %v2094 = vunpack.c.h.b16 %v1510
        %v2095 = vunpack.c.l.b16 %v1511
        %v2096 = vunpack.c.h.b16 %v1511
        %v2097 = vunpack.c.l.b16 %v1512
        %v2098 = vunpack.c.h.b16 %v1512
        %v2099 = vunpack.c.l.b16 %v1513
        %v2100 = vunpack.c.h.b16 %v1513
        %v2101 = vunpack.c.l.b16 %v1514
        %v2102 = vunpack.c.h.b16 %v1514
        %v2103 = vunpack.c.l.b16 %v1515
        %v2104 = vunpack.c.h.b16 %v1515
        %v2105 = vunpack.c.l.b16 %v1516
        %v2106 = vunpack.c.h.b16 %v1516
        %v2107 = vunpack.c.l.b16 %v1517
        %v2108 = vunpack.c.h.b16 %v1517
        %v2109 = vunpack.c.l.b16 %v1518
        %v2110 = vunpack.c.h.b16 %v1518
        %v2111 = vunpack.c.l.b16 %v1519
        %v2112 = vunpack.c.h.b16 %v1519
        %v2113 = vunpack.c.l.b16 %v1520
        %v2114 = vunpack.c.h.b16 %v1520
        %v2115 = vunpack.c.l.b16 %v1521
        %v2116 = vunpack.c.h.b16 %v1521
        %v2117 = vunpack.c.l.b16 %v1522
        %v2118 = vunpack.c.h.b16 %v1522
        %v2119 = vunpack.c.l.b16 %v1523
        %v2120 = vunpack.c.h.b16 %v1523
        %v2121 = vunpack.c.l.b16 %v1524
        %v2122 = vunpack.c.h.b16 %v1524
        %v2123 = vunpack.c.l.b16 %v1525
        %v2124 = vunpack.c.h.b16 %v1525
        %v2125 = vunpack.c.l.b16 %v1526
        %v2126 = vunpack.c.h.b16 %v1526
        %v2127 = vunpack.c.l.b16 %v1527
        %v2128 = vunpack.c.h.b16 %v1527
        %v2129 = vunpack.c.l.b16 %v1528
        %v2130 = vunpack.c.h.b16 %v1528
        %v2131 = vunpack.c.l.b16 %v1529
        %v2132 = vunpack.c.h.b16 %v1529
        %v2133 = vunpack.c.l.b16 %v1530
        %v2134 = vunpack.c.h.b16 %v1530
        %v2135 = vunpack.c.l.b16 %v1531
        %v2136 = vunpack.c.h.b16 %v1531
        %v2137 = vunpack.c.l.b16 %v1532
        %v2138 = vunpack.c.h.b16 %v1532
        %v2139 = vunpack.c.l.b16 %v1533
        %v2140 = vunpack.c.h.b16 %v1533
        %v2141 = vunpack.c.l.b16 %v1534
        %v2142 = vunpack.c.h.b16 %v1534
        %v2143 = vunpack.c.l.b16 %v1535
        %v2144 = vunpack.c.h.b16 %v1535
        %v2145 = vunpack.c.l.b16 %v1536
        %v2146 = vunpack.c.h.b16 %v1536
        %v2147 = vunpack.c.l.b16 %v1537
        %v2148 = vunpack.c.h.b16 %v1537
        %v2149 = vunpack.c.l.b16 %v1538
        %v2150 = vunpack.c.h.b16 %v1538
        %v2151 = vunpack.c.l.b16 %v1539
        %v2152 = vunpack.c.h.b16 %v1539
        %v2153 = vunpack.c.l.b16 %v1540
        %v2154 = vunpack.c.h.b16 %v1540
        %v2155 = vunpack.c.l.b16 %v1541
        %v2156 = vunpack.c.h.b16 %v1541
        %v2157 = vunpack.c.l.b16 %v1542
        %v2158 = vunpack.c.h.b16 %v1542
        %v2159 = vunpack.c.l.b16 %v1543
        %v2160 = vunpack.c.h.b16 %v1543
        %v2161 = vunpack.c.l.b16 %v1544
        %v2162 = vunpack.c.h.b16 %v1544
        %v2163 = vunpack.c.l.b16 %v1545
        %v2164 = vunpack.c.h.b16 %v1545
        %v2165 = vunpack.c.l.b16 %v1546
        %v2166 = vunpack.c.h.b16 %v1546
        %v2167 = vunpack.c.l.b16 %v1547
        %v2168 = vunpack.c.h.b16 %v1547
        %v2169 = vunpack.c.l.b16 %v1548
        %v2170 = vunpack.c.h.b16 %v1548
        %v2171 = vunpack.c.l.b16 %v1549
        %v2172 = vunpack.c.h.b16 %v1549
        %v2173 = vunpack.c.l.b16 %v1550
        %v2174 = vunpack.c.h.b16 %v1550
        %v2175 = vunpack.c.l.b16 %v1551
        %v2176 = vunpack.c.h.b16 %v1551
        %v2177 = vunpack.c.l.b16 %v1552
        %v2178 = vunpack.c.h.b16 %v1552
        %v2179 = vunpack.c.l.b16 %v1553
        %v2180 = vunpack.c.h.b16 %v1553
        %v2181 = vunpack.c.l.b16 %v1554
        %v2182 = vunpack.c.h.b16 %v1554
        %v2183 = vunpack.c.l.b16 %v1555
        %v2184 = vunpack.c.h.b16 %v1555
        %v2185 = vunpack.c.l.b16 %v1556
        %v2186 = vunpack.c.h.b16 %v1556
        %v2187 = vunpack.c.l.b16 %v1557
        %v2188 = vunpack.c.h.b16 %v1557
        %v2189 = vunpack.c.l.b16 %v1558
        %v2190 = vunpack.c.h.b16 %v1558
        %v2191 = vunpack.c.l.b16 %v1559
        %v2192 = vunpack.c.h.b16 %v1559
        %v2193 = vunpack.c.l.b16 %v1560
        %v2194 = vunpack.c.h.b16 %v1560
        %v2195 = vunpack.c.l.b16 %v1561
        %v2196 = vunpack.c.h.b16 %v1561
        %v2197 = vunpack.c.l.b16 %v1562
        %v2198 = vunpack.c.h.b16 %v1562
        %v2199 = vunpack.c.l.b16 %v1563
        %v2200 = vunpack.c.h.b16 %v1563
        %v2201 = vunpack.c.l.b16 %v1564
        %v2202 = vunpack.c.h.b16 %v1564
        %v2203 = vunpack.c.l.b16 %v1565
        %v2204 = vunpack.c.h.b16 %v1565
        %v2205 = vunpack.c.l.b16 %v1566
        %v2206 = vunpack.c.h.b16 %v1566
        %v2207 = vunpack.c.l.b16 %v1567
        %v2208 = vunpack.c.h.b16 %v1567
        %v2209 = vunpack.c.l.b16 %v1568
        %v2210 = vunpack.c.h.b16 %v1568
        %v2211 = vunpack.c.l.b16 %v1569
        %v2212 = vunpack.c.h.b16 %v1569
        %v2213 = vunpack.c.l.b16 %v1570
        %v2214 = vunpack.c.h.b16 %v1570
        %v2215 = vunpack.c.l.b16 %v1571
        %v2216 = vunpack.c.h.b16 %v1571
        %v2217 = vunpack.c.l.b16 %v1572
        %v2218 = vunpack.c.h.b16 %v1572
        %v2219 = vunpack.c.l.b16 %v1573
        %v2220 = vunpack.c.h.b16 %v1573
        %v2221 = vunpack.c.l.b16 %v1574
        %v2222 = vunpack.c.h.b16 %v1574
        %v2223 = vunpack.c.l.b16 %v1575
        %v2224 = vunpack.c.h.b16 %v1575
        %v2225 = vunpack.c.l.b16 %v1576
        %v2226 = vunpack.c.h.b16 %v1576
        %v2227 = vunpack.c.l.b16 %v1577
        %v2228 = vunpack.c.h.b16 %v1577
        %v2229 = vunpack.c.l.b16 %v1578
        %v2230 = vunpack.c.h.b16 %v1578
        %v2231 = vunpack.c.l.b16 %v1579
        %v2232 = vunpack.c.h.b16 %v1579
        %v2233 = vunpack.c.l.b16 %v1580
        %v2234 = vunpack.c.h.b16 %v1580
        %v2235 = vunpack.c.l.b16 %v1581
        %v2236 = vunpack.c.h.b16 %v1581
        %v2237 = vunpack.c.l.b16 %v1582
        %v2238 = vunpack.c.h.b16 %v1582
        %v2239 = vunpack.c.l.b16 %v1583
        %v2240 = vunpack.c.h.b16 %v1583
        %v2241 = vunpack.c.l.b16 %v1584
        %v2242 = vunpack.c.h.b16 %v1584
        %v2243 = vunpack.c.l.b16 %v1585
        %v2244 = vunpack.c.h.b16 %v1585
        %v2245 = vunpack.c.l.b16 %v1586
        %v2246 = vunpack.c.h.b16 %v1586
        %v2247 = vunpack.c.l.b16 %v1587
        %v2248 = vunpack.c.h.b16 %v1587
        %v2249 = vunpack.c.l.b16 %v1588
        %v2250 = vunpack.c.h.b16 %v1588
        %v2251 = vunpack.c.l.b16 %v1589
        %v2252 = vunpack.c.h.b16 %v1589
        %v2253 = vunpack.c.l.b16 %v1590
        %v2254 = vunpack.c.h.b16 %v1590
        %v2255 = vunpack.c.l.b16 %v1591
        %v2256 = vunpack.c.h.b16 %v1591
        %v2257 = vunpack.c.l.b16 %v1592
        %v2258 = vunpack.c.h.b16 %v1592
        %v2259 = vunpack.c.l.b16 %v1593
        %v2260 = vunpack.c.h.b16 %v1593
        %v2261 = vunpack.c.l.b16 %v1594
        %v2262 = vunpack.c.h.b16 %v1594
        %v2263 = vunpack.c.l.b16 %v1595
        %v2264 = vunpack.c.h.b16 %v1595
        %v2265 = vunpack.c.l.b16 %v1596
        %v2266 = vunpack.c.h.b16 %v1596
        %v2267 = vunpack.c.l.b16 %v1597
        %v2268 = vunpack.c.h.b16 %v1597
        %v2269 = vunpack.c.l.b16 %v1598
        %v2270 = vunpack.c.h.b16 %v1598
        %v2271 = vunpack.c.l.b16 %v1599
        %v2272 = vunpack.c.h.b16 %v1599
        %v2273 = vunpack.c.l.b16 %v1600
        %v2274 = vunpack.c.h.b16 %v1600
        %v2275 = vunpack.c.l.b16 %v1601
        %v2276 = vunpack.c.h.b16 %v1601
        %v2277 = vunpack.c.l.b16 %v1602
        %v2278 = vunpack.c.h.b16 %v1602
        %v2279 = vunpack.c.l.b16 %v1603
        %v2280 = vunpack.c.h.b16 %v1603
        %v2281 = vunpack.c.l.b16 %v1604
        %v2282 = vunpack.c.h.b16 %v1604
        %v2283 = vunpack.c.l.b16 %v1605
        %v2284 = vunpack.c.h.b16 %v1605
        %v2285 = vunpack.c.l.b16 %v1606
        %v2286 = vunpack.c.h.b16 %v1606
        %v2287 = vunpack.c.l.b16 %v1607
        %v2288 = vunpack.c.h.b16 %v1607
        %v2289 = vunpack.c.l.b16 %v1608
        %v2290 = vunpack.c.h.b16 %v1608
        %v2291 = vunpack.c.l.b16 %v1609
        %v2292 = vunpack.c.h.b16 %v1609
        %v2293 = vunpack.c.l.b16 %v1610
        %v2294 = vunpack.c.h.b16 %v1610
        %v2295 = vunpack.c.l.b16 %v1611
        %v2296 = vunpack.c.h.b16 %v1611
        %v2297 = vunpack.c.l.b16 %v1612
        %v2298 = vunpack.c.h.b16 %v1612
        %v2299 = vunpack.c.l.b16 %v1613
        %v2300 = vunpack.c.h.b16 %v1613
        %v2301 = vunpack.c.l.b16 %v1614
        %v2302 = vunpack.c.h.b16 %v1614
        %v2303 = vunpack.c.l.b16 %v1615
        %v2304 = vunpack.c.h.b16 %v1615
        %v2305 = vunpack.c.l.b16 %v1616
        %v2306 = vunpack.c.h.b16 %v1616
        %v2307 = vunpack.c.l.b16 %v1617
        %v2308 = vunpack.c.h.b16 %v1617
        %v2309 = vunpack.c.l.b16 %v1618
        %v2310 = vunpack.c.h.b16 %v1618
        %v2311 = vunpack.c.l.b16 %v1619
        %v2312 = vunpack.c.h.b16 %v1619
        %v2313 = vunpack.c.l.b16 %v1620
        %v2314 = vunpack.c.h.b16 %v1620
        %v2315 = vunpack.c.l.b16 %v1621
        %v2316 = vunpack.c.h.b16 %v1621
        %v2317 = vunpack.c.l.b16 %v1622
        %v2318 = vunpack.c.h.b16 %v1622
        %v2319 = vunpack.c.l.b16 %v1623
        %v2320 = vunpack.c.h.b16 %v1623
        %v2321 = vunpack.c.l.b16 %v1624
        %v2322 = vunpack.c.h.b16 %v1624
        %v2323 = vunpack.c.l.b16 %v1625
        %v2324 = vunpack.c.h.b16 %v1625
        %v2325 = vunpack.c.l.b16 %v1626
        %v2326 = vunpack.c.h.b16 %v1626
        %v2327 = vunpack.c.l.b16 %v1627
        %v2328 = vunpack.c.h.b16 %v1627
        %v2329 = vunpack.c.l.b16 %v1628
        %v2330 = vunpack.c.h.b16 %v1628
        %v2331 = vunpack.c.l.b16 %v1629
        %v2332 = vunpack.c.h.b16 %v1629
        %v2333 = vunpack.c.l.b16 %v1630
        %v2334 = vunpack.c.h.b16 %v1630
        %v2335 = vunpack.c.l.b16 %v1631
        %v2336 = vunpack.c.h.b16 %v1631
        %v2337 = vunpack.c.l.b16 %v1632
        %v2338 = vunpack.c.h.b16 %v1632
        %v2339 = vunpack.c.l.b16 %v1633
        %v2340 = vunpack.c.h.b16 %v1633
        %v2341 = vunpack.c.l.b16 %v1634
        %v2342 = vunpack.c.h.b16 %v1634
        %v2343 = vunpack.c.l.b16 %v1635
        %v2344 = vunpack.c.h.b16 %v1635
        %v2345 = vunpack.c.l.b16 %v1636
        %v2346 = vunpack.c.h.b16 %v1636
        %v2347 = vunpack.c.l.b16 %v1637
        %v2348 = vunpack.c.h.b16 %v1637
        %v2349 = vunpack.c.l.b16 %v1638
        %v2350 = vunpack.c.h.b16 %v1638
        %v2351 = vunpack.c.l.b16 %v1639
        %v2352 = vunpack.c.h.b16 %v1639
        %v2353 = vunpack.c.l.b16 %v1640
        %v2354 = vunpack.c.h.b16 %v1640
        %v2355 = vunpack.c.l.b16 %v1641
        %v2356 = vunpack.c.h.b16 %v1641
        %v2357 = vunpack.c.l.b16 %v1642
        %v2358 = vunpack.c.h.b16 %v1642
        %v2359 = vunpack.c.l.b16 %v1643
        %v2360 = vunpack.c.h.b16 %v1643
        %v2361 = vunpack.c.l.b16 %v1644
        %v2362 = vunpack.c.h.b16 %v1644
        %v2363 = vunpack.c.l.b16 %v1645
        %v2364 = vunpack.c.h.b16 %v1645
        %v2365 = vunpack.c.l.b16 %v1646
        %v2366 = vunpack.c.h.b16 %v1646
        %v2367 = vunpack.c.l.b16 %v1647
        %v2368 = vunpack.c.h.b16 %v1647
        %v2369 = vunpack.c.l.b16 %v1648
        %v2370 = vunpack.c.h.b16 %v1648
        %v2371 = vunpack.c.l.b16 %v1649
        %v2372 = vunpack.c.h.b16 %v1649
        %v2373 = vunpack.c.l.b16 %v1650
        %v2374 = vunpack.c.h.b16 %v1650
        %v2375 = vunpack.c.l.b16 %v1651
        %v2376 = vunpack.c.h.b16 %v1651
        %v2377 = vunpack.c.l.b16 %v1652
        %v2378 = vunpack.c.h.b16 %v1652
        %v2379 = vunpack.c.l.b16 %v1653
        %v2380 = vunpack.c.h.b16 %v1653
        %v2381 = vunpack.c.l.b16 %v1654
        %v2382 = vunpack.c.h.b16 %v1654
        %v2383 = vunpack.c.l.b16 %v1655
        %v2384 = vunpack.c.h.b16 %v1655
        %v2385 = vunpack.c.l.b16 %v1656
        %v2386 = vunpack.c.h.b16 %v1656
        %v2387 = vunpack.c.l.b16 %v1657
        %v2388 = vunpack.c.h.b16 %v1657
        %v2389 = vunpack.c.l.b16 %v1658
        %v2390 = vunpack.c.h.b16 %v1658
        %v2391 = vunpack.c.l.b16 %v1659
        %v2392 = vunpack.c.h.b16 %v1659
        %v2393 = vunpack.c.l.b16 %v1660
        %v2394 = vunpack.c.h.b16 %v1660
        %v2395 = vunpack.c.l.b16 %v1661
        %v2396 = vunpack.c.h.b16 %v1661
        %v2397 = vunpack.c.l.b16 %v1662
        %v2398 = vunpack.c.h.b16 %v1662
        %v2399 = vunpack.c.l.b16 %v1663
        %v2400 = vunpack.c.h.b16 %v1663
        %v2401 = vunpack.c.l.b16 %v1664
        %v2402 = vunpack.c.h.b16 %v1664
        %v2403 = vunpack.c.l.b16 %v1665
        %v2404 = vunpack.c.h.b16 %v1665
        %v2405 = vunpack.c.l.b16 %v1666
        %v2406 = vunpack.c.h.b16 %v1666
        %v2407 = vunpack.c.l.b16 %v1667
        %v2408 = vunpack.c.h.b16 %v1667
        %v2409 = vunpack.c.l.b16 %v1668
        %v2410 = vunpack.c.h.b16 %v1668
        %v2411 = vunpack.c.l.b16 %v1669
        %v2412 = vunpack.c.h.b16 %v1669
        %v2413 = vunpack.c.l.b16 %v1670
        %v2414 = vunpack.c.h.b16 %v1670
        %v2415 = vunpack.c.l.b16 %v1671
        %v2416 = vunpack.c.h.b16 %v1671
        %v2417 = vunpack.c.l.b16 %v1672
        %v2418 = vunpack.c.h.b16 %v1672
        %v2419 = vunpack.c.l.b16 %v1673
        %v2420 = vunpack.c.h.b16 %v1673
        %v2421 = vunpack.c.l.b16 %v1674
        %v2422 = vunpack.c.h.b16 %v1674
        %v2423 = vunpack.c.l.b16 %v1675
        %v2424 = vunpack.c.h.b16 %v1675
        %v2425 = vunpack.c.l.b16 %v1676
        %v2426 = vunpack.c.h.b16 %v1676
        %v2427 = vunpack.c.l.b16 %v1677
        %v2428 = vunpack.c.h.b16 %v1677
        %v2429 = vunpack.c.l.b16 %v1678
        %v2430 = vunpack.c.h.b16 %v1678
        %v2431 = vunpack.c.l.b16 %v1679
        %v2432 = vunpack.c.h.b16 %v1679
        %v2433 = vunpack.c.l.b16 %v1680
        %v2434 = vunpack.c.h.b16 %v1680
        %v2435 = vunpack.c.l.b16 %v1681
        %v2436 = vunpack.c.h.b16 %v1681
        %v2437 = vunpack.c.l.b16 %v1682
        %v2438 = vunpack.c.h.b16 %v1682
        %v2439 = vunpack.c.l.b16 %v1683
        %v2440 = vunpack.c.h.b16 %v1683
        %v2441 = vunpack.c.l.b16 %v1684
        %v2442 = vunpack.c.h.b16 %v1684
        %v2443 = vunpack.c.l.b16 %v1685
        %v2444 = vunpack.c.h.b16 %v1685
        %v2445 = vunpack.c.l.b16 %v1686
        %v2446 = vunpack.c.h.b16 %v1686
        %v2447 = vunpack.c.l.b16 %v1687
        %v2448 = vunpack.c.h.b16 %v1687
        %v2449 = vunpack.c.l.b16 %v1688
        %v2450 = vunpack.c.h.b16 %v1688
        %v2451 = vunpack.c.l.b16 %v1689
        %v2452 = vunpack.c.h.b16 %v1689
        %v2453 = vunpack.c.l.b16 %v1690
        %v2454 = vunpack.c.h.b16 %v1690
        %v2455 = vunpack.c.l.b16 %v1691
        %v2456 = vunpack.c.h.b16 %v1691
        %v2457 = vunpack.c.l.b16 %v1692
        %v2458 = vunpack.c.h.b16 %v1692
        %v2459 = vunpack.c.l.b16 %v1693
        %v2460 = vunpack.c.h.b16 %v1693
        %v2461 = vunpack.c.l.b16 %v1694
        %v2462 = vunpack.c.h.b16 %v1694
        %v2463 = vpack.c.b16 %v1959, %v1951
        %v2464 = vpack.c.b16 %v1960, %v1952
        %v2465 = vpack.c.b16 %v1961, %v1953
        %v2466 = vpack.c.b16 %v1962, %v1954
        %v2467 = vpack.c.b16 %v1963, %v1955
        %v2468 = vpack.c.b16 %v1964, %v1956
        %v2469 = vpack.c.b16 %v1965, %v1957
        %v2470 = vpack.c.b16 %v1966, %v1958
        %v2471 = vpack.c.b16 %v1975, %v1967
        %v2472 = vpack.c.b16 %v1976, %v1968
        %v2473 = vpack.c.b16 %v1977, %v1969
        %v2474 = vpack.c.b16 %v1978, %v1970
        %v2475 = vpack.c.b16 %v1979, %v1971
        %v2476 = vpack.c.b16 %v1980, %v1972
        %v2477 = vpack.c.b16 %v1981, %v1973
        %v2478 = vpack.c.b16 %v1982, %v1974
        %v2479 = vpack.c.b16 %v1991, %v1983
        %v2480 = vpack.c.b16 %v1992, %v1984
        %v2481 = vpack.c.b16 %v1993, %v1985
        %v2482 = vpack.c.b16 %v1994, %v1986
        %v2483 = vpack.c.b16 %v1995, %v1987
        %v2484 = vpack.c.b16 %v1996, %v1988
        %v2485 = vpack.c.b16 %v1997, %v1989
        %v2486 = vpack.c.b16 %v1998, %v1990
        %v2487 = vpack.c.b16 %v2007, %v1999
        %v2488 = vpack.c.b16 %v2008, %v2000
        %v2489 = vpack.c.b16 %v2009, %v2001
        %v2490 = vpack.c.b16 %v2010, %v2002
        %v2491 = vpack.c.b16 %v2011, %v2003
        %v2492 = vpack.c.b16 %v2012, %v2004
        %v2493 = vpack.c.b16 %v2013, %v2005
        %v2494 = vpack.c.b16 %v2014, %v2006
        %v2495 = vpack.c.b16 %v2023, %v2015
        %v2496 = vpack.c.b16 %v2024, %v2016
        %v2497 = vpack.c.b16 %v2025, %v2017
        %v2498 = vpack.c.b16 %v2026, %v2018
        %v2499 = vpack.c.b16 %v2027, %v2019
        %v2500 = vpack.c.b16 %v2028, %v2020
        %v2501 = vpack.c.b16 %v2029, %v2021
        %v2502 = vpack.c.b16 %v2030, %v2022
        %v2503 = vpack.c.b16 %v2039, %v2031
        %v2504 = vpack.c.b16 %v2040, %v2032
        %v2505 = vpack.c.b16 %v2041, %v2033
        %v2506 = vpack.c.b16 %v2042, %v2034
        %v2507 = vpack.c.b16 %v2043, %v2035
        %v2508 = vpack.c.b16 %v2044, %v2036
        %v2509 = vpack.c.b16 %v2045, %v2037
        %v2510 = vpack.c.b16 %v2046, %v2038
        %v2511 = vpack.c.b16 %v2055, %v2047
        %v2512 = vpack.c.b16 %v2056, %v2048
        %v2513 = vpack.c.b16 %v2057, %v2049
        %v2514 = vpack.c.b16 %v2058, %v2050
        %v2515 = vpack.c.b16 %v2059, %v2051
        %v2516 = vpack.c.b16 %v2060, %v2052
        %v2517 = vpack.c.b16 %v2061, %v2053
        %v2518 = vpack.c.b16 %v2062, %v2054
        %v2519 = vpack.c.b16 %v2071, %v2063
        %v2520 = vpack.c.b16 %v2072, %v2064
        %v2521 = vpack.c.b16 %v2073, %v2065
        %v2522 = vpack.c.b16 %v2074, %v2066
        %v2523 = vpack.c.b16 %v2075, %v2067
        %v2524 = vpack.c.b16 %v2076, %v2068
        %v2525 = vpack.c.b16 %v2077, %v2069
        %v2526 = vpack.c.b16 %v2078, %v2070
        %v2527 = vpack.c.b16 %v2087, %v2079
        %v2528 = vpack.c.b16 %v2088, %v2080
        %v2529 = vpack.c.b16 %v2089, %v2081
        %v2530 = vpack.c.b16 %v2090, %v2082
        %v2531 = vpack.c.b16 %v2091, %v2083
        %v2532 = vpack.c.b16 %v2092, %v2084
        %v2533 = vpack.c.b16 %v2093, %v2085
        %v2534 = vpack.c.b16 %v2094, %v2086
        %v2535 = vpack.c.b16 %v2103, %v2095
        %v2536 = vpack.c.b16 %v2104, %v2096
        %v2537 = vpack.c.b16 %v2105, %v2097
        %v2538 = vpack.c.b16 %v2106, %v2098
        %v2539 = vpack.c.b16 %v2107, %v2099
        %v2540 = vpack.c.b16 %v2108, %v2100
        %v2541 = vpack.c.b16 %v2109, %v2101
        %v2542 = vpack.c.b16 %v2110, %v2102
        %v2543 = vpack.c.b16 %v2119, %v2111
        %v2544 = vpack.c.b16 %v2120, %v2112
        %v2545 = vpack.c.b16 %v2121, %v2113
        %v2546 = vpack.c.b16 %v2122, %v2114
        %v2547 = vpack.c.b16 %v2123, %v2115
        %v2548 = vpack.c.b16 %v2124, %v2116
        %v2549 = vpack.c.b16 %v2125, %v2117
        %v2550 = vpack.c.b16 %v2126, %v2118
        %v2551 = vpack.c.b16 %v2135, %v2127
        %v2552 = vpack.c.b16 %v2136, %v2128
        %v2553 = vpack.c.b16 %v2137, %v2129
        %v2554 = vpack.c.b16 %v2138, %v2130
        %v2555 = vpack.c.b16 %v2139, %v2131
        %v2556 = vpack.c.b16 %v2140, %v2132
        %v2557 = vpack.c.b16 %v2141, %v2133
        %v2558 = vpack.c.b16 %v2142, %v2134
        %v2559 = vpack.c.b16 %v2151, %v2143
        %v2560 = vpack.c.b16 %v2152, %v2144
        %v2561 = vpack.c.b16 %v2153, %v2145
        %v2562 = vpack.c.b16 %v2154, %v2146
        %v2563 = vpack.c.b16 %v2155, %v2147
        %v2564 = vpack.c.b16 %v2156, %v2148
        %v2565 = vpack.c.b16 %v2157, %v2149
        %v2566 = vpack.c.b16 %v2158, %v2150
        %v2567 = vpack.c.b16 %v2167, %v2159
        %v2568 = vpack.c.b16 %v2168, %v2160
        %v2569 = vpack.c.b16 %v2169, %v2161
        %v2570 = vpack.c.b16 %v2170, %v2162
        %v2571 = vpack.c.b16 %v2171, %v2163
        %v2572 = vpack.c.b16 %v2172, %v2164
        %v2573 = vpack.c.b16 %v2173, %v2165
        %v2574 = vpack.c.b16 %v2174, %v2166
        %v2575 = vpack.c.b16 %v2183, %v2175
        %v2576 = vpack.c.b16 %v2184, %v2176
        %v2577 = vpack.c.b16 %v2185, %v2177
        %v2578 = vpack.c.b16 %v2186, %v2178
        %v2579 = vpack.c.b16 %v2187, %v2179
        %v2580 = vpack.c.b16 %v2188, %v2180
        %v2581 = vpack.c.b16 %v2189, %v2181
        %v2582 = vpack.c.b16 %v2190, %v2182
        %v2583 = vpack.c.b16 %v2199, %v2191
        %v2584 = vpack.c.b16 %v2200, %v2192
        %v2585 = vpack.c.b16 %v2201, %v2193
        %v2586 = vpack.c.b16 %v2202, %v2194
        %v2587 = vpack.c.b16 %v2203, %v2195
        %v2588 = vpack.c.b16 %v2204, %v2196
        %v2589 = vpack.c.b16 %v2205, %v2197
        %v2590 = vpack.c.b16 %v2206, %v2198
        %v2591 = vpack.c.b16 %v2215, %v2207
        %v2592 = vpack.c.b16 %v2216, %v2208
        %v2593 = vpack.c.b16 %v2217, %v2209
        %v2594 = vpack.c.b16 %v2218, %v2210
        %v2595 = vpack.c.b16 %v2219, %v2211
        %v2596 = vpack.c.b16 %v2220, %v2212
        %v2597 = vpack.c.b16 %v2221, %v2213
        %v2598 = vpack.c.b16 %v2222, %v2214
        %v2599 = vpack.c.b16 %v2231, %v2223
        %v2600 = vpack.c.b16 %v2232, %v2224
        %v2601 = vpack.c.b16 %v2233, %v2225
        %v2602 = vpack.c.b16 %v2234, %v2226
        %v2603 = vpack.c.b16 %v2235, %v2227
        %v2604 = vpack.c.b16 %v2236, %v2228
        %v2605 = vpack.c.b16 %v2237, %v2229
        %v2606 = vpack.c.b16 %v2238, %v2230
        %v2607 = vpack.c.b16 %v2247, %v2239
        %v2608 = vpack.c.b16 %v2248, %v2240
        %v2609 = vpack.c.b16 %v2249, %v2241
        %v2610 = vpack.c.b16 %v2250, %v2242
        %v2611 = vpack.c.b16 %v2251, %v2243
        %v2612 = vpack.c.b16 %v2252, %v2244
        %v2613 = vpack.c.b16 %v2253, %v2245
        %v2614 = vpack.c.b16 %v2254, %v2246
        %v2615 = vpack.c.b16 %v2263, %v2255
        %v2616 = vpack.c.b16 %v2264, %v2256
        %v2617 = vpack.c.b16 %v2265, %v2257
        %v2618 = vpack.c.b16 %v2266, %v2258
        %v2619 = vpack.c.b16 %v2267, %v2259
        %v2620 = vpack.c.b16 %v2268, %v2260
        %v2621 = vpack.c.b16 %v2269, %v2261
        %v2622 = vpack.c.b16 %v2270, %v2262
        %v2623 = vpack.c.b16 %v2279, %v2271
        %v2624 = vpack.c.b16 %v2280, %v2272
        %v2625 = vpack.c.b16 %v2281, %v2273
        %v2626 = vpack.c.b16 %v2282, %v2274
        %v2627 = vpack.c.b16 %v2283, %v2275
        %v2628 = vpack.c.b16 %v2284, %v2276
        %v2629 = vpack.c.b16 %v2285, %v2277
        %v2630 = vpack.c.b16 %v2286, %v2278
        %v2631 = vpack.c.b16 %v2295, %v2287
        %v2632 = vpack.c.b16 %v2296, %v2288
        %v2633 = vpack.c.b16 %v2297, %v2289
        %v2634 = vpack.c.b16 %v2298, %v2290
        %v2635 = vpack.c.b16 %v2299, %v2291
        %v2636 = vpack.c.b16 %v2300, %v2292
        %v2637 = vpack.c.b16 %v2301, %v2293
        %v2638 = vpack.c.b16 %v2302, %v2294
        %v2639 = vpack.c.b16 %v2311, %v2303
        %v2640 = vpack.c.b16 %v2312, %v2304
        %v2641 = vpack.c.b16 %v2313, %v2305
        %v2642 = vpack.c.b16 %v2314, %v2306
        %v2643 = vpack.c.b16 %v2315, %v2307
        %v2644 = vpack.c.b16 %v2316, %v2308
        %v2645 = vpack.c.b16 %v2317, %v2309
        %v2646 = vpack.c.b16 %v2318, %v2310
        %v2647 = vpack.c.b16 %v2327, %v2319
        %v2648 = vpack.c.b16 %v2328, %v2320
        %v2649 = vpack.c.b16 %v2329, %v2321
        %v2650 = vpack.c.b16 %v2330, %v2322
        %v2651 = vpack.c.b16 %v2331, %v2323
        %v2652 = vpack.c.b16 %v2332, %v2324
        %v2653 = vpack.c.b16 %v2333, %v2325
        %v2654 = vpack.c.b16 %v2334, %v2326
        %v2655 = vpack.c.b16 %v2343, %v2335
        %v2656 = vpack.c.b16 %v2344, %v2336
        %v2657 = vpack.c.b16 %v2345, %v2337
        %v2658 = vpack.c.b16 %v2346, %v2338
        %v2659 = vpack.c.b16 %v2347, %v2339
        %v2660 = vpack.c.b16 %v2348, %v2340
        %v2661 = vpack.c.b16 %v2349, %v2341
        %v2662 = vpack.c.b16 %v2350, %v2342
        %v2663 = vpack.c.b16 %v2359, %v2351
        %v2664 = vpack.c.b16 %v2360, %v2352
        %v2665 = vpack.c.b16 %v2361, %v2353
        %v2666 = vpack.c.b16 %v2362, %v2354
        %v2667 = vpack.c.b16 %v2363, %v2355
        %v2668 = vpack.c.b16 %v2364, %v2356
        %v2669 = vpack.c.b16 %v2365, %v2357
        %v2670 = vpack.c.b16 %v2366, %v2358
        %v2671 = vpack.c.b16 %v2375, %v2367
        %v2672 = vpack.c.b16 %v2376, %v2368
        %v2673 = vpack.c.b16 %v2377, %v2369
        %v2674 = vpack.c.b16 %v2378, %v2370
        %v2675 = vpack.c.b16 %v2379, %v2371
        %v2676 = vpack.c.b16 %v2380, %v2372
        %v2677 = vpack.c.b16 %v2381, %v2373
        %v2678 = vpack.c.b16 %v2382, %v2374
        %v2679 = vpack.c.b16 %v2391, %v2383
        %v2680 = vpack.c.b16 %v2392, %v2384
        %v2681 = vpack.c.b16 %v2393, %v2385
        %v2682 = vpack.c.b16 %v2394, %v2386
        %v2683 = vpack.c.b16 %v2395, %v2387
        %v2684 = vpack.c.b16 %v2396, %v2388
        %v2685 = vpack.c.b16 %v2397, %v2389
        %v2686 = vpack.c.b16 %v2398, %v2390
        %v2687 = vpack.c.b16 %v2407, %v2399
        %v2688 = vpack.c.b16 %v2408, %v2400
        %v2689 = vpack.c.b16 %v2409, %v2401
        %v2690 = vpack.c.b16 %v2410, %v2402
        %v2691 = vpack.c.b16 %v2411, %v2403
        %v2692 = vpack.c.b16 %v2412, %v2404
        %v2693 = vpack.c.b16 %v2413, %v2405
        %v2694 = vpack.c.b16 %v2414, %v2406
        %v2695 = vpack.c.b16 %v2423, %v2415
        %v2696 = vpack.c.b16 %v2424, %v2416
        %v2697 = vpack.c.b16 %v2425, %v2417
        %v2698 = vpack.c.b16 %v2426, %v2418
        %v2699 = vpack.c.b16 %v2427, %v2419
        %v2700 = vpack.c.b16 %v2428, %v2420
        %v2701 = vpack.c.b16 %v2429, %v2421
        %v2702 = vpack.c.b16 %v2430, %v2422
        %v2703 = vpack.c.b16 %v2439, %v2431
        %v2704 = vpack.c.b16 %v2440, %v2432
        %v2705 = vpack.c.b16 %v2441, %v2433
        %v2706 = vpack.c.b16 %v2442, %v2434
        %v2707 = vpack.c.b16 %v2443, %v2435
        %v2708 = vpack.c.b16 %v2444, %v2436
        %v2709 = vpack.c.b16 %v2445, %v2437
        %v2710 = vpack.c.b16 %v2446, %v2438
        %v2711 = vpack.c.b16 %v2455, %v2447
        %v2712 = vpack.c.b16 %v2456, %v2448
        %v2713 = vpack.c.b16 %v2457, %v2449
        %v2714 = vpack.c.b16 %v2458, %v2450
        %v2715 = vpack.c.b16 %v2459, %v2451
        %v2716 = vpack.c.b16 %v2460, %v2452
        %v2717 = vpack.c.b16 %v2461, %v2453
        %v2718 = vpack.c.b16 %v2462, %v2454
        %2975 = vmatpush.bf16.msra.mxu0 %v2519
        %2976 = vmatpush.bf16.msra.mxu0 %v2511
        %2977 = vmatpush.bf16.msra.mxu0 %v2503
        %2978 = vmatpush.bf16.msra.mxu0 %v2495
        %2979 = vmatpush.bf16.msra.mxu0 %v2487
        %2980 = vmatpush.bf16.msra.mxu0 %v2479
        %2981 = vmatpush.bf16.msra.mxu0 %v2471
        %2982 = vmatpush.bf16.msra.mxu0 %v2463
        %2983 = vmatmul.bf16.gmra.mxu0 %v1435
        %v2984 = vpop.f32.mrf.mxu0
        %v2985 = vadd.f32 0.0, %v2984
        %v2986 = vpop.f32.mrf.mxu0
        %2987 = vdwg.mxu0
        %2988 = vmatpush.bf16.msra.mxu0 %v2583
        %2989 = vmatpush.bf16.msra.mxu0 %v2575
        %2990 = vmatpush.bf16.msra.mxu0 %v2567
        %2991 = vmatpush.bf16.msra.mxu0 %v2559
        %2992 = vmatpush.bf16.msra.mxu0 %v2551
        %2993 = vmatpush.bf16.msra.mxu0 %v2543
        %2994 = vmatpush.bf16.msra.mxu0 %v2535
        %2995 = vmatpush.bf16.msra.mxu0 %v2527
        %2996 = vmatmul.bf16.gmra.mxu0 %v1436
        %v2997 = vpop.f32.mrf.mxu0
        %v2998 = vadd.f32 %v2985, %v2997
        %v2999 = vpop.f32.mrf.mxu0
        %3000 = vdwg.mxu0
        %3001 = vmatpush.bf16.msra.mxu0 %v2647
        %3002 = vmatpush.bf16.msra.mxu0 %v2639
        %3003 = vmatpush.bf16.msra.mxu0 %v2631
        %3004 = vmatpush.bf16.msra.mxu0 %v2623
        %3005 = vmatpush.bf16.msra.mxu0 %v2615
        %3006 = vmatpush.bf16.msra.mxu0 %v2607
        %3007 = vmatpush.bf16.msra.mxu0 %v2599
        %3008 = vmatpush.bf16.msra.mxu0 %v2591
        %3009 = vmatmul.bf16.gmra.mxu0 %v1437
        %v3010 = vpop.f32.mrf.mxu0
        %v3011 = vadd.f32 %v2998, %v3010
        %v3012 = vpop.f32.mrf.mxu0
        %3013 = vdwg.mxu0
        %3014 = vmatpush.bf16.msra.mxu0 %v2711
        %3015 = vmatpush.bf16.msra.mxu0 %v2703
        %3016 = vmatpush.bf16.msra.mxu0 %v2695
        %3017 = vmatpush.bf16.msra.mxu0 %v2687
        %3018 = vmatpush.bf16.msra.mxu0 %v2679
        %3019 = vmatpush.bf16.msra.mxu0 %v2671
        %3020 = vmatpush.bf16.msra.mxu0 %v2663
        %3021 = vmatpush.bf16.msra.mxu0 %v2655
        %3022 = vmatmul.bf16.gmra.mxu0 %v1438
        %v3023 = vpop.f32.mrf.mxu0
        %v3024 = vadd.f32 %v3011, %v3023
        %v3025 = vpop.f32.mrf.mxu0
        %3026 = vdwg.mxu0
        %3027 = vmatpush.bf16.msra.mxu0 %v2520
        %3028 = vmatpush.bf16.msra.mxu0 %v2512
        %3029 = vmatpush.bf16.msra.mxu0 %v2504
        %3030 = vmatpush.bf16.msra.mxu0 %v2496
        %3031 = vmatpush.bf16.msra.mxu0 %v2488
        %3032 = vmatpush.bf16.msra.mxu0 %v2480
        %3033 = vmatpush.bf16.msra.mxu0 %v2472
        %3034 = vmatpush.bf16.msra.mxu0 %v2464
        %3035 = vmatmul.bf16.gmra.mxu0 %v1435
        %v3036 = vpop.f32.mrf.mxu0
        %v3037 = vadd.f32 0.0, %v3036
        %v3038 = vpop.f32.mrf.mxu0
        %3039 = vdwg.mxu0
        %3040 = vmatpush.bf16.msra.mxu0 %v2584
        %3041 = vmatpush.bf16.msra.mxu0 %v2576
        %3042 = vmatpush.bf16.msra.mxu0 %v2568
        %3043 = vmatpush.bf16.msra.mxu0 %v2560
        %3044 = vmatpush.bf16.msra.mxu0 %v2552
        %3045 = vmatpush.bf16.msra.mxu0 %v2544
        %3046 = vmatpush.bf16.msra.mxu0 %v2536
        %3047 = vmatpush.bf16.msra.mxu0 %v2528
        %3048 = vmatmul.bf16.gmra.mxu0 %v1436
        %v3049 = vpop.f32.mrf.mxu0
        %v3050 = vadd.f32 %v3037, %v3049
        %v3051 = vpop.f32.mrf.mxu0
        %3052 = vdwg.mxu0
        %3053 = vmatpush.bf16.msra.mxu0 %v2648
        %3054 = vmatpush.bf16.msra.mxu0 %v2640
        %3055 = vmatpush.bf16.msra.mxu0 %v2632
        %3056 = vmatpush.bf16.msra.mxu0 %v2624
        %3057 = vmatpush.bf16.msra.mxu0 %v2616
        %3058 = vmatpush.bf16.msra.mxu0 %v2608
        %3059 = vmatpush.bf16.msra.mxu0 %v2600
        %3060 = vmatpush.bf16.msra.mxu0 %v2592
        %3061 = vmatmul.bf16.gmra.mxu0 %v1437
        %v3062 = vpop.f32.mrf.mxu0
        %v3063 = vadd.f32 %v3050, %v3062
        %v3064 = vpop.f32.mrf.mxu0
        %3065 = vdwg.mxu0
        %3066 = vmatpush.bf16.msra.mxu0 %v2712
        %3067 = vmatpush.bf16.msra.mxu0 %v2704
        %3068 = vmatpush.bf16.msra.mxu0 %v2696
        %3069 = vmatpush.bf16.msra.mxu0 %v2688
        %3070 = vmatpush.bf16.msra.mxu0 %v2680
        %3071 = vmatpush.bf16.msra.mxu0 %v2672
        %3072 = vmatpush.bf16.msra.mxu0 %v2664
        %3073 = vmatpush.bf16.msra.mxu0 %v2656
        %3074 = vmatmul.bf16.gmra.mxu0 %v1438
        %v3075 = vpop.f32.mrf.mxu0
        %v3076 = vadd.f32 %v3063, %v3075
        %v3077 = vpop.f32.mrf.mxu0
        %3078 = vdwg.mxu0
        %3079 = vmatpush.bf16.msra.mxu0 %v2521
        %3080 = vmatpush.bf16.msra.mxu0 %v2513
        %3081 = vmatpush.bf16.msra.mxu0 %v2505
        %3082 = vmatpush.bf16.msra.mxu0 %v2497
        %3083 = vmatpush.bf16.msra.mxu0 %v2489
        %3084 = vmatpush.bf16.msra.mxu0 %v2481
        %3085 = vmatpush.bf16.msra.mxu0 %v2473
        %3086 = vmatpush.bf16.msra.mxu0 %v2465
        %3087 = vmatmul.bf16.gmra.mxu0 %v1435
        %v3088 = vpop.f32.mrf.mxu0
        %v3089 = vadd.f32 0.0, %v3088
        %v3090 = vpop.f32.mrf.mxu0
        %3091 = vdwg.mxu0
        %3092 = vmatpush.bf16.msra.mxu0 %v2585
        %3093 = vmatpush.bf16.msra.mxu0 %v2577
        %3094 = vmatpush.bf16.msra.mxu0 %v2569
        %3095 = vmatpush.bf16.msra.mxu0 %v2561
        %3096 = vmatpush.bf16.msra.mxu0 %v2553
        %3097 = vmatpush.bf16.msra.mxu0 %v2545
        %3098 = vmatpush.bf16.msra.mxu0 %v2537
        %3099 = vmatpush.bf16.msra.mxu0 %v2529
        %3100 = vmatmul.bf16.gmra.mxu0 %v1436
        %v3101 = vpop.f32.mrf.mxu0
        %v3102 = vadd.f32 %v3089, %v3101
        %v3103 = vpop.f32.mrf.mxu0
        %3104 = vdwg.mxu0
        %3105 = vmatpush.bf16.msra.mxu0 %v2649
        %3106 = vmatpush.bf16.msra.mxu0 %v2641
        %3107 = vmatpush.bf16.msra.mxu0 %v2633
        %3108 = vmatpush.bf16.msra.mxu0 %v2625
        %3109 = vmatpush.bf16.msra.mxu0 %v2617
        %3110 = vmatpush.bf16.msra.mxu0 %v2609
        %3111 = vmatpush.bf16.msra.mxu0 %v2601
        %3112 = vmatpush.bf16.msra.mxu0 %v2593
        %3113 = vmatmul.bf16.gmra.mxu0 %v1437
        %v3114 = vpop.f32.mrf.mxu0
        %v3115 = vadd.f32 %v3102, %v3114
        %v3116 = vpop.f32.mrf.mxu0
        %3117 = vdwg.mxu0
        %3118 = vmatpush.bf16.msra.mxu0 %v2713
        %3119 = vmatpush.bf16.msra.mxu0 %v2705
        %3120 = vmatpush.bf16.msra.mxu0 %v2697
        %3121 = vmatpush.bf16.msra.mxu0 %v2689
        %3122 = vmatpush.bf16.msra.mxu0 %v2681
        %3123 = vmatpush.bf16.msra.mxu0 %v2673
        %3124 = vmatpush.bf16.msra.mxu0 %v2665
        %3125 = vmatpush.bf16.msra.mxu0 %v2657
        %3126 = vmatmul.bf16.gmra.mxu0 %v1438
        %v3127 = vpop.f32.mrf.mxu0
        %v3128 = vadd.f32 %v3115, %v3127
        %v3129 = vpop.f32.mrf.mxu0
        %3130 = vdwg.mxu0
        %3131 = vmatpush.bf16.msra.mxu0 %v2522
        %3132 = vmatpush.bf16.msra.mxu0 %v2514
        %3133 = vmatpush.bf16.msra.mxu0 %v2506
        %3134 = vmatpush.bf16.msra.mxu0 %v2498
        %3135 = vmatpush.bf16.msra.mxu0 %v2490
        %3136 = vmatpush.bf16.msra.mxu0 %v2482
        %3137 = vmatpush.bf16.msra.mxu0 %v2474
        %3138 = vmatpush.bf16.msra.mxu0 %v2466
        %3139 = vmatmul.bf16.gmra.mxu0 %v1435
        %v3140 = vpop.f32.mrf.mxu0
        %v3141 = vadd.f32 0.0, %v3140
        %v3142 = vpop.f32.mrf.mxu0
        %3143 = vdwg.mxu0
        %3144 = vmatpush.bf16.msra.mxu0 %v2586
        %3145 = vmatpush.bf16.msra.mxu0 %v2578
        %3146 = vmatpush.bf16.msra.mxu0 %v2570
        %3147 = vmatpush.bf16.msra.mxu0 %v2562
        %3148 = vmatpush.bf16.msra.mxu0 %v2554
        %3149 = vmatpush.bf16.msra.mxu0 %v2546
        %3150 = vmatpush.bf16.msra.mxu0 %v2538
        %3151 = vmatpush.bf16.msra.mxu0 %v2530
        %3152 = vmatmul.bf16.gmra.mxu0 %v1436
        %v3153 = vpop.f32.mrf.mxu0
        %v3154 = vadd.f32 %v3141, %v3153
        %v3155 = vpop.f32.mrf.mxu0
        %3156 = vdwg.mxu0
        %3157 = vmatpush.bf16.msra.mxu0 %v2650
        %3158 = vmatpush.bf16.msra.mxu0 %v2642
        %3159 = vmatpush.bf16.msra.mxu0 %v2634
        %3160 = vmatpush.bf16.msra.mxu0 %v2626
        %3161 = vmatpush.bf16.msra.mxu0 %v2618
        %3162 = vmatpush.bf16.msra.mxu0 %v2610
        %3163 = vmatpush.bf16.msra.mxu0 %v2602
        %3164 = vmatpush.bf16.msra.mxu0 %v2594
        %3165 = vmatmul.bf16.gmra.mxu0 %v1437
        %v3166 = vpop.f32.mrf.mxu0
        %v3167 = vadd.f32 %v3154, %v3166
        %v3168 = vpop.f32.mrf.mxu0
        %3169 = vdwg.mxu0
        %3170 = vmatpush.bf16.msra.mxu0 %v2714
        %3171 = vmatpush.bf16.msra.mxu0 %v2706
        %3172 = vmatpush.bf16.msra.mxu0 %v2698
        %3173 = vmatpush.bf16.msra.mxu0 %v2690
        %3174 = vmatpush.bf16.msra.mxu0 %v2682
        %3175 = vmatpush.bf16.msra.mxu0 %v2674
        %3176 = vmatpush.bf16.msra.mxu0 %v2666
        %3177 = vmatpush.bf16.msra.mxu0 %v2658
        %3178 = vmatmul.bf16.gmra.mxu0 %v1438
        %v3179 = vpop.f32.mrf.mxu0
        %v3180 = vadd.f32 %v3167, %v3179
        %v3181 = vpop.f32.mrf.mxu0
        %3182 = vdwg.mxu0
        %3183 = vmatpush.bf16.msra.mxu0 %v2523
        %3184 = vmatpush.bf16.msra.mxu0 %v2515
        %3185 = vmatpush.bf16.msra.mxu0 %v2507
        %3186 = vmatpush.bf16.msra.mxu0 %v2499
        %3187 = vmatpush.bf16.msra.mxu0 %v2491
        %3188 = vmatpush.bf16.msra.mxu0 %v2483
        %3189 = vmatpush.bf16.msra.mxu0 %v2475
        %3190 = vmatpush.bf16.msra.mxu0 %v2467
        %3191 = vmatmul.bf16.gmra.mxu0 %v1435
        %v3192 = vpop.f32.mrf.mxu0
        %v3193 = vadd.f32 0.0, %v3192
        %v3194 = vpop.f32.mrf.mxu0
        %3195 = vdwg.mxu0
        %3196 = vmatpush.bf16.msra.mxu0 %v2587
        %3197 = vmatpush.bf16.msra.mxu0 %v2579
        %3198 = vmatpush.bf16.msra.mxu0 %v2571
        %3199 = vmatpush.bf16.msra.mxu0 %v2563
        %3200 = vmatpush.bf16.msra.mxu0 %v2555
        %3201 = vmatpush.bf16.msra.mxu0 %v2547
        %3202 = vmatpush.bf16.msra.mxu0 %v2539
        %3203 = vmatpush.bf16.msra.mxu0 %v2531
        %3204 = vmatmul.bf16.gmra.mxu0 %v1436
        %v3205 = vpop.f32.mrf.mxu0
        %v3206 = vadd.f32 %v3193, %v3205
        %v3207 = vpop.f32.mrf.mxu0
        %3208 = vdwg.mxu0
        %3209 = vmatpush.bf16.msra.mxu0 %v2651
        %3210 = vmatpush.bf16.msra.mxu0 %v2643
        %3211 = vmatpush.bf16.msra.mxu0 %v2635
        %3212 = vmatpush.bf16.msra.mxu0 %v2627
        %3213 = vmatpush.bf16.msra.mxu0 %v2619
        %3214 = vmatpush.bf16.msra.mxu0 %v2611
        %3215 = vmatpush.bf16.msra.mxu0 %v2603
        %3216 = vmatpush.bf16.msra.mxu0 %v2595
        %3217 = vmatmul.bf16.gmra.mxu0 %v1437
        %v3218 = vpop.f32.mrf.mxu0
        %v3219 = vadd.f32 %v3206, %v3218
        %v3220 = vpop.f32.mrf.mxu0
        %3221 = vdwg.mxu0
        %3222 = vmatpush.bf16.msra.mxu0 %v2715
        %3223 = vmatpush.bf16.msra.mxu0 %v2707
        %3224 = vmatpush.bf16.msra.mxu0 %v2699
        %3225 = vmatpush.bf16.msra.mxu0 %v2691
        %3226 = vmatpush.bf16.msra.mxu0 %v2683
        %3227 = vmatpush.bf16.msra.mxu0 %v2675
        %3228 = vmatpush.bf16.msra.mxu0 %v2667
        %3229 = vmatpush.bf16.msra.mxu0 %v2659
        %3230 = vmatmul.bf16.gmra.mxu0 %v1438
        %v3231 = vpop.f32.mrf.mxu0
        %v3232 = vadd.f32 %v3219, %v3231
        %v3233 = vpop.f32.mrf.mxu0
        %3234 = vdwg.mxu0
        %3235 = vmatpush.bf16.msra.mxu0 %v2524
        %3236 = vmatpush.bf16.msra.mxu0 %v2516
        %3237 = vmatpush.bf16.msra.mxu0 %v2508
        %3238 = vmatpush.bf16.msra.mxu0 %v2500
        %3239 = vmatpush.bf16.msra.mxu0 %v2492
        %3240 = vmatpush.bf16.msra.mxu0 %v2484
        %3241 = vmatpush.bf16.msra.mxu0 %v2476
        %3242 = vmatpush.bf16.msra.mxu0 %v2468
        %3243 = vmatmul.bf16.gmra.mxu0 %v1435
        %v3244 = vpop.f32.mrf.mxu0
        %v3245 = vadd.f32 0.0, %v3244
        %v3246 = vpop.f32.mrf.mxu0
        %3247 = vdwg.mxu0
        %3248 = vmatpush.bf16.msra.mxu0 %v2588
        %3249 = vmatpush.bf16.msra.mxu0 %v2580
        %3250 = vmatpush.bf16.msra.mxu0 %v2572
        %3251 = vmatpush.bf16.msra.mxu0 %v2564
        %3252 = vmatpush.bf16.msra.mxu0 %v2556
        %3253 = vmatpush.bf16.msra.mxu0 %v2548
        %3254 = vmatpush.bf16.msra.mxu0 %v2540
        %3255 = vmatpush.bf16.msra.mxu0 %v2532
        %3256 = vmatmul.bf16.gmra.mxu0 %v1436
        %v3257 = vpop.f32.mrf.mxu0
        %v3258 = vadd.f32 %v3245, %v3257
        %v3259 = vpop.f32.mrf.mxu0
        %3260 = vdwg.mxu0
        %3261 = vmatpush.bf16.msra.mxu0 %v2652
        %3262 = vmatpush.bf16.msra.mxu0 %v2644
        %3263 = vmatpush.bf16.msra.mxu0 %v2636
        %3264 = vmatpush.bf16.msra.mxu0 %v2628
        %3265 = vmatpush.bf16.msra.mxu0 %v2620
        %3266 = vmatpush.bf16.msra.mxu0 %v2612
        %3267 = vmatpush.bf16.msra.mxu0 %v2604
        %3268 = vmatpush.bf16.msra.mxu0 %v2596
        %3269 = vmatmul.bf16.gmra.mxu0 %v1437
        %v3270 = vpop.f32.mrf.mxu0
        %v3271 = vadd.f32 %v3258, %v3270
        %v3272 = vpop.f32.mrf.mxu0
        %3273 = vdwg.mxu0
        %3274 = vmatpush.bf16.msra.mxu0 %v2716
        %3275 = vmatpush.bf16.msra.mxu0 %v2708
        %3276 = vmatpush.bf16.msra.mxu0 %v2700
        %3277 = vmatpush.bf16.msra.mxu0 %v2692
        %3278 = vmatpush.bf16.msra.mxu0 %v2684
        %3279 = vmatpush.bf16.msra.mxu0 %v2676
        %3280 = vmatpush.bf16.msra.mxu0 %v2668
        %3281 = vmatpush.bf16.msra.mxu0 %v2660
        %3282 = vmatmul.bf16.gmra.mxu0 %v1438
        %v3283 = vpop.f32.mrf.mxu0
        %v3284 = vadd.f32 %v3271, %v3283
        %v3285 = vpop.f32.mrf.mxu0
        %3286 = vdwg.mxu0
        %3287 = vmatpush.bf16.msra.mxu0 %v2525
        %3288 = vmatpush.bf16.msra.mxu0 %v2517
        %3289 = vmatpush.bf16.msra.mxu0 %v2509
        %3290 = vmatpush.bf16.msra.mxu0 %v2501
        %3291 = vmatpush.bf16.msra.mxu0 %v2493
        %3292 = vmatpush.bf16.msra.mxu0 %v2485
        %3293 = vmatpush.bf16.msra.mxu0 %v2477
        %3294 = vmatpush.bf16.msra.mxu0 %v2469
        %3295 = vmatmul.bf16.gmra.mxu0 %v1435
        %v3296 = vpop.f32.mrf.mxu0
        %v3297 = vadd.f32 0.0, %v3296
        %v3298 = vpop.f32.mrf.mxu0
        %3299 = vdwg.mxu0
        %3300 = vmatpush.bf16.msra.mxu0 %v2589
        %3301 = vmatpush.bf16.msra.mxu0 %v2581
        %3302 = vmatpush.bf16.msra.mxu0 %v2573
        %3303 = vmatpush.bf16.msra.mxu0 %v2565
        %3304 = vmatpush.bf16.msra.mxu0 %v2557
        %3305 = vmatpush.bf16.msra.mxu0 %v2549
        %3306 = vmatpush.bf16.msra.mxu0 %v2541
        %3307 = vmatpush.bf16.msra.mxu0 %v2533
        %3308 = vmatmul.bf16.gmra.mxu0 %v1436
        %v3309 = vpop.f32.mrf.mxu0
        %v3310 = vadd.f32 %v3297, %v3309
        %v3311 = vpop.f32.mrf.mxu0
        %3312 = vdwg.mxu0
        %3313 = vmatpush.bf16.msra.mxu0 %v2653
        %3314 = vmatpush.bf16.msra.mxu0 %v2645
        %3315 = vmatpush.bf16.msra.mxu0 %v2637
        %3316 = vmatpush.bf16.msra.mxu0 %v2629
        %3317 = vmatpush.bf16.msra.mxu0 %v2621
        %3318 = vmatpush.bf16.msra.mxu0 %v2613
        %3319 = vmatpush.bf16.msra.mxu0 %v2605
        %3320 = vmatpush.bf16.msra.mxu0 %v2597
        %3321 = vmatmul.bf16.gmra.mxu0 %v1437
        %v3322 = vpop.f32.mrf.mxu0
        %v3323 = vadd.f32 %v3310, %v3322
        %v3324 = vpop.f32.mrf.mxu0
        %3325 = vdwg.mxu0
        %3326 = vmatpush.bf16.msra.mxu0 %v2717
        %3327 = vmatpush.bf16.msra.mxu0 %v2709
        %3328 = vmatpush.bf16.msra.mxu0 %v2701
        %3329 = vmatpush.bf16.msra.mxu0 %v2693
        %3330 = vmatpush.bf16.msra.mxu0 %v2685
        %3331 = vmatpush.bf16.msra.mxu0 %v2677
        %3332 = vmatpush.bf16.msra.mxu0 %v2669
        %3333 = vmatpush.bf16.msra.mxu0 %v2661
        %3334 = vmatmul.bf16.gmra.mxu0 %v1438
        %v3335 = vpop.f32.mrf.mxu0
        %v3336 = vadd.f32 %v3323, %v3335
        %v3337 = vpop.f32.mrf.mxu0
        %3338 = vdwg.mxu0
        %3339 = vmatpush.bf16.msra.mxu0 %v2526
        %3340 = vmatpush.bf16.msra.mxu0 %v2518
        %3341 = vmatpush.bf16.msra.mxu0 %v2510
        %3342 = vmatpush.bf16.msra.mxu0 %v2502
        %3343 = vmatpush.bf16.msra.mxu0 %v2494
        %3344 = vmatpush.bf16.msra.mxu0 %v2486
        %3345 = vmatpush.bf16.msra.mxu0 %v2478
        %3346 = vmatpush.bf16.msra.mxu0 %v2470
        %3347 = vmatmul.bf16.gmra.mxu0 %v1435
        %v3348 = vpop.f32.mrf.mxu0
        %v3349 = vadd.f32 0.0, %v3348
        %v3350 = vpop.f32.mrf.mxu0
        %3351 = vdwg.mxu0
        %3352 = vmatpush.bf16.msra.mxu0 %v2590
        %3353 = vmatpush.bf16.msra.mxu0 %v2582
        %3354 = vmatpush.bf16.msra.mxu0 %v2574
        %3355 = vmatpush.bf16.msra.mxu0 %v2566
        %3356 = vmatpush.bf16.msra.mxu0 %v2558
        %3357 = vmatpush.bf16.msra.mxu0 %v2550
        %3358 = vmatpush.bf16.msra.mxu0 %v2542
        %3359 = vmatpush.bf16.msra.mxu0 %v2534
        %3360 = vmatmul.bf16.gmra.mxu0 %v1436
        %v3361 = vpop.f32.mrf.mxu0
        %v3362 = vadd.f32 %v3349, %v3361
        %v3363 = vpop.f32.mrf.mxu0
        %3364 = vdwg.mxu0
        %3365 = vmatpush.bf16.msra.mxu0 %v2654
        %3366 = vmatpush.bf16.msra.mxu0 %v2646
        %3367 = vmatpush.bf16.msra.mxu0 %v2638
        %3368 = vmatpush.bf16.msra.mxu0 %v2630
        %3369 = vmatpush.bf16.msra.mxu0 %v2622
        %3370 = vmatpush.bf16.msra.mxu0 %v2614
        %3371 = vmatpush.bf16.msra.mxu0 %v2606
        %3372 = vmatpush.bf16.msra.mxu0 %v2598
        %3373 = vmatmul.bf16.gmra.mxu0 %v1437
        %v3374 = vpop.f32.mrf.mxu0
        %v3375 = vadd.f32 %v3362, %v3374
        %v3376 = vpop.f32.mrf.mxu0
        %3377 = vdwg.mxu0
        %3378 = vmatpush.bf16.msra.mxu0 %v2718
        %3379 = vmatpush.bf16.msra.mxu0 %v2710
        %3380 = vmatpush.bf16.msra.mxu0 %v2702
        %3381 = vmatpush.bf16.msra.mxu0 %v2694
        %3382 = vmatpush.bf16.msra.mxu0 %v2686
        %3383 = vmatpush.bf16.msra.mxu0 %v2678
        %3384 = vmatpush.bf16.msra.mxu0 %v2670
        %3385 = vmatpush.bf16.msra.mxu0 %v2662
        %3386 = vmatmul.bf16.gmra.mxu0 %v1438
        %v3387 = vpop.f32.mrf.mxu0
        %v3388 = vadd.f32 %v3375, %v3387
        %v3389 = vpop.f32.mrf.mxu0
        %3390 = vdwg.mxu0
        %v3391 = vrot.slane %v3024, 4
        %v3392 = vadd.f32 %v3024, %v3391
        %v3393 = vrot.slane %v3392, 2
        %v3394 = vadd.f32 %v3392, %v3393
        %v3395 = vrot.slane %v3394, 1
        %v3396 = vadd.f32 %v3394, %v3395
        %v3397 = vrot.slane %v3076, 4
        %v3398 = vadd.f32 %v3076, %v3397
        %v3399 = vrot.slane %v3398, 2
        %v3400 = vadd.f32 %v3398, %v3399
        %v3401 = vrot.slane %v3400, 1
        %v3402 = vadd.f32 %v3400, %v3401
        %v3403 = vrot.slane %v3128, 4
        %v3404 = vadd.f32 %v3128, %v3403
        %v3405 = vrot.slane %v3404, 2
        %v3406 = vadd.f32 %v3404, %v3405
        %v3407 = vrot.slane %v3406, 1
        %v3408 = vadd.f32 %v3406, %v3407
        %v3409 = vrot.slane %v3180, 4
        %v3410 = vadd.f32 %v3180, %v3409
        %v3411 = vrot.slane %v3410, 2
        %v3412 = vadd.f32 %v3410, %v3411
        %v3413 = vrot.slane %v3412, 1
        %v3414 = vadd.f32 %v3412, %v3413
        %v3415 = vrot.slane %v3232, 4
        %v3416 = vadd.f32 %v3232, %v3415
        %v3417 = vrot.slane %v3416, 2
        %v3418 = vadd.f32 %v3416, %v3417
        %v3419 = vrot.slane %v3418, 1
        %v3420 = vadd.f32 %v3418, %v3419
        %v3421 = vrot.slane %v3284, 4
        %v3422 = vadd.f32 %v3284, %v3421
        %v3423 = vrot.slane %v3422, 2
        %v3424 = vadd.f32 %v3422, %v3423
        %v3425 = vrot.slane %v3424, 1
        %v3426 = vadd.f32 %v3424, %v3425
        %v3427 = vrot.slane %v3336, 4
        %v3428 = vadd.f32 %v3336, %v3427
        %v3429 = vrot.slane %v3428, 2
        %v3430 = vadd.f32 %v3428, %v3429
        %v3431 = vrot.slane %v3430, 1
        %v3432 = vadd.f32 %v3430, %v3431
        %v3433 = vrot.slane %v3388, 4
        %v3434 = vadd.f32 %v3388, %v3433
        %v3435 = vrot.slane %v3434, 2
        %v3436 = vadd.f32 %v3434, %v3435
        %v3437 = vrot.slane %v3436, 1
        %v3438 = vadd.f32 %v3436, %v3437
        %v3439 = vmul.f32 %v3396, %v716
        %v3440 = vmul.f32 %v3402, %v716
        %v3441 = vmul.f32 %v3408, %v716
        %v3442 = vmul.f32 %v3414, %v716
        %v3443 = vmul.f32 %v3420, %v716
        %v3444 = vmul.f32 %v3426, %v716
        %v3445 = vmul.f32 %v3432, %v716
        %v3446 = vmul.f32 %v3438, %v716
        %v3447 = vmul.f32 %v3024, %v3024
        %v3448 = vmul.f32 %v3076, %v3076
        %v3449 = vmul.f32 %v3128, %v3128
        %v3450 = vmul.f32 %v3180, %v3180
        %v3451 = vmul.f32 %v3232, %v3232
        %v3452 = vmul.f32 %v3284, %v3284
        %v3453 = vmul.f32 %v3336, %v3336
        %v3454 = vmul.f32 %v3388, %v3388
        %v3455 = vrot.slane %v3447, 4
        %v3456 = vadd.f32 %v3447, %v3455
        %v3457 = vrot.slane %v3456, 2
        %v3458 = vadd.f32 %v3456, %v3457
        %v3459 = vrot.slane %v3458, 1
        %v3460 = vadd.f32 %v3458, %v3459
        %v3461 = vrot.slane %v3448, 4
        %v3462 = vadd.f32 %v3448, %v3461
        %v3463 = vrot.slane %v3462, 2
        %v3464 = vadd.f32 %v3462, %v3463
        %v3465 = vrot.slane %v3464, 1
        %v3466 = vadd.f32 %v3464, %v3465
        %v3467 = vrot.slane %v3449, 4
        %v3468 = vadd.f32 %v3449, %v3467
        %v3469 = vrot.slane %v3468, 2
        %v3470 = vadd.f32 %v3468, %v3469
        %v3471 = vrot.slane %v3470, 1
        %v3472 = vadd.f32 %v3470, %v3471
        %v3473 = vrot.slane %v3450, 4
        %v3474 = vadd.f32 %v3450, %v3473
        %v3475 = vrot.slane %v3474, 2
        %v3476 = vadd.f32 %v3474, %v3475
        %v3477 = vrot.slane %v3476, 1
        %v3478 = vadd.f32 %v3476, %v3477
        %v3479 = vrot.slane %v3451, 4
        %v3480 = vadd.f32 %v3451, %v3479
        %v3481 = vrot.slane %v3480, 2
        %v3482 = vadd.f32 %v3480, %v3481
        %v3483 = vrot.slane %v3482, 1
        %v3484 = vadd.f32 %v3482, %v3483
        %v3485 = vrot.slane %v3452, 4
        %v3486 = vadd.f32 %v3452, %v3485
        %v3487 = vrot.slane %v3486, 2
        %v3488 = vadd.f32 %v3486, %v3487
        %v3489 = vrot.slane %v3488, 1
        %v3490 = vadd.f32 %v3488, %v3489
        %v3491 = vrot.slane %v3453, 4
        %v3492 = vadd.f32 %v3453, %v3491
        %v3493 = vrot.slane %v3492, 2
        %v3494 = vadd.f32 %v3492, %v3493
        %v3495 = vrot.slane %v3494, 1
        %v3496 = vadd.f32 %v3494, %v3495
        %v3497 = vrot.slane %v3454, 4
        %v3498 = vadd.f32 %v3454, %v3497
        %v3499 = vrot.slane %v3498, 2
        %v3500 = vadd.f32 %v3498, %v3499
        %v3501 = vrot.slane %v3500, 1
        %v3502 = vadd.f32 %v3500, %v3501
        %v3503 = vmul.f32 %v3460, %v716
        %v3504 = vmul.f32 %v3466, %v716
        %v3505 = vmul.f32 %v3472, %v716
        %v3506 = vmul.f32 %v3478, %v716
        %v3507 = vmul.f32 %v3484, %v716
        %v3508 = vmul.f32 %v3490, %v716
        %v3509 = vmul.f32 %v3496, %v716
        %v3510 = vmul.f32 %v3502, %v716
        %v3511 = vmul.f32 %v3439, %v3439
        %v3512 = vmul.f32 %v3440, %v3440
        %v3513 = vmul.f32 %v3441, %v3441
        %v3514 = vmul.f32 %v3442, %v3442
        %v3515 = vmul.f32 %v3443, %v3443
        %v3516 = vmul.f32 %v3444, %v3444
        %v3517 = vmul.f32 %v3445, %v3445
        %v3518 = vmul.f32 %v3446, %v3446
        %v3519 = vsub.f32 %v3503, %v3511
        %v3520 = vsub.f32 %v3504, %v3512
        %v3521 = vsub.f32 %v3505, %v3513
        %v3522 = vsub.f32 %v3506, %v3514
        %v3523 = vsub.f32 %v3507, %v3515
        %v3524 = vsub.f32 %v3508, %v3516
        %v3525 = vsub.f32 %v3509, %v3517
        %v3526 = vsub.f32 %v3510, %v3518
        %v3527 = vmax.f32 %v3519, 0.0
        %v3528 = vmax.f32 %v3520, 0.0
        %v3529 = vmax.f32 %v3521, 0.0
        %v3530 = vmax.f32 %v3522, 0.0
        %v3531 = vmax.f32 %v3523, 0.0
        %v3532 = vmax.f32 %v3524, 0.0
        %v3533 = vmax.f32 %v3525, 0.0
        %v3534 = vmax.f32 %v3526, 0.0
        %v3535 = vadd.f32 %v3527, 1e-05
        %v3536 = vadd.f32 %v3528, 1e-05
        %v3537 = vadd.f32 %v3529, 1e-05
        %v3538 = vadd.f32 %v3530, 1e-05
        %v3539 = vadd.f32 %v3531, 1e-05
        %v3540 = vadd.f32 %v3532, 1e-05
        %v3541 = vadd.f32 %v3533, 1e-05
        %v3542 = vadd.f32 %v3534, 1e-05
        %v3543 = vrsqrt.pop %v3535
        %v3544 = vmul.f32 %v3543, %v3535
        %v3545 = vmul.f32 %v3544, %v3543
        %v3546 = vmul.f32 0.5, %v3545
        %v3547 = vsub.f32 1.5, %v3546
        %v3548 = vmul.f32 %v3543, %v3547
        %vm3549 = vweird.f32 %v3535
        %vm3550 = vweird.f32 %v3543
        %vm3551 = vmor %vm3549, %vm3550
        %v3552 = vsel %vm3551, %v3543, %v3548
        %v3553 = vrsqrt.pop %v3536
        %v3554 = vmul.f32 %v3553, %v3536
        %v3555 = vmul.f32 %v3554, %v3553
        %v3556 = vmul.f32 0.5, %v3555
        %v3557 = vsub.f32 1.5, %v3556
        %v3558 = vmul.f32 %v3553, %v3557
        %vm3559 = vweird.f32 %v3536
        %vm3560 = vweird.f32 %v3553
        %vm3561 = vmor %vm3559, %vm3560
        %v3562 = vsel %vm3561, %v3553, %v3558
        %v3563 = vrsqrt.pop %v3537
        %v3564 = vmul.f32 %v3563, %v3537
        %v3565 = vmul.f32 %v3564, %v3563
        %v3566 = vmul.f32 0.5, %v3565
        %v3567 = vsub.f32 1.5, %v3566
        %v3568 = vmul.f32 %v3563, %v3567
        %vm3569 = vweird.f32 %v3537
        %vm3570 = vweird.f32 %v3563
        %vm3571 = vmor %vm3569, %vm3570
        %v3572 = vsel %vm3571, %v3563, %v3568
        %v3573 = vrsqrt.pop %v3538
        %v3574 = vmul.f32 %v3573, %v3538
        %v3575 = vmul.f32 %v3574, %v3573
        %v3576 = vmul.f32 0.5, %v3575
        %v3577 = vsub.f32 1.5, %v3576
        %v3578 = vmul.f32 %v3573, %v3577
        %vm3579 = vweird.f32 %v3538
        %vm3580 = vweird.f32 %v3573
        %vm3581 = vmor %vm3579, %vm3580
        %v3582 = vsel %vm3581, %v3573, %v3578
        %v3583 = vrsqrt.pop %v3539
        %v3584 = vmul.f32 %v3583, %v3539
        %v3585 = vmul.f32 %v3584, %v3583
        %v3586 = vmul.f32 0.5, %v3585
        %v3587 = vsub.f32 1.5, %v3586
        %v3588 = vmul.f32 %v3583, %v3587
        %vm3589 = vweird.f32 %v3539
        %vm3590 = vweird.f32 %v3583
        %vm3591 = vmor %vm3589, %vm3590
        %v3592 = vsel %vm3591, %v3583, %v3588
        %v3593 = vrsqrt.pop %v3540
        %v3594 = vmul.f32 %v3593, %v3540
        %v3595 = vmul.f32 %v3594, %v3593
        %v3596 = vmul.f32 0.5, %v3595
        %v3597 = vsub.f32 1.5, %v3596
        %v3598 = vmul.f32 %v3593, %v3597
        %vm3599 = vweird.f32 %v3540
        %vm3600 = vweird.f32 %v3593
        %vm3601 = vmor %vm3599, %vm3600
        %v3602 = vsel %vm3601, %v3593, %v3598
        %v3603 = vrsqrt.pop %v3541
        %v3604 = vmul.f32 %v3603, %v3541
        %v3605 = vmul.f32 %v3604, %v3603
        %v3606 = vmul.f32 0.5, %v3605
        %v3607 = vsub.f32 1.5, %v3606
        %v3608 = vmul.f32 %v3603, %v3607
        %vm3609 = vweird.f32 %v3541
        %vm3610 = vweird.f32 %v3603
        %vm3611 = vmor %vm3609, %vm3610
        %v3612 = vsel %vm3611, %v3603, %v3608
        %v3613 = vrsqrt.pop %v3542
        %v3614 = vmul.f32 %v3613, %v3542
        %v3615 = vmul.f32 %v3614, %v3613
        %v3616 = vmul.f32 0.5, %v3615
        %v3617 = vsub.f32 1.5, %v3616
        %v3618 = vmul.f32 %v3613, %v3617
        %vm3619 = vweird.f32 %v3542
        %vm3620 = vweird.f32 %v3613
        %vm3621 = vmor %vm3619, %vm3620
        %v3622 = vsel %vm3621, %v3613, %v3618
        %v3623 = vmul.f32 %v440, %v3552
        %v3624 = vmul.f32 %v441, %v3562
        %v3625 = vmul.f32 %v442, %v3572
        %v3626 = vmul.f32 %v443, %v3582
        %v3627 = vmul.f32 %v444, %v3592
        %v3628 = vmul.f32 %v445, %v3602
        %v3629 = vmul.f32 %v446, %v3612
        %v3630 = vmul.f32 %v447, %v3622
        %v3631 = vmul.f32 %v3439, %v3623
        %v3632 = vmul.f32 %v3440, %v3624
        %v3633 = vmul.f32 %v3441, %v3625
        %v3634 = vmul.f32 %v3442, %v3626
        %v3635 = vmul.f32 %v3443, %v3627
        %v3636 = vmul.f32 %v3444, %v3628
        %v3637 = vmul.f32 %v3445, %v3629
        %v3638 = vmul.f32 %v3446, %v3630
        %v3647 = vrot.slane %v3631, 7
        %v3648 = vrot.slane %v3632, 7
        %v3649 = vrot.slane %v3633, 7
        %v3650 = vrot.slane %v3634, 7
        %v3651 = vrot.slane %v3635, 7
        %v3652 = vrot.slane %v3636, 7
        %v3653 = vrot.slane %v3637, 7
        %v3654 = vrot.slane %v3638, 7
        %v3663 = vsub.f32 %v440, %v3647
        %v3664 = vsub.f32 %v441, %v3648
        %v3665 = vsub.f32 %v442, %v3649
        %v3666 = vsub.f32 %v443, %v3650
        %v3667 = vsub.f32 %v444, %v3651
        %v3668 = vsub.f32 %v445, %v3652
        %v3669 = vsub.f32 %v446, %v3653
        %v3670 = vsub.f32 %v447, %v3654
        %v3671 = vperm.slane %v3623, 4
        %v3672 = vperm.slane %v3624, 4
        %v3673 = vperm.slane %v3625, 4
        %v3674 = vperm.slane %v3626, 4
        %v3675 = vperm.slane %v3627, 4
        %v3676 = vperm.slane %v3628, 4
        %v3677 = vperm.slane %v3629, 4
        %v3678 = vperm.slane %v3630, 4
        %v3679 = vmul.f32 %v3024, %v3671
        %v3680 = vmul.f32 %v3076, %v3672
        %v3681 = vmul.f32 %v3128, %v3673
        %v3682 = vmul.f32 %v3180, %v3674
        %v3683 = vmul.f32 %v3232, %v3675
        %v3684 = vmul.f32 %v3284, %v3676
        %v3685 = vmul.f32 %v3336, %v3677
        %v3686 = vmul.f32 %v3388, %v3678
        %v3687 = vperm.slane %v3663, 5
        %v3688 = vperm.slane %v3664, 5
        %v3689 = vperm.slane %v3665, 5
        %v3690 = vperm.slane %v3666, 5
        %v3691 = vperm.slane %v3667, 5
        %v3692 = vperm.slane %v3668, 5
        %v3693 = vperm.slane %v3669, 5
        %v3694 = vperm.slane %v3670, 5
        %v3695 = vadd.f32 %v3679, %v3687
        %v3696 = vadd.f32 %v3680, %v3688
        %v3697 = vadd.f32 %v3681, %v3689
        %v3698 = vadd.f32 %v3682, %v3690
        %v3699 = vadd.f32 %v3683, %v3691
        %v3700 = vadd.f32 %v3684, %v3692
        %v3701 = vadd.f32 %v3685, %v3693
        %v3702 = vadd.f32 %v3686, %v3694
        %v3703 = vmax.f32 %v3695, 0.0
        %v3704 = vmax.f32 %v3696, 0.0
        %v3705 = vmax.f32 %v3697, 0.0
        %v3706 = vmax.f32 %v3698, 0.0
        %v3707 = vmax.f32 %v3699, 0.0
        %v3708 = vmax.f32 %v3700, 0.0
        %v3709 = vmax.f32 %v3701, 0.0
        %v3710 = vmax.f32 %v3702, 0.0
        %v3711 = vpack.c.bf16 %v3703, %v3703
        %v3712 = vpack.c.bf16 %v3704, %v3704
        %v3713 = vpack.c.bf16 %v3705, %v3705
        %v3714 = vpack.c.bf16 %v3706, %v3706
        %v3715 = vpack.c.bf16 %v3707, %v3707
        %v3716 = vpack.c.bf16 %v3708, %v3708
        %v3717 = vpack.c.bf16 %v3709, %v3709
        %v3718 = vpack.c.bf16 %v3710, %v3710
        %v3719 = vld [vmem:[#allocation10] sm:$0xff]
        %v3720 = vld [vmem:[#allocation10 + $0x8] sm:$0xff]
        %v3721 = vld [vmem:[#allocation10 + $0x10] sm:$0xff]
        %v3722 = vld [vmem:[#allocation10 + $0x18] sm:$0xff]
        %v3723 = vld [vmem:[#allocation10 + $0x20] sm:$0xff]
        %v3724 = vld [vmem:[#allocation10 + $0x28] sm:$0xff]
        %v3725 = vld [vmem:[#allocation10 + $0x30] sm:$0xff]
        %v3726 = vld [vmem:[#allocation10 + $0x38] sm:$0xff]
        %v3727 = vld [vmem:[#allocation10 + $0x40] sm:$0xff]
        %v3728 = vld [vmem:[#allocation10 + $0x48] sm:$0xff]
        %v3729 = vld [vmem:[#allocation10 + $0x50] sm:$0xff]
        %v3730 = vld [vmem:[#allocation10 + $0x58] sm:$0xff]
        %v3731 = vld [vmem:[#allocation10 + $0x60] sm:$0xff]
        %v3732 = vld [vmem:[#allocation10 + $0x68] sm:$0xff]
        %v3733 = vld [vmem:[#allocation10 + $0x70] sm:$0xff]
        %v3734 = vld [vmem:[#allocation10 + $0x78] sm:$0xff]
        %v3735 = vld [vmem:[#allocation10 + $0x80] sm:$0xff]
        %v3736 = vld [vmem:[#allocation10 + $0x88] sm:$0xff]
        %v3737 = vld [vmem:[#allocation10 + $0x90] sm:$0xff]
        %v3738 = vld [vmem:[#allocation10 + $0x98] sm:$0xff]
        %v3739 = vld [vmem:[#allocation10 + $0xa0] sm:$0xff]
        %v3740 = vld [vmem:[#allocation10 + $0xa8] sm:$0xff]
        %v3741 = vld [vmem:[#allocation10 + $0xb0] sm:$0xff]
        %v3742 = vld [vmem:[#allocation10 + $0xb8] sm:$0xff]
        %v3743 = vld [vmem:[#allocation10 + $0xc0] sm:$0xff]
        %v3744 = vld [vmem:[#allocation10 + $0xc8] sm:$0xff]
        %v3745 = vld [vmem:[#allocation10 + $0xd0] sm:$0xff]
        %v3746 = vld [vmem:[#allocation10 + $0xd8] sm:$0xff]
        %v3747 = vld [vmem:[#allocation10 + $0xe0] sm:$0xff]
        %v3748 = vld [vmem:[#allocation10 + $0xe8] sm:$0xff]
        %v3749 = vld [vmem:[#allocation10 + $0xf0] sm:$0xff]
        %v3750 = vld [vmem:[#allocation10 + $0xf8] sm:$0xff]
        %v3751 = vld [vmem:[#allocation10 + $0x100] sm:$0xff]
        %v3752 = vld [vmem:[#allocation10 + $0x108] sm:$0xff]
        %v3753 = vld [vmem:[#allocation10 + $0x110] sm:$0xff]
        %v3754 = vld [vmem:[#allocation10 + $0x118] sm:$0xff]
        %v3755 = vld [vmem:[#allocation10 + $0x120] sm:$0xff]
        %v3756 = vld [vmem:[#allocation10 + $0x128] sm:$0xff]
        %v3757 = vld [vmem:[#allocation10 + $0x130] sm:$0xff]
        %v3758 = vld [vmem:[#allocation10 + $0x138] sm:$0xff]
        %v3759 = vld [vmem:[#allocation10 + $0x140] sm:$0xff]
        %v3760 = vld [vmem:[#allocation10 + $0x148] sm:$0xff]
        %v3761 = vld [vmem:[#allocation10 + $0x150] sm:$0xff]
        %v3762 = vld [vmem:[#allocation10 + $0x158] sm:$0xff]
        %v3763 = vld [vmem:[#allocation10 + $0x160] sm:$0xff]
        %v3764 = vld [vmem:[#allocation10 + $0x168] sm:$0xff]
        %v3765 = vld [vmem:[#allocation10 + $0x170] sm:$0xff]
        %v3766 = vld [vmem:[#allocation10 + $0x178] sm:$0xff]
        %v3767 = vld [vmem:[#allocation10 + $0x180] sm:$0xff]
        %v3768 = vld [vmem:[#allocation10 + $0x188] sm:$0xff]
        %v3769 = vld [vmem:[#allocation10 + $0x190] sm:$0xff]
        %v3770 = vld [vmem:[#allocation10 + $0x198] sm:$0xff]
        %v3771 = vld [vmem:[#allocation10 + $0x1a0] sm:$0xff]
        %v3772 = vld [vmem:[#allocation10 + $0x1a8] sm:$0xff]
        %v3773 = vld [vmem:[#allocation10 + $0x1b0] sm:$0xff]
        %v3774 = vld [vmem:[#allocation10 + $0x1b8] sm:$0xff]
        %v3775 = vld [vmem:[#allocation10 + $0x1c0] sm:$0xff]
        %v3776 = vld [vmem:[#allocation10 + $0x1c8] sm:$0xff]
        %v3777 = vld [vmem:[#allocation10 + $0x1d0] sm:$0xff]
        %v3778 = vld [vmem:[#allocation10 + $0x1d8] sm:$0xff]
        %v3779 = vld [vmem:[#allocation10 + $0x1e0] sm:$0xff]
        %v3780 = vld [vmem:[#allocation10 + $0x1e8] sm:$0xff]
        %v3781 = vld [vmem:[#allocation10 + $0x1f0] sm:$0xff]
        %v3782 = vld [vmem:[#allocation10 + $0x1f8] sm:$0xff]
        %v3783 = vld [vmem:[#allocation10 + $0x200] sm:$0xff]
        %v3784 = vld [vmem:[#allocation10 + $0x208] sm:$0xff]
        %v3785 = vld [vmem:[#allocation10 + $0x210] sm:$0xff]
        %v3786 = vld [vmem:[#allocation10 + $0x218] sm:$0xff]
        %v3787 = vld [vmem:[#allocation10 + $0x220] sm:$0xff]
        %v3788 = vld [vmem:[#allocation10 + $0x228] sm:$0xff]
        %v3789 = vld [vmem:[#allocation10 + $0x230] sm:$0xff]
        %v3790 = vld [vmem:[#allocation10 + $0x238] sm:$0xff]
        %v3791 = vld [vmem:[#allocation10 + $0x240] sm:$0xff]
        %v3792 = vld [vmem:[#allocation10 + $0x248] sm:$0xff]
        %v3793 = vld [vmem:[#allocation10 + $0x250] sm:$0xff]
        %v3794 = vld [vmem:[#allocation10 + $0x258] sm:$0xff]
        %v3795 = vld [vmem:[#allocation10 + $0x260] sm:$0xff]
        %v3796 = vld [vmem:[#allocation10 + $0x268] sm:$0xff]
        %v3797 = vld [vmem:[#allocation10 + $0x270] sm:$0xff]
        %v3798 = vld [vmem:[#allocation10 + $0x278] sm:$0xff]
        %v3799 = vld [vmem:[#allocation10 + $0x280] sm:$0xff]
        %v3800 = vld [vmem:[#allocation10 + $0x288] sm:$0xff]
        %v3801 = vld [vmem:[#allocation10 + $0x290] sm:$0xff]
        %v3802 = vld [vmem:[#allocation10 + $0x298] sm:$0xff]
        %v3803 = vld [vmem:[#allocation10 + $0x2a0] sm:$0xff]
        %v3804 = vld [vmem:[#allocation10 + $0x2a8] sm:$0xff]
        %v3805 = vld [vmem:[#allocation10 + $0x2b0] sm:$0xff]
        %v3806 = vld [vmem:[#allocation10 + $0x2b8] sm:$0xff]
        %v3807 = vld [vmem:[#allocation10 + $0x2c0] sm:$0xff]
        %v3808 = vld [vmem:[#allocation10 + $0x2c8] sm:$0xff]
        %v3809 = vld [vmem:[#allocation10 + $0x2d0] sm:$0xff]
        %v3810 = vld [vmem:[#allocation10 + $0x2d8] sm:$0xff]
        %v3811 = vld [vmem:[#allocation10 + $0x2e0] sm:$0xff]
        %v3812 = vld [vmem:[#allocation10 + $0x2e8] sm:$0xff]
        %v3813 = vld [vmem:[#allocation10 + $0x2f0] sm:$0xff]
        %v3814 = vld [vmem:[#allocation10 + $0x2f8] sm:$0xff]
        %v3815 = vld [vmem:[#allocation10 + $0x300] sm:$0xff]
        %v3816 = vld [vmem:[#allocation10 + $0x308] sm:$0xff]
        %v3817 = vld [vmem:[#allocation10 + $0x310] sm:$0xff]
        %v3818 = vld [vmem:[#allocation10 + $0x318] sm:$0xff]
        %v3819 = vld [vmem:[#allocation10 + $0x320] sm:$0xff]
        %v3820 = vld [vmem:[#allocation10 + $0x328] sm:$0xff]
        %v3821 = vld [vmem:[#allocation10 + $0x330] sm:$0xff]
        %v3822 = vld [vmem:[#allocation10 + $0x338] sm:$0xff]
        %v3823 = vld [vmem:[#allocation10 + $0x340] sm:$0xff]
        %v3824 = vld [vmem:[#allocation10 + $0x348] sm:$0xff]
        %v3825 = vld [vmem:[#allocation10 + $0x350] sm:$0xff]
        %v3826 = vld [vmem:[#allocation10 + $0x358] sm:$0xff]
        %v3827 = vld [vmem:[#allocation10 + $0x360] sm:$0xff]
        %v3828 = vld [vmem:[#allocation10 + $0x368] sm:$0xff]
        %v3829 = vld [vmem:[#allocation10 + $0x370] sm:$0xff]
        %v3830 = vld [vmem:[#allocation10 + $0x378] sm:$0xff]
        %v3831 = vld [vmem:[#allocation10 + $0x380] sm:$0xff]
        %v3832 = vld [vmem:[#allocation10 + $0x388] sm:$0xff]
        %v3833 = vld [vmem:[#allocation10 + $0x390] sm:$0xff]
        %v3834 = vld [vmem:[#allocation10 + $0x398] sm:$0xff]
        %v3835 = vld [vmem:[#allocation10 + $0x3a0] sm:$0xff]
        %v3836 = vld [vmem:[#allocation10 + $0x3a8] sm:$0xff]
        %v3837 = vld [vmem:[#allocation10 + $0x3b0] sm:$0xff]
        %v3838 = vld [vmem:[#allocation10 + $0x3b8] sm:$0xff]
        %v3839 = vld [vmem:[#allocation10 + $0x3c0] sm:$0xff]
        %v3840 = vld [vmem:[#allocation10 + $0x3c8] sm:$0xff]
        %v3841 = vld [vmem:[#allocation10 + $0x3d0] sm:$0xff]
        %v3842 = vld [vmem:[#allocation10 + $0x3d8] sm:$0xff]
        %v3843 = vld [vmem:[#allocation10 + $0x3e0] sm:$0xff]
        %v3844 = vld [vmem:[#allocation10 + $0x3e8] sm:$0xff]
        %v3845 = vld [vmem:[#allocation10 + $0x3f0] sm:$0xff]
        %v3846 = vld [vmem:[#allocation10 + $0x3f8] sm:$0xff]
        %v3847 = vld [vmem:[#allocation10 + $0x400] sm:$0xff]
        %v3848 = vld [vmem:[#allocation10 + $0x408] sm:$0xff]
        %v3849 = vld [vmem:[#allocation10 + $0x410] sm:$0xff]
        %v3850 = vld [vmem:[#allocation10 + $0x418] sm:$0xff]
        %v3851 = vld [vmem:[#allocation10 + $0x420] sm:$0xff]
        %v3852 = vld [vmem:[#allocation10 + $0x428] sm:$0xff]
        %v3853 = vld [vmem:[#allocation10 + $0x430] sm:$0xff]
        %v3854 = vld [vmem:[#allocation10 + $0x438] sm:$0xff]
        %v3855 = vld [vmem:[#allocation10 + $0x440] sm:$0xff]
        %v3856 = vld [vmem:[#allocation10 + $0x448] sm:$0xff]
        %v3857 = vld [vmem:[#allocation10 + $0x450] sm:$0xff]
        %v3858 = vld [vmem:[#allocation10 + $0x458] sm:$0xff]
        %v3859 = vld [vmem:[#allocation10 + $0x460] sm:$0xff]
        %v3860 = vld [vmem:[#allocation10 + $0x468] sm:$0xff]
        %v3861 = vld [vmem:[#allocation10 + $0x470] sm:$0xff]
        %v3862 = vld [vmem:[#allocation10 + $0x478] sm:$0xff]
        %v3863 = vld [vmem:[#allocation10 + $0x480] sm:$0xff]
        %v3864 = vld [vmem:[#allocation10 + $0x488] sm:$0xff]
        %v3865 = vld [vmem:[#allocation10 + $0x490] sm:$0xff]
        %v3866 = vld [vmem:[#allocation10 + $0x498] sm:$0xff]
        %v3867 = vld [vmem:[#allocation10 + $0x4a0] sm:$0xff]
        %v3868 = vld [vmem:[#allocation10 + $0x4a8] sm:$0xff]
        %v3869 = vld [vmem:[#allocation10 + $0x4b0] sm:$0xff]
        %v3870 = vld [vmem:[#allocation10 + $0x4b8] sm:$0xff]
        %v3871 = vld [vmem:[#allocation10 + $0x4c0] sm:$0xff]
        %v3872 = vld [vmem:[#allocation10 + $0x4c8] sm:$0xff]
        %v3873 = vld [vmem:[#allocation10 + $0x4d0] sm:$0xff]
        %v3874 = vld [vmem:[#allocation10 + $0x4d8] sm:$0xff]
        %v3875 = vld [vmem:[#allocation10 + $0x4e0] sm:$0xff]
        %v3876 = vld [vmem:[#allocation10 + $0x4e8] sm:$0xff]
        %v3877 = vld [vmem:[#allocation10 + $0x4f0] sm:$0xff]
        %v3878 = vld [vmem:[#allocation10 + $0x4f8] sm:$0xff]
        %v3879 = vld [vmem:[#allocation10 + $0x500] sm:$0xff]
        %v3880 = vld [vmem:[#allocation10 + $0x508] sm:$0xff]
        %v3881 = vld [vmem:[#allocation10 + $0x510] sm:$0xff]
        %v3882 = vld [vmem:[#allocation10 + $0x518] sm:$0xff]
        %v3883 = vld [vmem:[#allocation10 + $0x520] sm:$0xff]
        %v3884 = vld [vmem:[#allocation10 + $0x528] sm:$0xff]
        %v3885 = vld [vmem:[#allocation10 + $0x530] sm:$0xff]
        %v3886 = vld [vmem:[#allocation10 + $0x538] sm:$0xff]
        %v3887 = vld [vmem:[#allocation10 + $0x540] sm:$0xff]
        %v3888 = vld [vmem:[#allocation10 + $0x548] sm:$0xff]
        %v3889 = vld [vmem:[#allocation10 + $0x550] sm:$0xff]
        %v3890 = vld [vmem:[#allocation10 + $0x558] sm:$0xff]
        %v3891 = vld [vmem:[#allocation10 + $0x560] sm:$0xff]
        %v3892 = vld [vmem:[#allocation10 + $0x568] sm:$0xff]
        %v3893 = vld [vmem:[#allocation10 + $0x570] sm:$0xff]
        %v3894 = vld [vmem:[#allocation10 + $0x578] sm:$0xff]
        %v3895 = vld [vmem:[#allocation10 + $0x580] sm:$0xff]
        %v3896 = vld [vmem:[#allocation10 + $0x588] sm:$0xff]
        %v3897 = vld [vmem:[#allocation10 + $0x590] sm:$0xff]
        %v3898 = vld [vmem:[#allocation10 + $0x598] sm:$0xff]
        %v3899 = vld [vmem:[#allocation10 + $0x5a0] sm:$0xff]
        %v3900 = vld [vmem:[#allocation10 + $0x5a8] sm:$0xff]
        %v3901 = vld [vmem:[#allocation10 + $0x5b0] sm:$0xff]
        %v3902 = vld [vmem:[#allocation10 + $0x5b8] sm:$0xff]
        %v3903 = vld [vmem:[#allocation10 + $0x5c0] sm:$0xff]
        %v3904 = vld [vmem:[#allocation10 + $0x5c8] sm:$0xff]
        %v3905 = vld [vmem:[#allocation10 + $0x5d0] sm:$0xff]
        %v3906 = vld [vmem:[#allocation10 + $0x5d8] sm:$0xff]
        %v3907 = vld [vmem:[#allocation10 + $0x5e0] sm:$0xff]
        %v3908 = vld [vmem:[#allocation10 + $0x5e8] sm:$0xff]
        %v3909 = vld [vmem:[#allocation10 + $0x5f0] sm:$0xff]
        %v3910 = vld [vmem:[#allocation10 + $0x5f8] sm:$0xff]
        %v3911 = vld [vmem:[#allocation10 + $0x600] sm:$0xff]
        %v3912 = vld [vmem:[#allocation10 + $0x608] sm:$0xff]
        %v3913 = vld [vmem:[#allocation10 + $0x610] sm:$0xff]
        %v3914 = vld [vmem:[#allocation10 + $0x618] sm:$0xff]
        %v3915 = vld [vmem:[#allocation10 + $0x620] sm:$0xff]
        %v3916 = vld [vmem:[#allocation10 + $0x628] sm:$0xff]
        %v3917 = vld [vmem:[#allocation10 + $0x630] sm:$0xff]
        %v3918 = vld [vmem:[#allocation10 + $0x638] sm:$0xff]
        %v3919 = vld [vmem:[#allocation10 + $0x640] sm:$0xff]
        %v3920 = vld [vmem:[#allocation10 + $0x648] sm:$0xff]
        %v3921 = vld [vmem:[#allocation10 + $0x650] sm:$0xff]
        %v3922 = vld [vmem:[#allocation10 + $0x658] sm:$0xff]
        %v3923 = vld [vmem:[#allocation10 + $0x660] sm:$0xff]
        %v3924 = vld [vmem:[#allocation10 + $0x668] sm:$0xff]
        %v3925 = vld [vmem:[#allocation10 + $0x670] sm:$0xff]
        %v3926 = vld [vmem:[#allocation10 + $0x678] sm:$0xff]
        %v3927 = vld [vmem:[#allocation10 + $0x680] sm:$0xff]
        %v3928 = vld [vmem:[#allocation10 + $0x688] sm:$0xff]
        %v3929 = vld [vmem:[#allocation10 + $0x690] sm:$0xff]
        %v3930 = vld [vmem:[#allocation10 + $0x698] sm:$0xff]
        %v3931 = vld [vmem:[#allocation10 + $0x6a0] sm:$0xff]
        %v3932 = vld [vmem:[#allocation10 + $0x6a8] sm:$0xff]
        %v3933 = vld [vmem:[#allocation10 + $0x6b0] sm:$0xff]
        %v3934 = vld [vmem:[#allocation10 + $0x6b8] sm:$0xff]
        %v3935 = vld [vmem:[#allocation10 + $0x6c0] sm:$0xff]
        %v3936 = vld [vmem:[#allocation10 + $0x6c8] sm:$0xff]
        %v3937 = vld [vmem:[#allocation10 + $0x6d0] sm:$0xff]
        %v3938 = vld [vmem:[#allocation10 + $0x6d8] sm:$0xff]
        %v3939 = vld [vmem:[#allocation10 + $0x6e0] sm:$0xff]
        %v3940 = vld [vmem:[#allocation10 + $0x6e8] sm:$0xff]
        %v3941 = vld [vmem:[#allocation10 + $0x6f0] sm:$0xff]
        %v3942 = vld [vmem:[#allocation10 + $0x6f8] sm:$0xff]
        %v3943 = vld [vmem:[#allocation10 + $0x700] sm:$0xff]
        %v3944 = vld [vmem:[#allocation10 + $0x708] sm:$0xff]
        %v3945 = vld [vmem:[#allocation10 + $0x710] sm:$0xff]
        %v3946 = vld [vmem:[#allocation10 + $0x718] sm:$0xff]
        %v3947 = vld [vmem:[#allocation10 + $0x720] sm:$0xff]
        %v3948 = vld [vmem:[#allocation10 + $0x728] sm:$0xff]
        %v3949 = vld [vmem:[#allocation10 + $0x730] sm:$0xff]
        %v3950 = vld [vmem:[#allocation10 + $0x738] sm:$0xff]
        %v3951 = vld [vmem:[#allocation10 + $0x740] sm:$0xff]
        %v3952 = vld [vmem:[#allocation10 + $0x748] sm:$0xff]
        %v3953 = vld [vmem:[#allocation10 + $0x750] sm:$0xff]
        %v3954 = vld [vmem:[#allocation10 + $0x758] sm:$0xff]
        %v3955 = vld [vmem:[#allocation10 + $0x760] sm:$0xff]
        %v3956 = vld [vmem:[#allocation10 + $0x768] sm:$0xff]
        %v3957 = vld [vmem:[#allocation10 + $0x770] sm:$0xff]
        %v3958 = vld [vmem:[#allocation10 + $0x778] sm:$0xff]
        %v3959 = vld [vmem:[#allocation10 + $0x780] sm:$0xff]
        %v3960 = vld [vmem:[#allocation10 + $0x788] sm:$0xff]
        %v3961 = vld [vmem:[#allocation10 + $0x790] sm:$0xff]
        %v3962 = vld [vmem:[#allocation10 + $0x798] sm:$0xff]
        %v3963 = vld [vmem:[#allocation10 + $0x7a0] sm:$0xff]
        %v3964 = vld [vmem:[#allocation10 + $0x7a8] sm:$0xff]
        %v3965 = vld [vmem:[#allocation10 + $0x7b0] sm:$0xff]
        %v3966 = vld [vmem:[#allocation10 + $0x7b8] sm:$0xff]
        %v3967 = vld [vmem:[#allocation10 + $0x7c0] sm:$0xff]
        %v3968 = vld [vmem:[#allocation10 + $0x7c8] sm:$0xff]
        %v3969 = vld [vmem:[#allocation10 + $0x7d0] sm:$0xff]
        %v3970 = vld [vmem:[#allocation10 + $0x7d8] sm:$0xff]
        %v3971 = vld [vmem:[#allocation10 + $0x7e0] sm:$0xff]
        %v3972 = vld [vmem:[#allocation10 + $0x7e8] sm:$0xff]
        %v3973 = vld [vmem:[#allocation10 + $0x7f0] sm:$0xff]
        %v3974 = vld [vmem:[#allocation10 + $0x7f8] sm:$0xff]
        %v4231 = vunpack.c.l.b16 %v3719
        %v4232 = vunpack.c.h.b16 %v3719
        %v4233 = vunpack.c.l.b16 %v3720
        %v4234 = vunpack.c.h.b16 %v3720
        %v4235 = vunpack.c.l.b16 %v3721
        %v4236 = vunpack.c.h.b16 %v3721
        %v4237 = vunpack.c.l.b16 %v3722
        %v4238 = vunpack.c.h.b16 %v3722
        %v4239 = vunpack.c.l.b16 %v3723
        %v4240 = vunpack.c.h.b16 %v3723
        %v4241 = vunpack.c.l.b16 %v3724
        %v4242 = vunpack.c.h.b16 %v3724
        %v4243 = vunpack.c.l.b16 %v3725
        %v4244 = vunpack.c.h.b16 %v3725
        %v4245 = vunpack.c.l.b16 %v3726
        %v4246 = vunpack.c.h.b16 %v3726
        %v4247 = vunpack.c.l.b16 %v3727
        %v4248 = vunpack.c.h.b16 %v3727
        %v4249 = vunpack.c.l.b16 %v3728
        %v4250 = vunpack.c.h.b16 %v3728
        %v4251 = vunpack.c.l.b16 %v3729
        %v4252 = vunpack.c.h.b16 %v3729
        %v4253 = vunpack.c.l.b16 %v3730
        %v4254 = vunpack.c.h.b16 %v3730
        %v4255 = vunpack.c.l.b16 %v3731
        %v4256 = vunpack.c.h.b16 %v3731
        %v4257 = vunpack.c.l.b16 %v3732
        %v4258 = vunpack.c.h.b16 %v3732
        %v4259 = vunpack.c.l.b16 %v3733
        %v4260 = vunpack.c.h.b16 %v3733
        %v4261 = vunpack.c.l.b16 %v3734
        %v4262 = vunpack.c.h.b16 %v3734
        %v4263 = vunpack.c.l.b16 %v3735
        %v4264 = vunpack.c.h.b16 %v3735
        %v4265 = vunpack.c.l.b16 %v3736
        %v4266 = vunpack.c.h.b16 %v3736
        %v4267 = vunpack.c.l.b16 %v3737
        %v4268 = vunpack.c.h.b16 %v3737
        %v4269 = vunpack.c.l.b16 %v3738
        %v4270 = vunpack.c.h.b16 %v3738
        %v4271 = vunpack.c.l.b16 %v3739
        %v4272 = vunpack.c.h.b16 %v3739
        %v4273 = vunpack.c.l.b16 %v3740
        %v4274 = vunpack.c.h.b16 %v3740
        %v4275 = vunpack.c.l.b16 %v3741
        %v4276 = vunpack.c.h.b16 %v3741
        %v4277 = vunpack.c.l.b16 %v3742
        %v4278 = vunpack.c.h.b16 %v3742
        %v4279 = vunpack.c.l.b16 %v3743
        %v4280 = vunpack.c.h.b16 %v3743
        %v4281 = vunpack.c.l.b16 %v3744
        %v4282 = vunpack.c.h.b16 %v3744
        %v4283 = vunpack.c.l.b16 %v3745
        %v4284 = vunpack.c.h.b16 %v3745
        %v4285 = vunpack.c.l.b16 %v3746
        %v4286 = vunpack.c.h.b16 %v3746
        %v4287 = vunpack.c.l.b16 %v3747
        %v4288 = vunpack.c.h.b16 %v3747
        %v4289 = vunpack.c.l.b16 %v3748
        %v4290 = vunpack.c.h.b16 %v3748
        %v4291 = vunpack.c.l.b16 %v3749
        %v4292 = vunpack.c.h.b16 %v3749
        %v4293 = vunpack.c.l.b16 %v3750
        %v4294 = vunpack.c.h.b16 %v3750
        %v4295 = vunpack.c.l.b16 %v3751
        %v4296 = vunpack.c.h.b16 %v3751
        %v4297 = vunpack.c.l.b16 %v3752
        %v4298 = vunpack.c.h.b16 %v3752
        %v4299 = vunpack.c.l.b16 %v3753
        %v4300 = vunpack.c.h.b16 %v3753
        %v4301 = vunpack.c.l.b16 %v3754
        %v4302 = vunpack.c.h.b16 %v3754
        %v4303 = vunpack.c.l.b16 %v3755
        %v4304 = vunpack.c.h.b16 %v3755
        %v4305 = vunpack.c.l.b16 %v3756
        %v4306 = vunpack.c.h.b16 %v3756
        %v4307 = vunpack.c.l.b16 %v3757
        %v4308 = vunpack.c.h.b16 %v3757
        %v4309 = vunpack.c.l.b16 %v3758
        %v4310 = vunpack.c.h.b16 %v3758
        %v4311 = vunpack.c.l.b16 %v3759
        %v4312 = vunpack.c.h.b16 %v3759
        %v4313 = vunpack.c.l.b16 %v3760
        %v4314 = vunpack.c.h.b16 %v3760
        %v4315 = vunpack.c.l.b16 %v3761
        %v4316 = vunpack.c.h.b16 %v3761
        %v4317 = vunpack.c.l.b16 %v3762
        %v4318 = vunpack.c.h.b16 %v3762
        %v4319 = vunpack.c.l.b16 %v3763
        %v4320 = vunpack.c.h.b16 %v3763
        %v4321 = vunpack.c.l.b16 %v3764
        %v4322 = vunpack.c.h.b16 %v3764
        %v4323 = vunpack.c.l.b16 %v3765
        %v4324 = vunpack.c.h.b16 %v3765
        %v4325 = vunpack.c.l.b16 %v3766
        %v4326 = vunpack.c.h.b16 %v3766
        %v4327 = vunpack.c.l.b16 %v3767
        %v4328 = vunpack.c.h.b16 %v3767
        %v4329 = vunpack.c.l.b16 %v3768
        %v4330 = vunpack.c.h.b16 %v3768
        %v4331 = vunpack.c.l.b16 %v3769
        %v4332 = vunpack.c.h.b16 %v3769
        %v4333 = vunpack.c.l.b16 %v3770
        %v4334 = vunpack.c.h.b16 %v3770
        %v4335 = vunpack.c.l.b16 %v3771
        %v4336 = vunpack.c.h.b16 %v3771
        %v4337 = vunpack.c.l.b16 %v3772
        %v4338 = vunpack.c.h.b16 %v3772
        %v4339 = vunpack.c.l.b16 %v3773
        %v4340 = vunpack.c.h.b16 %v3773
        %v4341 = vunpack.c.l.b16 %v3774
        %v4342 = vunpack.c.h.b16 %v3774
        %v4343 = vunpack.c.l.b16 %v3775
        %v4344 = vunpack.c.h.b16 %v3775
        %v4345 = vunpack.c.l.b16 %v3776
        %v4346 = vunpack.c.h.b16 %v3776
        %v4347 = vunpack.c.l.b16 %v3777
        %v4348 = vunpack.c.h.b16 %v3777
        %v4349 = vunpack.c.l.b16 %v3778
        %v4350 = vunpack.c.h.b16 %v3778
        %v4351 = vunpack.c.l.b16 %v3779
        %v4352 = vunpack.c.h.b16 %v3779
        %v4353 = vunpack.c.l.b16 %v3780
        %v4354 = vunpack.c.h.b16 %v3780
        %v4355 = vunpack.c.l.b16 %v3781
        %v4356 = vunpack.c.h.b16 %v3781
        %v4357 = vunpack.c.l.b16 %v3782
        %v4358 = vunpack.c.h.b16 %v3782
        %v4359 = vunpack.c.l.b16 %v3783
        %v4360 = vunpack.c.h.b16 %v3783
        %v4361 = vunpack.c.l.b16 %v3784
        %v4362 = vunpack.c.h.b16 %v3784
        %v4363 = vunpack.c.l.b16 %v3785
        %v4364 = vunpack.c.h.b16 %v3785
        %v4365 = vunpack.c.l.b16 %v3786
        %v4366 = vunpack.c.h.b16 %v3786
        %v4367 = vunpack.c.l.b16 %v3787
        %v4368 = vunpack.c.h.b16 %v3787
        %v4369 = vunpack.c.l.b16 %v3788
        %v4370 = vunpack.c.h.b16 %v3788
        %v4371 = vunpack.c.l.b16 %v3789
        %v4372 = vunpack.c.h.b16 %v3789
        %v4373 = vunpack.c.l.b16 %v3790
        %v4374 = vunpack.c.h.b16 %v3790
        %v4375 = vunpack.c.l.b16 %v3791
        %v4376 = vunpack.c.h.b16 %v3791
        %v4377 = vunpack.c.l.b16 %v3792
        %v4378 = vunpack.c.h.b16 %v3792
        %v4379 = vunpack.c.l.b16 %v3793
        %v4380 = vunpack.c.h.b16 %v3793
        %v4381 = vunpack.c.l.b16 %v3794
        %v4382 = vunpack.c.h.b16 %v3794
        %v4383 = vunpack.c.l.b16 %v3795
        %v4384 = vunpack.c.h.b16 %v3795
        %v4385 = vunpack.c.l.b16 %v3796
        %v4386 = vunpack.c.h.b16 %v3796
        %v4387 = vunpack.c.l.b16 %v3797
        %v4388 = vunpack.c.h.b16 %v3797
        %v4389 = vunpack.c.l.b16 %v3798
        %v4390 = vunpack.c.h.b16 %v3798
        %v4391 = vunpack.c.l.b16 %v3799
        %v4392 = vunpack.c.h.b16 %v3799
        %v4393 = vunpack.c.l.b16 %v3800
        %v4394 = vunpack.c.h.b16 %v3800
        %v4395 = vunpack.c.l.b16 %v3801
        %v4396 = vunpack.c.h.b16 %v3801
        %v4397 = vunpack.c.l.b16 %v3802
        %v4398 = vunpack.c.h.b16 %v3802
        %v4399 = vunpack.c.l.b16 %v3803
        %v4400 = vunpack.c.h.b16 %v3803
        %v4401 = vunpack.c.l.b16 %v3804
        %v4402 = vunpack.c.h.b16 %v3804
        %v4403 = vunpack.c.l.b16 %v3805
        %v4404 = vunpack.c.h.b16 %v3805
        %v4405 = vunpack.c.l.b16 %v3806
        %v4406 = vunpack.c.h.b16 %v3806
        %v4407 = vunpack.c.l.b16 %v3807
        %v4408 = vunpack.c.h.b16 %v3807
        %v4409 = vunpack.c.l.b16 %v3808
        %v4410 = vunpack.c.h.b16 %v3808
        %v4411 = vunpack.c.l.b16 %v3809
        %v4412 = vunpack.c.h.b16 %v3809
        %v4413 = vunpack.c.l.b16 %v3810
        %v4414 = vunpack.c.h.b16 %v3810
        %v4415 = vunpack.c.l.b16 %v3811
        %v4416 = vunpack.c.h.b16 %v3811
        %v4417 = vunpack.c.l.b16 %v3812
        %v4418 = vunpack.c.h.b16 %v3812
        %v4419 = vunpack.c.l.b16 %v3813
        %v4420 = vunpack.c.h.b16 %v3813
        %v4421 = vunpack.c.l.b16 %v3814
        %v4422 = vunpack.c.h.b16 %v3814
        %v4423 = vunpack.c.l.b16 %v3815
        %v4424 = vunpack.c.h.b16 %v3815
        %v4425 = vunpack.c.l.b16 %v3816
        %v4426 = vunpack.c.h.b16 %v3816
        %v4427 = vunpack.c.l.b16 %v3817
        %v4428 = vunpack.c.h.b16 %v3817
        %v4429 = vunpack.c.l.b16 %v3818
        %v4430 = vunpack.c.h.b16 %v3818
        %v4431 = vunpack.c.l.b16 %v3819
        %v4432 = vunpack.c.h.b16 %v3819
        %v4433 = vunpack.c.l.b16 %v3820
        %v4434 = vunpack.c.h.b16 %v3820
        %v4435 = vunpack.c.l.b16 %v3821
        %v4436 = vunpack.c.h.b16 %v3821
        %v4437 = vunpack.c.l.b16 %v3822
        %v4438 = vunpack.c.h.b16 %v3822
        %v4439 = vunpack.c.l.b16 %v3823
        %v4440 = vunpack.c.h.b16 %v3823
        %v4441 = vunpack.c.l.b16 %v3824
        %v4442 = vunpack.c.h.b16 %v3824
        %v4443 = vunpack.c.l.b16 %v3825
        %v4444 = vunpack.c.h.b16 %v3825
        %v4445 = vunpack.c.l.b16 %v3826
        %v4446 = vunpack.c.h.b16 %v3826
        %v4447 = vunpack.c.l.b16 %v3827
        %v4448 = vunpack.c.h.b16 %v3827
        %v4449 = vunpack.c.l.b16 %v3828
        %v4450 = vunpack.c.h.b16 %v3828
        %v4451 = vunpack.c.l.b16 %v3829
        %v4452 = vunpack.c.h.b16 %v3829
        %v4453 = vunpack.c.l.b16 %v3830
        %v4454 = vunpack.c.h.b16 %v3830
        %v4455 = vunpack.c.l.b16 %v3831
        %v4456 = vunpack.c.h.b16 %v3831
        %v4457 = vunpack.c.l.b16 %v3832
        %v4458 = vunpack.c.h.b16 %v3832
        %v4459 = vunpack.c.l.b16 %v3833
        %v4460 = vunpack.c.h.b16 %v3833
        %v4461 = vunpack.c.l.b16 %v3834
        %v4462 = vunpack.c.h.b16 %v3834
        %v4463 = vunpack.c.l.b16 %v3835
        %v4464 = vunpack.c.h.b16 %v3835
        %v4465 = vunpack.c.l.b16 %v3836
        %v4466 = vunpack.c.h.b16 %v3836
        %v4467 = vunpack.c.l.b16 %v3837
        %v4468 = vunpack.c.h.b16 %v3837
        %v4469 = vunpack.c.l.b16 %v3838
        %v4470 = vunpack.c.h.b16 %v3838
        %v4471 = vunpack.c.l.b16 %v3839
        %v4472 = vunpack.c.h.b16 %v3839
        %v4473 = vunpack.c.l.b16 %v3840
        %v4474 = vunpack.c.h.b16 %v3840
        %v4475 = vunpack.c.l.b16 %v3841
        %v4476 = vunpack.c.h.b16 %v3841
        %v4477 = vunpack.c.l.b16 %v3842
        %v4478 = vunpack.c.h.b16 %v3842
        %v4479 = vunpack.c.l.b16 %v3843
        %v4480 = vunpack.c.h.b16 %v3843
        %v4481 = vunpack.c.l.b16 %v3844
        %v4482 = vunpack.c.h.b16 %v3844
        %v4483 = vunpack.c.l.b16 %v3845
        %v4484 = vunpack.c.h.b16 %v3845
        %v4485 = vunpack.c.l.b16 %v3846
        %v4486 = vunpack.c.h.b16 %v3846
        %v4487 = vunpack.c.l.b16 %v3847
        %v4488 = vunpack.c.h.b16 %v3847
        %v4489 = vunpack.c.l.b16 %v3848
        %v4490 = vunpack.c.h.b16 %v3848
        %v4491 = vunpack.c.l.b16 %v3849
        %v4492 = vunpack.c.h.b16 %v3849
        %v4493 = vunpack.c.l.b16 %v3850
        %v4494 = vunpack.c.h.b16 %v3850
        %v4495 = vunpack.c.l.b16 %v3851
        %v4496 = vunpack.c.h.b16 %v3851
        %v4497 = vunpack.c.l.b16 %v3852
        %v4498 = vunpack.c.h.b16 %v3852
        %v4499 = vunpack.c.l.b16 %v3853
        %v4500 = vunpack.c.h.b16 %v3853
        %v4501 = vunpack.c.l.b16 %v3854
        %v4502 = vunpack.c.h.b16 %v3854
        %v4503 = vunpack.c.l.b16 %v3855
        %v4504 = vunpack.c.h.b16 %v3855
        %v4505 = vunpack.c.l.b16 %v3856
        %v4506 = vunpack.c.h.b16 %v3856
        %v4507 = vunpack.c.l.b16 %v3857
        %v4508 = vunpack.c.h.b16 %v3857
        %v4509 = vunpack.c.l.b16 %v3858
        %v4510 = vunpack.c.h.b16 %v3858
        %v4511 = vunpack.c.l.b16 %v3859
        %v4512 = vunpack.c.h.b16 %v3859
        %v4513 = vunpack.c.l.b16 %v3860
        %v4514 = vunpack.c.h.b16 %v3860
        %v4515 = vunpack.c.l.b16 %v3861
        %v4516 = vunpack.c.h.b16 %v3861
        %v4517 = vunpack.c.l.b16 %v3862
        %v4518 = vunpack.c.h.b16 %v3862
        %v4519 = vunpack.c.l.b16 %v3863
        %v4520 = vunpack.c.h.b16 %v3863
        %v4521 = vunpack.c.l.b16 %v3864
        %v4522 = vunpack.c.h.b16 %v3864
        %v4523 = vunpack.c.l.b16 %v3865
        %v4524 = vunpack.c.h.b16 %v3865
        %v4525 = vunpack.c.l.b16 %v3866
        %v4526 = vunpack.c.h.b16 %v3866
        %v4527 = vunpack.c.l.b16 %v3867
        %v4528 = vunpack.c.h.b16 %v3867
        %v4529 = vunpack.c.l.b16 %v3868
        %v4530 = vunpack.c.h.b16 %v3868
        %v4531 = vunpack.c.l.b16 %v3869
        %v4532 = vunpack.c.h.b16 %v3869
        %v4533 = vunpack.c.l.b16 %v3870
        %v4534 = vunpack.c.h.b16 %v3870
        %v4535 = vunpack.c.l.b16 %v3871
        %v4536 = vunpack.c.h.b16 %v3871
        %v4537 = vunpack.c.l.b16 %v3872
        %v4538 = vunpack.c.h.b16 %v3872
        %v4539 = vunpack.c.l.b16 %v3873
        %v4540 = vunpack.c.h.b16 %v3873
        %v4541 = vunpack.c.l.b16 %v3874
        %v4542 = vunpack.c.h.b16 %v3874
        %v4543 = vunpack.c.l.b16 %v3875
        %v4544 = vunpack.c.h.b16 %v3875
        %v4545 = vunpack.c.l.b16 %v3876
        %v4546 = vunpack.c.h.b16 %v3876
        %v4547 = vunpack.c.l.b16 %v3877
        %v4548 = vunpack.c.h.b16 %v3877
        %v4549 = vunpack.c.l.b16 %v3878
        %v4550 = vunpack.c.h.b16 %v3878
        %v4551 = vunpack.c.l.b16 %v3879
        %v4552 = vunpack.c.h.b16 %v3879
        %v4553 = vunpack.c.l.b16 %v3880
        %v4554 = vunpack.c.h.b16 %v3880
        %v4555 = vunpack.c.l.b16 %v3881
        %v4556 = vunpack.c.h.b16 %v3881
        %v4557 = vunpack.c.l.b16 %v3882
        %v4558 = vunpack.c.h.b16 %v3882
        %v4559 = vunpack.c.l.b16 %v3883
        %v4560 = vunpack.c.h.b16 %v3883
        %v4561 = vunpack.c.l.b16 %v3884
        %v4562 = vunpack.c.h.b16 %v3884
        %v4563 = vunpack.c.l.b16 %v3885
        %v4564 = vunpack.c.h.b16 %v3885
        %v4565 = vunpack.c.l.b16 %v3886
        %v4566 = vunpack.c.h.b16 %v3886
        %v4567 = vunpack.c.l.b16 %v3887
        %v4568 = vunpack.c.h.b16 %v3887
        %v4569 = vunpack.c.l.b16 %v3888
        %v4570 = vunpack.c.h.b16 %v3888
        %v4571 = vunpack.c.l.b16 %v3889
        %v4572 = vunpack.c.h.b16 %v3889
        %v4573 = vunpack.c.l.b16 %v3890
        %v4574 = vunpack.c.h.b16 %v3890
        %v4575 = vunpack.c.l.b16 %v3891
        %v4576 = vunpack.c.h.b16 %v3891
        %v4577 = vunpack.c.l.b16 %v3892
        %v4578 = vunpack.c.h.b16 %v3892
        %v4579 = vunpack.c.l.b16 %v3893
        %v4580 = vunpack.c.h.b16 %v3893
        %v4581 = vunpack.c.l.b16 %v3894
        %v4582 = vunpack.c.h.b16 %v3894
        %v4583 = vunpack.c.l.b16 %v3895
        %v4584 = vunpack.c.h.b16 %v3895
        %v4585 = vunpack.c.l.b16 %v3896
        %v4586 = vunpack.c.h.b16 %v3896
        %v4587 = vunpack.c.l.b16 %v3897
        %v4588 = vunpack.c.h.b16 %v3897
        %v4589 = vunpack.c.l.b16 %v3898
        %v4590 = vunpack.c.h.b16 %v3898
        %v4591 = vunpack.c.l.b16 %v3899
        %v4592 = vunpack.c.h.b16 %v3899
        %v4593 = vunpack.c.l.b16 %v3900
        %v4594 = vunpack.c.h.b16 %v3900
        %v4595 = vunpack.c.l.b16 %v3901
        %v4596 = vunpack.c.h.b16 %v3901
        %v4597 = vunpack.c.l.b16 %v3902
        %v4598 = vunpack.c.h.b16 %v3902
        %v4599 = vunpack.c.l.b16 %v3903
        %v4600 = vunpack.c.h.b16 %v3903
        %v4601 = vunpack.c.l.b16 %v3904
        %v4602 = vunpack.c.h.b16 %v3904
        %v4603 = vunpack.c.l.b16 %v3905
        %v4604 = vunpack.c.h.b16 %v3905
        %v4605 = vunpack.c.l.b16 %v3906
        %v4606 = vunpack.c.h.b16 %v3906
        %v4607 = vunpack.c.l.b16 %v3907
        %v4608 = vunpack.c.h.b16 %v3907
        %v4609 = vunpack.c.l.b16 %v3908
        %v4610 = vunpack.c.h.b16 %v3908
        %v4611 = vunpack.c.l.b16 %v3909
        %v4612 = vunpack.c.h.b16 %v3909
        %v4613 = vunpack.c.l.b16 %v3910
        %v4614 = vunpack.c.h.b16 %v3910
        %v4615 = vunpack.c.l.b16 %v3911
        %v4616 = vunpack.c.h.b16 %v3911
        %v4617 = vunpack.c.l.b16 %v3912
        %v4618 = vunpack.c.h.b16 %v3912
        %v4619 = vunpack.c.l.b16 %v3913
        %v4620 = vunpack.c.h.b16 %v3913
        %v4621 = vunpack.c.l.b16 %v3914
        %v4622 = vunpack.c.h.b16 %v3914
        %v4623 = vunpack.c.l.b16 %v3915
        %v4624 = vunpack.c.h.b16 %v3915
        %v4625 = vunpack.c.l.b16 %v3916
        %v4626 = vunpack.c.h.b16 %v3916
        %v4627 = vunpack.c.l.b16 %v3917
        %v4628 = vunpack.c.h.b16 %v3917
        %v4629 = vunpack.c.l.b16 %v3918
        %v4630 = vunpack.c.h.b16 %v3918
        %v4631 = vunpack.c.l.b16 %v3919
        %v4632 = vunpack.c.h.b16 %v3919
        %v4633 = vunpack.c.l.b16 %v3920
        %v4634 = vunpack.c.h.b16 %v3920
        %v4635 = vunpack.c.l.b16 %v3921
        %v4636 = vunpack.c.h.b16 %v3921
        %v4637 = vunpack.c.l.b16 %v3922
        %v4638 = vunpack.c.h.b16 %v3922
        %v4639 = vunpack.c.l.b16 %v3923
        %v4640 = vunpack.c.h.b16 %v3923
        %v4641 = vunpack.c.l.b16 %v3924
        %v4642 = vunpack.c.h.b16 %v3924
        %v4643 = vunpack.c.l.b16 %v3925
        %v4644 = vunpack.c.h.b16 %v3925
        %v4645 = vunpack.c.l.b16 %v3926
        %v4646 = vunpack.c.h.b16 %v3926
        %v4647 = vunpack.c.l.b16 %v3927
        %v4648 = vunpack.c.h.b16 %v3927
        %v4649 = vunpack.c.l.b16 %v3928
        %v4650 = vunpack.c.h.b16 %v3928
        %v4651 = vunpack.c.l.b16 %v3929
        %v4652 = vunpack.c.h.b16 %v3929
        %v4653 = vunpack.c.l.b16 %v3930
        %v4654 = vunpack.c.h.b16 %v3930
        %v4655 = vunpack.c.l.b16 %v3931
        %v4656 = vunpack.c.h.b16 %v3931
        %v4657 = vunpack.c.l.b16 %v3932
        %v4658 = vunpack.c.h.b16 %v3932
        %v4659 = vunpack.c.l.b16 %v3933
        %v4660 = vunpack.c.h.b16 %v3933
        %v4661 = vunpack.c.l.b16 %v3934
        %v4662 = vunpack.c.h.b16 %v3934
        %v4663 = vunpack.c.l.b16 %v3935
        %v4664 = vunpack.c.h.b16 %v3935
        %v4665 = vunpack.c.l.b16 %v3936
        %v4666 = vunpack.c.h.b16 %v3936
        %v4667 = vunpack.c.l.b16 %v3937
        %v4668 = vunpack.c.h.b16 %v3937
        %v4669 = vunpack.c.l.b16 %v3938
        %v4670 = vunpack.c.h.b16 %v3938
        %v4671 = vunpack.c.l.b16 %v3939
        %v4672 = vunpack.c.h.b16 %v3939
        %v4673 = vunpack.c.l.b16 %v3940
        %v4674 = vunpack.c.h.b16 %v3940
        %v4675 = vunpack.c.l.b16 %v3941
        %v4676 = vunpack.c.h.b16 %v3941
        %v4677 = vunpack.c.l.b16 %v3942
        %v4678 = vunpack.c.h.b16 %v3942
        %v4679 = vunpack.c.l.b16 %v3943
        %v4680 = vunpack.c.h.b16 %v3943
        %v4681 = vunpack.c.l.b16 %v3944
        %v4682 = vunpack.c.h.b16 %v3944
        %v4683 = vunpack.c.l.b16 %v3945
        %v4684 = vunpack.c.h.b16 %v3945
        %v4685 = vunpack.c.l.b16 %v3946
        %v4686 = vunpack.c.h.b16 %v3946
        %v4687 = vunpack.c.l.b16 %v3947
        %v4688 = vunpack.c.h.b16 %v3947
        %v4689 = vunpack.c.l.b16 %v3948
        %v4690 = vunpack.c.h.b16 %v3948
        %v4691 = vunpack.c.l.b16 %v3949
        %v4692 = vunpack.c.h.b16 %v3949
        %v4693 = vunpack.c.l.b16 %v3950
        %v4694 = vunpack.c.h.b16 %v3950
        %v4695 = vunpack.c.l.b16 %v3951
        %v4696 = vunpack.c.h.b16 %v3951
        %v4697 = vunpack.c.l.b16 %v3952
        %v4698 = vunpack.c.h.b16 %v3952
        %v4699 = vunpack.c.l.b16 %v3953
        %v4700 = vunpack.c.h.b16 %v3953
        %v4701 = vunpack.c.l.b16 %v3954
        %v4702 = vunpack.c.h.b16 %v3954
        %v4703 = vunpack.c.l.b16 %v3955
        %v4704 = vunpack.c.h.b16 %v3955
        %v4705 = vunpack.c.l.b16 %v3956
        %v4706 = vunpack.c.h.b16 %v3956
        %v4707 = vunpack.c.l.b16 %v3957
        %v4708 = vunpack.c.h.b16 %v3957
        %v4709 = vunpack.c.l.b16 %v3958
        %v4710 = vunpack.c.h.b16 %v3958
        %v4711 = vunpack.c.l.b16 %v3959
        %v4712 = vunpack.c.h.b16 %v3959
        %v4713 = vunpack.c.l.b16 %v3960
        %v4714 = vunpack.c.h.b16 %v3960
        %v4715 = vunpack.c.l.b16 %v3961
        %v4716 = vunpack.c.h.b16 %v3961
        %v4717 = vunpack.c.l.b16 %v3962
        %v4718 = vunpack.c.h.b16 %v3962
        %v4719 = vunpack.c.l.b16 %v3963
        %v4720 = vunpack.c.h.b16 %v3963
        %v4721 = vunpack.c.l.b16 %v3964
        %v4722 = vunpack.c.h.b16 %v3964
        %v4723 = vunpack.c.l.b16 %v3965
        %v4724 = vunpack.c.h.b16 %v3965
        %v4725 = vunpack.c.l.b16 %v3966
        %v4726 = vunpack.c.h.b16 %v3966
        %v4727 = vunpack.c.l.b16 %v3967
        %v4728 = vunpack.c.h.b16 %v3967
        %v4729 = vunpack.c.l.b16 %v3968
        %v4730 = vunpack.c.h.b16 %v3968
        %v4731 = vunpack.c.l.b16 %v3969
        %v4732 = vunpack.c.h.b16 %v3969
        %v4733 = vunpack.c.l.b16 %v3970
        %v4734 = vunpack.c.h.b16 %v3970
        %v4735 = vunpack.c.l.b16 %v3971
        %v4736 = vunpack.c.h.b16 %v3971
        %v4737 = vunpack.c.l.b16 %v3972
        %v4738 = vunpack.c.h.b16 %v3972
        %v4739 = vunpack.c.l.b16 %v3973
        %v4740 = vunpack.c.h.b16 %v3973
        %v4741 = vunpack.c.l.b16 %v3974
        %v4742 = vunpack.c.h.b16 %v3974
        %v4743 = vpack.c.b16 %v4235, %v4231
        %v4744 = vpack.c.b16 %v4236, %v4232
        %v4745 = vpack.c.b16 %v4237, %v4233
        %v4746 = vpack.c.b16 %v4238, %v4234
        %v4747 = vpack.c.b16 %v4243, %v4239
        %v4748 = vpack.c.b16 %v4244, %v4240
        %v4749 = vpack.c.b16 %v4245, %v4241
        %v4750 = vpack.c.b16 %v4246, %v4242
        %v4751 = vpack.c.b16 %v4251, %v4247
        %v4752 = vpack.c.b16 %v4252, %v4248
        %v4753 = vpack.c.b16 %v4253, %v4249
        %v4754 = vpack.c.b16 %v4254, %v4250
        %v4755 = vpack.c.b16 %v4259, %v4255
        %v4756 = vpack.c.b16 %v4260, %v4256
        %v4757 = vpack.c.b16 %v4261, %v4257
        %v4758 = vpack.c.b16 %v4262, %v4258
        %v4759 = vpack.c.b16 %v4267, %v4263
        %v4760 = vpack.c.b16 %v4268, %v4264
        %v4761 = vpack.c.b16 %v4269, %v4265
        %v4762 = vpack.c.b16 %v4270, %v4266
        %v4763 = vpack.c.b16 %v4275, %v4271
        %v4764 = vpack.c.b16 %v4276, %v4272
        %v4765 = vpack.c.b16 %v4277, %v4273
        %v4766 = vpack.c.b16 %v4278, %v4274
        %v4767 = vpack.c.b16 %v4283, %v4279
        %v4768 = vpack.c.b16 %v4284, %v4280
        %v4769 = vpack.c.b16 %v4285, %v4281
        %v4770 = vpack.c.b16 %v4286, %v4282
        %v4771 = vpack.c.b16 %v4291, %v4287
        %v4772 = vpack.c.b16 %v4292, %v4288
        %v4773 = vpack.c.b16 %v4293, %v4289
        %v4774 = vpack.c.b16 %v4294, %v4290
        %v4775 = vpack.c.b16 %v4299, %v4295
        %v4776 = vpack.c.b16 %v4300, %v4296
        %v4777 = vpack.c.b16 %v4301, %v4297
        %v4778 = vpack.c.b16 %v4302, %v4298
        %v4779 = vpack.c.b16 %v4307, %v4303
        %v4780 = vpack.c.b16 %v4308, %v4304
        %v4781 = vpack.c.b16 %v4309, %v4305
        %v4782 = vpack.c.b16 %v4310, %v4306
        %v4783 = vpack.c.b16 %v4315, %v4311
        %v4784 = vpack.c.b16 %v4316, %v4312
        %v4785 = vpack.c.b16 %v4317, %v4313
        %v4786 = vpack.c.b16 %v4318, %v4314
        %v4787 = vpack.c.b16 %v4323, %v4319
        %v4788 = vpack.c.b16 %v4324, %v4320
        %v4789 = vpack.c.b16 %v4325, %v4321
        %v4790 = vpack.c.b16 %v4326, %v4322
        %v4791 = vpack.c.b16 %v4331, %v4327
        %v4792 = vpack.c.b16 %v4332, %v4328
        %v4793 = vpack.c.b16 %v4333, %v4329
        %v4794 = vpack.c.b16 %v4334, %v4330
        %v4795 = vpack.c.b16 %v4339, %v4335
        %v4796 = vpack.c.b16 %v4340, %v4336
        %v4797 = vpack.c.b16 %v4341, %v4337
        %v4798 = vpack.c.b16 %v4342, %v4338
        %v4799 = vpack.c.b16 %v4347, %v4343
        %v4800 = vpack.c.b16 %v4348, %v4344
        %v4801 = vpack.c.b16 %v4349, %v4345
        %v4802 = vpack.c.b16 %v4350, %v4346
        %v4803 = vpack.c.b16 %v4355, %v4351
        %v4804 = vpack.c.b16 %v4356, %v4352
        %v4805 = vpack.c.b16 %v4357, %v4353
        %v4806 = vpack.c.b16 %v4358, %v4354
        %v4807 = vpack.c.b16 %v4363, %v4359
        %v4808 = vpack.c.b16 %v4364, %v4360
        %v4809 = vpack.c.b16 %v4365, %v4361
        %v4810 = vpack.c.b16 %v4366, %v4362
        %v4811 = vpack.c.b16 %v4371, %v4367
        %v4812 = vpack.c.b16 %v4372, %v4368
        %v4813 = vpack.c.b16 %v4373, %v4369
        %v4814 = vpack.c.b16 %v4374, %v4370
        %v4815 = vpack.c.b16 %v4379, %v4375
        %v4816 = vpack.c.b16 %v4380, %v4376
        %v4817 = vpack.c.b16 %v4381, %v4377
        %v4818 = vpack.c.b16 %v4382, %v4378
        %v4819 = vpack.c.b16 %v4387, %v4383
        %v4820 = vpack.c.b16 %v4388, %v4384
        %v4821 = vpack.c.b16 %v4389, %v4385
        %v4822 = vpack.c.b16 %v4390, %v4386
        %v4823 = vpack.c.b16 %v4395, %v4391
        %v4824 = vpack.c.b16 %v4396, %v4392
        %v4825 = vpack.c.b16 %v4397, %v4393
        %v4826 = vpack.c.b16 %v4398, %v4394
        %v4827 = vpack.c.b16 %v4403, %v4399
        %v4828 = vpack.c.b16 %v4404, %v4400
        %v4829 = vpack.c.b16 %v4405, %v4401
        %v4830 = vpack.c.b16 %v4406, %v4402
        %v4831 = vpack.c.b16 %v4411, %v4407
        %v4832 = vpack.c.b16 %v4412, %v4408
        %v4833 = vpack.c.b16 %v4413, %v4409
        %v4834 = vpack.c.b16 %v4414, %v4410
        %v4835 = vpack.c.b16 %v4419, %v4415
        %v4836 = vpack.c.b16 %v4420, %v4416
        %v4837 = vpack.c.b16 %v4421, %v4417
        %v4838 = vpack.c.b16 %v4422, %v4418
        %v4839 = vpack.c.b16 %v4427, %v4423
        %v4840 = vpack.c.b16 %v4428, %v4424
        %v4841 = vpack.c.b16 %v4429, %v4425
        %v4842 = vpack.c.b16 %v4430, %v4426
        %v4843 = vpack.c.b16 %v4435, %v4431
        %v4844 = vpack.c.b16 %v4436, %v4432
        %v4845 = vpack.c.b16 %v4437, %v4433
        %v4846 = vpack.c.b16 %v4438, %v4434
        %v4847 = vpack.c.b16 %v4443, %v4439
        %v4848 = vpack.c.b16 %v4444, %v4440
        %v4849 = vpack.c.b16 %v4445, %v4441
        %v4850 = vpack.c.b16 %v4446, %v4442
        %v4851 = vpack.c.b16 %v4451, %v4447
        %v4852 = vpack.c.b16 %v4452, %v4448
        %v4853 = vpack.c.b16 %v4453, %v4449
        %v4854 = vpack.c.b16 %v4454, %v4450
        %v4855 = vpack.c.b16 %v4459, %v4455
        %v4856 = vpack.c.b16 %v4460, %v4456
        %v4857 = vpack.c.b16 %v4461, %v4457
        %v4858 = vpack.c.b16 %v4462, %v4458
        %v4859 = vpack.c.b16 %v4467, %v4463
        %v4860 = vpack.c.b16 %v4468, %v4464
        %v4861 = vpack.c.b16 %v4469, %v4465
        %v4862 = vpack.c.b16 %v4470, %v4466
        %v4863 = vpack.c.b16 %v4475, %v4471
        %v4864 = vpack.c.b16 %v4476, %v4472
        %v4865 = vpack.c.b16 %v4477, %v4473
        %v4866 = vpack.c.b16 %v4478, %v4474
        %v4867 = vpack.c.b16 %v4483, %v4479
        %v4868 = vpack.c.b16 %v4484, %v4480
        %v4869 = vpack.c.b16 %v4485, %v4481
        %v4870 = vpack.c.b16 %v4486, %v4482
        %v4871 = vpack.c.b16 %v4491, %v4487
        %v4872 = vpack.c.b16 %v4492, %v4488
        %v4873 = vpack.c.b16 %v4493, %v4489
        %v4874 = vpack.c.b16 %v4494, %v4490
        %v4875 = vpack.c.b16 %v4499, %v4495
        %v4876 = vpack.c.b16 %v4500, %v4496
        %v4877 = vpack.c.b16 %v4501, %v4497
        %v4878 = vpack.c.b16 %v4502, %v4498
        %v4879 = vpack.c.b16 %v4507, %v4503
        %v4880 = vpack.c.b16 %v4508, %v4504
        %v4881 = vpack.c.b16 %v4509, %v4505
        %v4882 = vpack.c.b16 %v4510, %v4506
        %v4883 = vpack.c.b16 %v4515, %v4511
        %v4884 = vpack.c.b16 %v4516, %v4512
        %v4885 = vpack.c.b16 %v4517, %v4513
        %v4886 = vpack.c.b16 %v4518, %v4514
        %v4887 = vpack.c.b16 %v4523, %v4519
        %v4888 = vpack.c.b16 %v4524, %v4520
        %v4889 = vpack.c.b16 %v4525, %v4521
        %v4890 = vpack.c.b16 %v4526, %v4522
        %v4891 = vpack.c.b16 %v4531, %v4527
        %v4892 = vpack.c.b16 %v4532, %v4528
        %v4893 = vpack.c.b16 %v4533, %v4529
        %v4894 = vpack.c.b16 %v4534, %v4530
        %v4895 = vpack.c.b16 %v4539, %v4535
        %v4896 = vpack.c.b16 %v4540, %v4536
        %v4897 = vpack.c.b16 %v4541, %v4537
        %v4898 = vpack.c.b16 %v4542, %v4538
        %v4899 = vpack.c.b16 %v4547, %v4543
        %v4900 = vpack.c.b16 %v4548, %v4544
        %v4901 = vpack.c.b16 %v4549, %v4545
        %v4902 = vpack.c.b16 %v4550, %v4546
        %v4903 = vpack.c.b16 %v4555, %v4551
        %v4904 = vpack.c.b16 %v4556, %v4552
        %v4905 = vpack.c.b16 %v4557, %v4553
        %v4906 = vpack.c.b16 %v4558, %v4554
        %v4907 = vpack.c.b16 %v4563, %v4559
        %v4908 = vpack.c.b16 %v4564, %v4560
        %v4909 = vpack.c.b16 %v4565, %v4561
        %v4910 = vpack.c.b16 %v4566, %v4562
        %v4911 = vpack.c.b16 %v4571, %v4567
        %v4912 = vpack.c.b16 %v4572, %v4568
        %v4913 = vpack.c.b16 %v4573, %v4569
        %v4914 = vpack.c.b16 %v4574, %v4570
        %v4915 = vpack.c.b16 %v4579, %v4575
        %v4916 = vpack.c.b16 %v4580, %v4576
        %v4917 = vpack.c.b16 %v4581, %v4577
        %v4918 = vpack.c.b16 %v4582, %v4578
        %v4919 = vpack.c.b16 %v4587, %v4583
        %v4920 = vpack.c.b16 %v4588, %v4584
        %v4921 = vpack.c.b16 %v4589, %v4585
        %v4922 = vpack.c.b16 %v4590, %v4586
        %v4923 = vpack.c.b16 %v4595, %v4591
        %v4924 = vpack.c.b16 %v4596, %v4592
        %v4925 = vpack.c.b16 %v4597, %v4593
        %v4926 = vpack.c.b16 %v4598, %v4594
        %v4927 = vpack.c.b16 %v4603, %v4599
        %v4928 = vpack.c.b16 %v4604, %v4600
        %v4929 = vpack.c.b16 %v4605, %v4601
        %v4930 = vpack.c.b16 %v4606, %v4602
        %v4931 = vpack.c.b16 %v4611, %v4607
        %v4932 = vpack.c.b16 %v4612, %v4608
        %v4933 = vpack.c.b16 %v4613, %v4609
        %v4934 = vpack.c.b16 %v4614, %v4610
        %v4935 = vpack.c.b16 %v4619, %v4615
        %v4936 = vpack.c.b16 %v4620, %v4616
        %v4937 = vpack.c.b16 %v4621, %v4617
        %v4938 = vpack.c.b16 %v4622, %v4618
        %v4939 = vpack.c.b16 %v4627, %v4623
        %v4940 = vpack.c.b16 %v4628, %v4624
        %v4941 = vpack.c.b16 %v4629, %v4625
        %v4942 = vpack.c.b16 %v4630, %v4626
        %v4943 = vpack.c.b16 %v4635, %v4631
        %v4944 = vpack.c.b16 %v4636, %v4632
        %v4945 = vpack.c.b16 %v4637, %v4633
        %v4946 = vpack.c.b16 %v4638, %v4634
        %v4947 = vpack.c.b16 %v4643, %v4639
        %v4948 = vpack.c.b16 %v4644, %v4640
        %v4949 = vpack.c.b16 %v4645, %v4641
        %v4950 = vpack.c.b16 %v4646, %v4642
        %v4951 = vpack.c.b16 %v4651, %v4647
        %v4952 = vpack.c.b16 %v4652, %v4648
        %v4953 = vpack.c.b16 %v4653, %v4649
        %v4954 = vpack.c.b16 %v4654, %v4650
        %v4955 = vpack.c.b16 %v4659, %v4655
        %v4956 = vpack.c.b16 %v4660, %v4656
        %v4957 = vpack.c.b16 %v4661, %v4657
        %v4958 = vpack.c.b16 %v4662, %v4658
        %v4959 = vpack.c.b16 %v4667, %v4663
        %v4960 = vpack.c.b16 %v4668, %v4664
        %v4961 = vpack.c.b16 %v4669, %v4665
        %v4962 = vpack.c.b16 %v4670, %v4666
        %v4963 = vpack.c.b16 %v4675, %v4671
        %v4964 = vpack.c.b16 %v4676, %v4672
        %v4965 = vpack.c.b16 %v4677, %v4673
        %v4966 = vpack.c.b16 %v4678, %v4674
        %v4967 = vpack.c.b16 %v4683, %v4679
        %v4968 = vpack.c.b16 %v4684, %v4680
        %v4969 = vpack.c.b16 %v4685, %v4681
        %v4970 = vpack.c.b16 %v4686, %v4682
        %v4971 = vpack.c.b16 %v4691, %v4687
        %v4972 = vpack.c.b16 %v4692, %v4688
        %v4973 = vpack.c.b16 %v4693, %v4689
        %v4974 = vpack.c.b16 %v4694, %v4690
        %v4975 = vpack.c.b16 %v4699, %v4695
        %v4976 = vpack.c.b16 %v4700, %v4696
        %v4977 = vpack.c.b16 %v4701, %v4697
        %v4978 = vpack.c.b16 %v4702, %v4698
        %v4979 = vpack.c.b16 %v4707, %v4703
        %v4980 = vpack.c.b16 %v4708, %v4704
        %v4981 = vpack.c.b16 %v4709, %v4705
        %v4982 = vpack.c.b16 %v4710, %v4706
        %v4983 = vpack.c.b16 %v4715, %v4711
        %v4984 = vpack.c.b16 %v4716, %v4712
        %v4985 = vpack.c.b16 %v4717, %v4713
        %v4986 = vpack.c.b16 %v4718, %v4714
        %v4987 = vpack.c.b16 %v4723, %v4719
        %v4988 = vpack.c.b16 %v4724, %v4720
        %v4989 = vpack.c.b16 %v4725, %v4721
        %v4990 = vpack.c.b16 %v4726, %v4722
        %v4991 = vpack.c.b16 %v4731, %v4727
        %v4992 = vpack.c.b16 %v4732, %v4728
        %v4993 = vpack.c.b16 %v4733, %v4729
        %v4994 = vpack.c.b16 %v4734, %v4730
        %v4995 = vpack.c.b16 %v4739, %v4735
        %v4996 = vpack.c.b16 %v4740, %v4736
        %v4997 = vpack.c.b16 %v4741, %v4737
        %v4998 = vpack.c.b16 %v4742, %v4738
        %5255 = vmatpush.bf16.msra.mxu0 %v4771
        %5256 = vmatpush.bf16.msra.mxu0 %v4767
        %5257 = vmatpush.bf16.msra.mxu0 %v4763
        %5258 = vmatpush.bf16.msra.mxu0 %v4759
        %5259 = vmatpush.bf16.msra.mxu0 %v4755
        %5260 = vmatpush.bf16.msra.mxu0 %v4751
        %5261 = vmatpush.bf16.msra.mxu0 %v4747
        %5262 = vmatpush.bf16.msra.mxu0 %v4743
        %5263 = vmatmul.bf16.gmra.mxu0 %v3711
        %v5264 = vpop.f32.mrf.mxu0
        %v5265 = vadd.f32 0.0, %v5264
        %v5266 = vpop.f32.mrf.mxu0
        %5267 = vdwg.mxu0
        %5268 = vmatpush.bf16.msra.mxu0 %v4803
        %5269 = vmatpush.bf16.msra.mxu0 %v4799
        %5270 = vmatpush.bf16.msra.mxu0 %v4795
        %5271 = vmatpush.bf16.msra.mxu0 %v4791
        %5272 = vmatpush.bf16.msra.mxu0 %v4787
        %5273 = vmatpush.bf16.msra.mxu0 %v4783
        %5274 = vmatpush.bf16.msra.mxu0 %v4779
        %5275 = vmatpush.bf16.msra.mxu0 %v4775
        %5276 = vmatmul.bf16.gmra.mxu0 %v3712
        %v5277 = vpop.f32.mrf.mxu0
        %v5278 = vadd.f32 %v5265, %v5277
        %v5279 = vpop.f32.mrf.mxu0
        %5280 = vdwg.mxu0
        %5281 = vmatpush.bf16.msra.mxu0 %v4835
        %5282 = vmatpush.bf16.msra.mxu0 %v4831
        %5283 = vmatpush.bf16.msra.mxu0 %v4827
        %5284 = vmatpush.bf16.msra.mxu0 %v4823
        %5285 = vmatpush.bf16.msra.mxu0 %v4819
        %5286 = vmatpush.bf16.msra.mxu0 %v4815
        %5287 = vmatpush.bf16.msra.mxu0 %v4811
        %5288 = vmatpush.bf16.msra.mxu0 %v4807
        %5289 = vmatmul.bf16.gmra.mxu0 %v3713
        %v5290 = vpop.f32.mrf.mxu0
        %v5291 = vadd.f32 %v5278, %v5290
        %v5292 = vpop.f32.mrf.mxu0
        %5293 = vdwg.mxu0
        %5294 = vmatpush.bf16.msra.mxu0 %v4867
        %5295 = vmatpush.bf16.msra.mxu0 %v4863
        %5296 = vmatpush.bf16.msra.mxu0 %v4859
        %5297 = vmatpush.bf16.msra.mxu0 %v4855
        %5298 = vmatpush.bf16.msra.mxu0 %v4851
        %5299 = vmatpush.bf16.msra.mxu0 %v4847
        %5300 = vmatpush.bf16.msra.mxu0 %v4843
        %5301 = vmatpush.bf16.msra.mxu0 %v4839
        %5302 = vmatmul.bf16.gmra.mxu0 %v3714
        %v5303 = vpop.f32.mrf.mxu0
        %v5304 = vadd.f32 %v5291, %v5303
        %v5305 = vpop.f32.mrf.mxu0
        %5306 = vdwg.mxu0
        %5307 = vmatpush.bf16.msra.mxu0 %v4899
        %5308 = vmatpush.bf16.msra.mxu0 %v4895
        %5309 = vmatpush.bf16.msra.mxu0 %v4891
        %5310 = vmatpush.bf16.msra.mxu0 %v4887
        %5311 = vmatpush.bf16.msra.mxu0 %v4883
        %5312 = vmatpush.bf16.msra.mxu0 %v4879
        %5313 = vmatpush.bf16.msra.mxu0 %v4875
        %5314 = vmatpush.bf16.msra.mxu0 %v4871
        %5315 = vmatmul.bf16.gmra.mxu0 %v3715
        %v5316 = vpop.f32.mrf.mxu0
        %v5317 = vadd.f32 %v5304, %v5316
        %v5318 = vpop.f32.mrf.mxu0
        %5319 = vdwg.mxu0
        %5320 = vmatpush.bf16.msra.mxu0 %v4931
        %5321 = vmatpush.bf16.msra.mxu0 %v4927
        %5322 = vmatpush.bf16.msra.mxu0 %v4923
        %5323 = vmatpush.bf16.msra.mxu0 %v4919
        %5324 = vmatpush.bf16.msra.mxu0 %v4915
        %5325 = vmatpush.bf16.msra.mxu0 %v4911
        %5326 = vmatpush.bf16.msra.mxu0 %v4907
        %5327 = vmatpush.bf16.msra.mxu0 %v4903
        %5328 = vmatmul.bf16.gmra.mxu0 %v3716
        %v5329 = vpop.f32.mrf.mxu0
        %v5330 = vadd.f32 %v5317, %v5329
        %v5331 = vpop.f32.mrf.mxu0
        %5332 = vdwg.mxu0
        %5333 = vmatpush.bf16.msra.mxu0 %v4963
        %5334 = vmatpush.bf16.msra.mxu0 %v4959
        %5335 = vmatpush.bf16.msra.mxu0 %v4955
        %5336 = vmatpush.bf16.msra.mxu0 %v4951
        %5337 = vmatpush.bf16.msra.mxu0 %v4947
        %5338 = vmatpush.bf16.msra.mxu0 %v4943
        %5339 = vmatpush.bf16.msra.mxu0 %v4939
        %5340 = vmatpush.bf16.msra.mxu0 %v4935
        %5341 = vmatmul.bf16.gmra.mxu0 %v3717
        %v5342 = vpop.f32.mrf.mxu0
        %v5343 = vadd.f32 %v5330, %v5342
        %v5344 = vpop.f32.mrf.mxu0
        %5345 = vdwg.mxu0
        %5346 = vmatpush.bf16.msra.mxu0 %v4995
        %5347 = vmatpush.bf16.msra.mxu0 %v4991
        %5348 = vmatpush.bf16.msra.mxu0 %v4987
        %5349 = vmatpush.bf16.msra.mxu0 %v4983
        %5350 = vmatpush.bf16.msra.mxu0 %v4979
        %5351 = vmatpush.bf16.msra.mxu0 %v4975
        %5352 = vmatpush.bf16.msra.mxu0 %v4971
        %5353 = vmatpush.bf16.msra.mxu0 %v4967
        %5354 = vmatmul.bf16.gmra.mxu0 %v3718
        %v5355 = vpop.f32.mrf.mxu0
        %v5356 = vadd.f32 %v5343, %v5355
        %v5357 = vpop.f32.mrf.mxu0
        %5358 = vdwg.mxu0
        %5359 = vmatpush.bf16.msra.mxu0 %v4772
        %5360 = vmatpush.bf16.msra.mxu0 %v4768
        %5361 = vmatpush.bf16.msra.mxu0 %v4764
        %5362 = vmatpush.bf16.msra.mxu0 %v4760
        %5363 = vmatpush.bf16.msra.mxu0 %v4756
        %5364 = vmatpush.bf16.msra.mxu0 %v4752
        %5365 = vmatpush.bf16.msra.mxu0 %v4748
        %5366 = vmatpush.bf16.msra.mxu0 %v4744
        %5367 = vmatmul.bf16.gmra.mxu0 %v3711
        %v5368 = vpop.f32.mrf.mxu0
        %v5369 = vadd.f32 0.0, %v5368
        %v5370 = vpop.f32.mrf.mxu0
        %5371 = vdwg.mxu0
        %5372 = vmatpush.bf16.msra.mxu0 %v4804
        %5373 = vmatpush.bf16.msra.mxu0 %v4800
        %5374 = vmatpush.bf16.msra.mxu0 %v4796
        %5375 = vmatpush.bf16.msra.mxu0 %v4792
        %5376 = vmatpush.bf16.msra.mxu0 %v4788
        %5377 = vmatpush.bf16.msra.mxu0 %v4784
        %5378 = vmatpush.bf16.msra.mxu0 %v4780
        %5379 = vmatpush.bf16.msra.mxu0 %v4776
        %5380 = vmatmul.bf16.gmra.mxu0 %v3712
        %v5381 = vpop.f32.mrf.mxu0
        %v5382 = vadd.f32 %v5369, %v5381
        %v5383 = vpop.f32.mrf.mxu0
        %5384 = vdwg.mxu0
        %5385 = vmatpush.bf16.msra.mxu0 %v4836
        %5386 = vmatpush.bf16.msra.mxu0 %v4832
        %5387 = vmatpush.bf16.msra.mxu0 %v4828
        %5388 = vmatpush.bf16.msra.mxu0 %v4824
        %5389 = vmatpush.bf16.msra.mxu0 %v4820
        %5390 = vmatpush.bf16.msra.mxu0 %v4816
        %5391 = vmatpush.bf16.msra.mxu0 %v4812
        %5392 = vmatpush.bf16.msra.mxu0 %v4808
        %5393 = vmatmul.bf16.gmra.mxu0 %v3713
        %v5394 = vpop.f32.mrf.mxu0
        %v5395 = vadd.f32 %v5382, %v5394
        %v5396 = vpop.f32.mrf.mxu0
        %5397 = vdwg.mxu0
        %5398 = vmatpush.bf16.msra.mxu0 %v4868
        %5399 = vmatpush.bf16.msra.mxu0 %v4864
        %5400 = vmatpush.bf16.msra.mxu0 %v4860
        %5401 = vmatpush.bf16.msra.mxu0 %v4856
        %5402 = vmatpush.bf16.msra.mxu0 %v4852
        %5403 = vmatpush.bf16.msra.mxu0 %v4848
        %5404 = vmatpush.bf16.msra.mxu0 %v4844
        %5405 = vmatpush.bf16.msra.mxu0 %v4840
        %5406 = vmatmul.bf16.gmra.mxu0 %v3714
        %v5407 = vpop.f32.mrf.mxu0
        %v5408 = vadd.f32 %v5395, %v5407
        %v5409 = vpop.f32.mrf.mxu0
        %5410 = vdwg.mxu0
        %5411 = vmatpush.bf16.msra.mxu0 %v4900
        %5412 = vmatpush.bf16.msra.mxu0 %v4896
        %5413 = vmatpush.bf16.msra.mxu0 %v4892
        %5414 = vmatpush.bf16.msra.mxu0 %v4888
        %5415 = vmatpush.bf16.msra.mxu0 %v4884
        %5416 = vmatpush.bf16.msra.mxu0 %v4880
        %5417 = vmatpush.bf16.msra.mxu0 %v4876
        %5418 = vmatpush.bf16.msra.mxu0 %v4872
        %5419 = vmatmul.bf16.gmra.mxu0 %v3715
        %v5420 = vpop.f32.mrf.mxu0
        %v5421 = vadd.f32 %v5408, %v5420
        %v5422 = vpop.f32.mrf.mxu0
        %5423 = vdwg.mxu0
        %5424 = vmatpush.bf16.msra.mxu0 %v4932
        %5425 = vmatpush.bf16.msra.mxu0 %v4928
        %5426 = vmatpush.bf16.msra.mxu0 %v4924
        %5427 = vmatpush.bf16.msra.mxu0 %v4920
        %5428 = vmatpush.bf16.msra.mxu0 %v4916
        %5429 = vmatpush.bf16.msra.mxu0 %v4912
        %5430 = vmatpush.bf16.msra.mxu0 %v4908
        %5431 = vmatpush.bf16.msra.mxu0 %v4904
        %5432 = vmatmul.bf16.gmra.mxu0 %v3716
        %v5433 = vpop.f32.mrf.mxu0
        %v5434 = vadd.f32 %v5421, %v5433
        %v5435 = vpop.f32.mrf.mxu0
        %5436 = vdwg.mxu0
        %5437 = vmatpush.bf16.msra.mxu0 %v4964
        %5438 = vmatpush.bf16.msra.mxu0 %v4960
        %5439 = vmatpush.bf16.msra.mxu0 %v4956
        %5440 = vmatpush.bf16.msra.mxu0 %v4952
        %5441 = vmatpush.bf16.msra.mxu0 %v4948
        %5442 = vmatpush.bf16.msra.mxu0 %v4944
        %5443 = vmatpush.bf16.msra.mxu0 %v4940
        %5444 = vmatpush.bf16.msra.mxu0 %v4936
        %5445 = vmatmul.bf16.gmra.mxu0 %v3717
        %v5446 = vpop.f32.mrf.mxu0
        %v5447 = vadd.f32 %v5434, %v5446
        %v5448 = vpop.f32.mrf.mxu0
        %5449 = vdwg.mxu0
        %5450 = vmatpush.bf16.msra.mxu0 %v4996
        %5451 = vmatpush.bf16.msra.mxu0 %v4992
        %5452 = vmatpush.bf16.msra.mxu0 %v4988
        %5453 = vmatpush.bf16.msra.mxu0 %v4984
        %5454 = vmatpush.bf16.msra.mxu0 %v4980
        %5455 = vmatpush.bf16.msra.mxu0 %v4976
        %5456 = vmatpush.bf16.msra.mxu0 %v4972
        %5457 = vmatpush.bf16.msra.mxu0 %v4968
        %5458 = vmatmul.bf16.gmra.mxu0 %v3718
        %v5459 = vpop.f32.mrf.mxu0
        %v5460 = vadd.f32 %v5447, %v5459
        %v5461 = vpop.f32.mrf.mxu0
        %5462 = vdwg.mxu0
        %5463 = vmatpush.bf16.msra.mxu0 %v4773
        %5464 = vmatpush.bf16.msra.mxu0 %v4769
        %5465 = vmatpush.bf16.msra.mxu0 %v4765
        %5466 = vmatpush.bf16.msra.mxu0 %v4761
        %5467 = vmatpush.bf16.msra.mxu0 %v4757
        %5468 = vmatpush.bf16.msra.mxu0 %v4753
        %5469 = vmatpush.bf16.msra.mxu0 %v4749
        %5470 = vmatpush.bf16.msra.mxu0 %v4745
        %5471 = vmatmul.bf16.gmra.mxu0 %v3711
        %v5472 = vpop.f32.mrf.mxu0
        %v5473 = vadd.f32 0.0, %v5472
        %v5474 = vpop.f32.mrf.mxu0
        %5475 = vdwg.mxu0
        %5476 = vmatpush.bf16.msra.mxu0 %v4805
        %5477 = vmatpush.bf16.msra.mxu0 %v4801
        %5478 = vmatpush.bf16.msra.mxu0 %v4797
        %5479 = vmatpush.bf16.msra.mxu0 %v4793
        %5480 = vmatpush.bf16.msra.mxu0 %v4789
        %5481 = vmatpush.bf16.msra.mxu0 %v4785
        %5482 = vmatpush.bf16.msra.mxu0 %v4781
        %5483 = vmatpush.bf16.msra.mxu0 %v4777
        %5484 = vmatmul.bf16.gmra.mxu0 %v3712
        %v5485 = vpop.f32.mrf.mxu0
        %v5486 = vadd.f32 %v5473, %v5485
        %v5487 = vpop.f32.mrf.mxu0
        %5488 = vdwg.mxu0
        %5489 = vmatpush.bf16.msra.mxu0 %v4837
        %5490 = vmatpush.bf16.msra.mxu0 %v4833
        %5491 = vmatpush.bf16.msra.mxu0 %v4829
        %5492 = vmatpush.bf16.msra.mxu0 %v4825
        %5493 = vmatpush.bf16.msra.mxu0 %v4821
        %5494 = vmatpush.bf16.msra.mxu0 %v4817
        %5495 = vmatpush.bf16.msra.mxu0 %v4813
        %5496 = vmatpush.bf16.msra.mxu0 %v4809
        %5497 = vmatmul.bf16.gmra.mxu0 %v3713
        %v5498 = vpop.f32.mrf.mxu0
        %v5499 = vadd.f32 %v5486, %v5498
        %v5500 = vpop.f32.mrf.mxu0
        %5501 = vdwg.mxu0
        %5502 = vmatpush.bf16.msra.mxu0 %v4869
        %5503 = vmatpush.bf16.msra.mxu0 %v4865
        %5504 = vmatpush.bf16.msra.mxu0 %v4861
        %5505 = vmatpush.bf16.msra.mxu0 %v4857
        %5506 = vmatpush.bf16.msra.mxu0 %v4853
        %5507 = vmatpush.bf16.msra.mxu0 %v4849
        %5508 = vmatpush.bf16.msra.mxu0 %v4845
        %5509 = vmatpush.bf16.msra.mxu0 %v4841
        %5510 = vmatmul.bf16.gmra.mxu0 %v3714
        %v5511 = vpop.f32.mrf.mxu0
        %v5512 = vadd.f32 %v5499, %v5511
        %v5513 = vpop.f32.mrf.mxu0
        %5514 = vdwg.mxu0
        %5515 = vmatpush.bf16.msra.mxu0 %v4901
        %5516 = vmatpush.bf16.msra.mxu0 %v4897
        %5517 = vmatpush.bf16.msra.mxu0 %v4893
        %5518 = vmatpush.bf16.msra.mxu0 %v4889
        %5519 = vmatpush.bf16.msra.mxu0 %v4885
        %5520 = vmatpush.bf16.msra.mxu0 %v4881
        %5521 = vmatpush.bf16.msra.mxu0 %v4877
        %5522 = vmatpush.bf16.msra.mxu0 %v4873
        %5523 = vmatmul.bf16.gmra.mxu0 %v3715
        %v5524 = vpop.f32.mrf.mxu0
        %v5525 = vadd.f32 %v5512, %v5524
        %v5526 = vpop.f32.mrf.mxu0
        %5527 = vdwg.mxu0
        %5528 = vmatpush.bf16.msra.mxu0 %v4933
        %5529 = vmatpush.bf16.msra.mxu0 %v4929
        %5530 = vmatpush.bf16.msra.mxu0 %v4925
        %5531 = vmatpush.bf16.msra.mxu0 %v4921
        %5532 = vmatpush.bf16.msra.mxu0 %v4917
        %5533 = vmatpush.bf16.msra.mxu0 %v4913
        %5534 = vmatpush.bf16.msra.mxu0 %v4909
        %5535 = vmatpush.bf16.msra.mxu0 %v4905
        %5536 = vmatmul.bf16.gmra.mxu0 %v3716
        %v5537 = vpop.f32.mrf.mxu0
        %v5538 = vadd.f32 %v5525, %v5537
        %v5539 = vpop.f32.mrf.mxu0
        %5540 = vdwg.mxu0
        %5541 = vmatpush.bf16.msra.mxu0 %v4965
        %5542 = vmatpush.bf16.msra.mxu0 %v4961
        %5543 = vmatpush.bf16.msra.mxu0 %v4957
        %5544 = vmatpush.bf16.msra.mxu0 %v4953
        %5545 = vmatpush.bf16.msra.mxu0 %v4949
        %5546 = vmatpush.bf16.msra.mxu0 %v4945
        %5547 = vmatpush.bf16.msra.mxu0 %v4941
        %5548 = vmatpush.bf16.msra.mxu0 %v4937
        %5549 = vmatmul.bf16.gmra.mxu0 %v3717
        %v5550 = vpop.f32.mrf.mxu0
        %v5551 = vadd.f32 %v5538, %v5550
        %v5552 = vpop.f32.mrf.mxu0
        %5553 = vdwg.mxu0
        %5554 = vmatpush.bf16.msra.mxu0 %v4997
        %5555 = vmatpush.bf16.msra.mxu0 %v4993
        %5556 = vmatpush.bf16.msra.mxu0 %v4989
        %5557 = vmatpush.bf16.msra.mxu0 %v4985
        %5558 = vmatpush.bf16.msra.mxu0 %v4981
        %5559 = vmatpush.bf16.msra.mxu0 %v4977
        %5560 = vmatpush.bf16.msra.mxu0 %v4973
        %5561 = vmatpush.bf16.msra.mxu0 %v4969
        %5562 = vmatmul.bf16.gmra.mxu0 %v3718
        %v5563 = vpop.f32.mrf.mxu0
        %v5564 = vadd.f32 %v5551, %v5563
        %v5565 = vpop.f32.mrf.mxu0
        %5566 = vdwg.mxu0
        %5567 = vmatpush.bf16.msra.mxu0 %v4774
        %5568 = vmatpush.bf16.msra.mxu0 %v4770
        %5569 = vmatpush.bf16.msra.mxu0 %v4766
        %5570 = vmatpush.bf16.msra.mxu0 %v4762
        %5571 = vmatpush.bf16.msra.mxu0 %v4758
        %5572 = vmatpush.bf16.msra.mxu0 %v4754
        %5573 = vmatpush.bf16.msra.mxu0 %v4750
        %5574 = vmatpush.bf16.msra.mxu0 %v4746
        %5575 = vmatmul.bf16.gmra.mxu0 %v3711
        %v5576 = vpop.f32.mrf.mxu0
        %v5577 = vadd.f32 0.0, %v5576
        %v5578 = vpop.f32.mrf.mxu0
        %5579 = vdwg.mxu0
        %5580 = vmatpush.bf16.msra.mxu0 %v4806
        %5581 = vmatpush.bf16.msra.mxu0 %v4802
        %5582 = vmatpush.bf16.msra.mxu0 %v4798
        %5583 = vmatpush.bf16.msra.mxu0 %v4794
        %5584 = vmatpush.bf16.msra.mxu0 %v4790
        %5585 = vmatpush.bf16.msra.mxu0 %v4786
        %5586 = vmatpush.bf16.msra.mxu0 %v4782
        %5587 = vmatpush.bf16.msra.mxu0 %v4778
        %5588 = vmatmul.bf16.gmra.mxu0 %v3712
        %v5589 = vpop.f32.mrf.mxu0
        %v5590 = vadd.f32 %v5577, %v5589
        %v5591 = vpop.f32.mrf.mxu0
        %5592 = vdwg.mxu0
        %5593 = vmatpush.bf16.msra.mxu0 %v4838
        %5594 = vmatpush.bf16.msra.mxu0 %v4834
        %5595 = vmatpush.bf16.msra.mxu0 %v4830
        %5596 = vmatpush.bf16.msra.mxu0 %v4826
        %5597 = vmatpush.bf16.msra.mxu0 %v4822
        %5598 = vmatpush.bf16.msra.mxu0 %v4818
        %5599 = vmatpush.bf16.msra.mxu0 %v4814
        %5600 = vmatpush.bf16.msra.mxu0 %v4810
        %5601 = vmatmul.bf16.gmra.mxu0 %v3713
        %v5602 = vpop.f32.mrf.mxu0
        %v5603 = vadd.f32 %v5590, %v5602
        %v5604 = vpop.f32.mrf.mxu0
        %5605 = vdwg.mxu0
        %5606 = vmatpush.bf16.msra.mxu0 %v4870
        %5607 = vmatpush.bf16.msra.mxu0 %v4866
        %5608 = vmatpush.bf16.msra.mxu0 %v4862
        %5609 = vmatpush.bf16.msra.mxu0 %v4858
        %5610 = vmatpush.bf16.msra.mxu0 %v4854
        %5611 = vmatpush.bf16.msra.mxu0 %v4850
        %5612 = vmatpush.bf16.msra.mxu0 %v4846
        %5613 = vmatpush.bf16.msra.mxu0 %v4842
        %5614 = vmatmul.bf16.gmra.mxu0 %v3714
        %v5615 = vpop.f32.mrf.mxu0
        %v5616 = vadd.f32 %v5603, %v5615
        %v5617 = vpop.f32.mrf.mxu0
        %5618 = vdwg.mxu0
        %5619 = vmatpush.bf16.msra.mxu0 %v4902
        %5620 = vmatpush.bf16.msra.mxu0 %v4898
        %5621 = vmatpush.bf16.msra.mxu0 %v4894
        %5622 = vmatpush.bf16.msra.mxu0 %v4890
        %5623 = vmatpush.bf16.msra.mxu0 %v4886
        %5624 = vmatpush.bf16.msra.mxu0 %v4882
        %5625 = vmatpush.bf16.msra.mxu0 %v4878
        %5626 = vmatpush.bf16.msra.mxu0 %v4874
        %5627 = vmatmul.bf16.gmra.mxu0 %v3715
        %v5628 = vpop.f32.mrf.mxu0
        %v5629 = vadd.f32 %v5616, %v5628
        %v5630 = vpop.f32.mrf.mxu0
        %5631 = vdwg.mxu0
        %5632 = vmatpush.bf16.msra.mxu0 %v4934
        %5633 = vmatpush.bf16.msra.mxu0 %v4930
        %5634 = vmatpush.bf16.msra.mxu0 %v4926
        %5635 = vmatpush.bf16.msra.mxu0 %v4922
        %5636 = vmatpush.bf16.msra.mxu0 %v4918
        %5637 = vmatpush.bf16.msra.mxu0 %v4914
        %5638 = vmatpush.bf16.msra.mxu0 %v4910
        %5639 = vmatpush.bf16.msra.mxu0 %v4906
        %5640 = vmatmul.bf16.gmra.mxu0 %v3716
        %v5641 = vpop.f32.mrf.mxu0
        %v5642 = vadd.f32 %v5629, %v5641
        %v5643 = vpop.f32.mrf.mxu0
        %5644 = vdwg.mxu0
        %5645 = vmatpush.bf16.msra.mxu0 %v4966
        %5646 = vmatpush.bf16.msra.mxu0 %v4962
        %5647 = vmatpush.bf16.msra.mxu0 %v4958
        %5648 = vmatpush.bf16.msra.mxu0 %v4954
        %5649 = vmatpush.bf16.msra.mxu0 %v4950
        %5650 = vmatpush.bf16.msra.mxu0 %v4946
        %5651 = vmatpush.bf16.msra.mxu0 %v4942
        %5652 = vmatpush.bf16.msra.mxu0 %v4938
        %5653 = vmatmul.bf16.gmra.mxu0 %v3717
        %v5654 = vpop.f32.mrf.mxu0
        %v5655 = vadd.f32 %v5642, %v5654
        %v5656 = vpop.f32.mrf.mxu0
        %5657 = vdwg.mxu0
        %5658 = vmatpush.bf16.msra.mxu0 %v4998
        %5659 = vmatpush.bf16.msra.mxu0 %v4994
        %5660 = vmatpush.bf16.msra.mxu0 %v4990
        %5661 = vmatpush.bf16.msra.mxu0 %v4986
        %5662 = vmatpush.bf16.msra.mxu0 %v4982
        %5663 = vmatpush.bf16.msra.mxu0 %v4978
        %5664 = vmatpush.bf16.msra.mxu0 %v4974
        %5665 = vmatpush.bf16.msra.mxu0 %v4970
        %5666 = vmatmul.bf16.gmra.mxu0 %v3718
        %v5667 = vpop.f32.mrf.mxu0
        %v5668 = vadd.f32 %v5655, %v5667
        %v5669 = vpop.f32.mrf.mxu0
        %5670 = vdwg.mxu0
        %v5671 = vrot.slane %v5356, 4
        %v5672 = vadd.f32 %v5356, %v5671
        %v5673 = vrot.slane %v5672, 2
        %v5674 = vadd.f32 %v5672, %v5673
        %v5675 = vrot.slane %v5674, 1
        %v5676 = vadd.f32 %v5674, %v5675
        %v5677 = vrot.slane %v5460, 4
        %v5678 = vadd.f32 %v5460, %v5677
        %v5679 = vrot.slane %v5678, 2
        %v5680 = vadd.f32 %v5678, %v5679
        %v5681 = vrot.slane %v5680, 1
        %v5682 = vadd.f32 %v5680, %v5681
        %v5683 = vrot.slane %v5564, 4
        %v5684 = vadd.f32 %v5564, %v5683
        %v5685 = vrot.slane %v5684, 2
        %v5686 = vadd.f32 %v5684, %v5685
        %v5687 = vrot.slane %v5686, 1
        %v5688 = vadd.f32 %v5686, %v5687
        %v5689 = vrot.slane %v5668, 4
        %v5690 = vadd.f32 %v5668, %v5689
        %v5691 = vrot.slane %v5690, 2
        %v5692 = vadd.f32 %v5690, %v5691
        %v5693 = vrot.slane %v5692, 1
        %v5694 = vadd.f32 %v5692, %v5693
        %v5695 = vmul.f32 %v5676, %v716
        %v5696 = vmul.f32 %v5682, %v716
        %v5697 = vmul.f32 %v5688, %v716
        %v5698 = vmul.f32 %v5694, %v716
        %v5699 = vmul.f32 %v5356, %v5356
        %v5700 = vmul.f32 %v5460, %v5460
        %v5701 = vmul.f32 %v5564, %v5564
        %v5702 = vmul.f32 %v5668, %v5668
        %v5703 = vrot.slane %v5699, 4
        %v5704 = vadd.f32 %v5699, %v5703
        %v5705 = vrot.slane %v5704, 2
        %v5706 = vadd.f32 %v5704, %v5705
        %v5707 = vrot.slane %v5706, 1
        %v5708 = vadd.f32 %v5706, %v5707
        %v5709 = vrot.slane %v5700, 4
        %v5710 = vadd.f32 %v5700, %v5709
        %v5711 = vrot.slane %v5710, 2
        %v5712 = vadd.f32 %v5710, %v5711
        %v5713 = vrot.slane %v5712, 1
        %v5714 = vadd.f32 %v5712, %v5713
        %v5715 = vrot.slane %v5701, 4
        %v5716 = vadd.f32 %v5701, %v5715
        %v5717 = vrot.slane %v5716, 2
        %v5718 = vadd.f32 %v5716, %v5717
        %v5719 = vrot.slane %v5718, 1
        %v5720 = vadd.f32 %v5718, %v5719
        %v5721 = vrot.slane %v5702, 4
        %v5722 = vadd.f32 %v5702, %v5721
        %v5723 = vrot.slane %v5722, 2
        %v5724 = vadd.f32 %v5722, %v5723
        %v5725 = vrot.slane %v5724, 1
        %v5726 = vadd.f32 %v5724, %v5725
        %v5727 = vmul.f32 %v5708, %v716
        %v5728 = vmul.f32 %v5714, %v716
        %v5729 = vmul.f32 %v5720, %v716
        %v5730 = vmul.f32 %v5726, %v716
        %v5731 = vmul.f32 %v5695, %v5695
        %v5732 = vmul.f32 %v5696, %v5696
        %v5733 = vmul.f32 %v5697, %v5697
        %v5734 = vmul.f32 %v5698, %v5698
        %v5735 = vsub.f32 %v5727, %v5731
        %v5736 = vsub.f32 %v5728, %v5732
        %v5737 = vsub.f32 %v5729, %v5733
        %v5738 = vsub.f32 %v5730, %v5734
        %v5739 = vmax.f32 %v5735, 0.0
        %v5740 = vmax.f32 %v5736, 0.0
        %v5741 = vmax.f32 %v5737, 0.0
        %v5742 = vmax.f32 %v5738, 0.0
        %v5743 = vadd.f32 %v5739, 1e-05
        %v5744 = vadd.f32 %v5740, 1e-05
        %v5745 = vadd.f32 %v5741, 1e-05
        %v5746 = vadd.f32 %v5742, 1e-05
        %v5747 = vrsqrt.pop %v5743
        %v5748 = vmul.f32 %v5747, %v5743
        %v5749 = vmul.f32 %v5748, %v5747
        %v5750 = vmul.f32 0.5, %v5749
        %v5751 = vsub.f32 1.5, %v5750
        %v5752 = vmul.f32 %v5747, %v5751
        %vm5753 = vweird.f32 %v5743
        %vm5754 = vweird.f32 %v5747
        %vm5755 = vmor %vm5753, %vm5754
        %v5756 = vsel %vm5755, %v5747, %v5752
        %v5757 = vrsqrt.pop %v5744
        %v5758 = vmul.f32 %v5757, %v5744
        %v5759 = vmul.f32 %v5758, %v5757
        %v5760 = vmul.f32 0.5, %v5759
        %v5761 = vsub.f32 1.5, %v5760
        %v5762 = vmul.f32 %v5757, %v5761
        %vm5763 = vweird.f32 %v5744
        %vm5764 = vweird.f32 %v5757
        %vm5765 = vmor %vm5763, %vm5764
        %v5766 = vsel %vm5765, %v5757, %v5762
        %v5767 = vrsqrt.pop %v5745
        %v5768 = vmul.f32 %v5767, %v5745
        %v5769 = vmul.f32 %v5768, %v5767
        %v5770 = vmul.f32 0.5, %v5769
        %v5771 = vsub.f32 1.5, %v5770
        %v5772 = vmul.f32 %v5767, %v5771
        %vm5773 = vweird.f32 %v5745
        %vm5774 = vweird.f32 %v5767
        %vm5775 = vmor %vm5773, %vm5774
        %v5776 = vsel %vm5775, %v5767, %v5772
        %v5777 = vrsqrt.pop %v5746
        %v5778 = vmul.f32 %v5777, %v5746
        %v5779 = vmul.f32 %v5778, %v5777
        %v5780 = vmul.f32 0.5, %v5779
        %v5781 = vsub.f32 1.5, %v5780
        %v5782 = vmul.f32 %v5777, %v5781
        %vm5783 = vweird.f32 %v5746
        %vm5784 = vweird.f32 %v5777
        %vm5785 = vmor %vm5783, %vm5784
        %v5786 = vsel %vm5785, %v5777, %v5782
        %v5787 = vmul.f32 %v440, %v5756
        %v5788 = vmul.f32 %v441, %v5766
        %v5789 = vmul.f32 %v442, %v5776
        %v5790 = vmul.f32 %v443, %v5786
        %v5791 = vmul.f32 %v5695, %v5787
        %v5792 = vmul.f32 %v5696, %v5788
        %v5793 = vmul.f32 %v5697, %v5789
        %v5794 = vmul.f32 %v5698, %v5790
        %v5799 = vrot.slane %v5791, 7
        %v5800 = vrot.slane %v5792, 7
        %v5801 = vrot.slane %v5793, 7
        %v5802 = vrot.slane %v5794, 7
        %v5807 = vsub.f32 %v440, %v5799
        %v5808 = vsub.f32 %v441, %v5800
        %v5809 = vsub.f32 %v442, %v5801
        %v5810 = vsub.f32 %v443, %v5802
        %v5811 = vperm.slane %v5787, 6
        %v5812 = vperm.slane %v5788, 6
        %v5813 = vperm.slane %v5789, 6
        %v5814 = vperm.slane %v5790, 6
        %v5815 = vmul.f32 %v5356, %v5811
        %v5816 = vmul.f32 %v5460, %v5812
        %v5817 = vmul.f32 %v5564, %v5813
        %v5818 = vmul.f32 %v5668, %v5814
        %v5819 = vperm.slane %v5807, 7
        %v5820 = vperm.slane %v5808, 7
        %v5821 = vperm.slane %v5809, 7
        %v5822 = vperm.slane %v5810, 7
        %v5823 = vadd.f32 %v5815, %v5819
        %v5824 = vadd.f32 %v5816, %v5820
        %v5825 = vadd.f32 %v5817, %v5821
        %v5826 = vadd.f32 %v5818, %v5822
        %v5827 = vmax.f32 %v5823, 0.0
        %v5828 = vmax.f32 %v5824, 0.0
        %v5829 = vmax.f32 %v5825, 0.0
        %v5830 = vmax.f32 %v5826, 0.0
        %v5831 = vpack.c.bf16 %v5827, %v5827
        %v5832 = vpack.c.bf16 %v5828, %v5828
        %v5833 = vpack.c.bf16 %v5829, %v5829
        %v5834 = vpack.c.bf16 %v5830, %v5830
        %v5835 = vld [vmem:[#allocation11] sm:$0xff]
        %v5836 = vld [vmem:[#allocation11 + $0x8] sm:$0xff]
        %v5837 = vld [vmem:[#allocation11 + $0x10] sm:$0xff]
        %v5838 = vld [vmem:[#allocation11 + $0x18] sm:$0xff]
        %v5839 = vld [vmem:[#allocation11 + $0x20] sm:$0xff]
        %v5840 = vld [vmem:[#allocation11 + $0x28] sm:$0xff]
        %v5841 = vld [vmem:[#allocation11 + $0x30] sm:$0xff]
        %v5842 = vld [vmem:[#allocation11 + $0x38] sm:$0xff]
        %v5843 = vld [vmem:[#allocation11 + $0x40] sm:$0xff]
        %v5844 = vld [vmem:[#allocation11 + $0x48] sm:$0xff]
        %v5845 = vld [vmem:[#allocation11 + $0x50] sm:$0xff]
        %v5846 = vld [vmem:[#allocation11 + $0x58] sm:$0xff]
        %v5847 = vld [vmem:[#allocation11 + $0x60] sm:$0xff]
        %v5848 = vld [vmem:[#allocation11 + $0x68] sm:$0xff]
        %v5849 = vld [vmem:[#allocation11 + $0x70] sm:$0xff]
        %v5850 = vld [vmem:[#allocation11 + $0x78] sm:$0xff]
        %v5851 = vld [vmem:[#allocation11 + $0x80] sm:$0xff]
        %v5852 = vld [vmem:[#allocation11 + $0x88] sm:$0xff]
        %v5853 = vld [vmem:[#allocation11 + $0x90] sm:$0xff]
        %v5854 = vld [vmem:[#allocation11 + $0x98] sm:$0xff]
        %v5855 = vld [vmem:[#allocation11 + $0xa0] sm:$0xff]
        %v5856 = vld [vmem:[#allocation11 + $0xa8] sm:$0xff]
        %v5857 = vld [vmem:[#allocation11 + $0xb0] sm:$0xff]
        %v5858 = vld [vmem:[#allocation11 + $0xb8] sm:$0xff]
        %v5859 = vld [vmem:[#allocation11 + $0xc0] sm:$0xff]
        %v5860 = vld [vmem:[#allocation11 + $0xc8] sm:$0xff]
        %v5861 = vld [vmem:[#allocation11 + $0xd0] sm:$0xff]
        %v5862 = vld [vmem:[#allocation11 + $0xd8] sm:$0xff]
        %v5863 = vld [vmem:[#allocation11 + $0xe0] sm:$0xff]
        %v5864 = vld [vmem:[#allocation11 + $0xe8] sm:$0xff]
        %v5865 = vld [vmem:[#allocation11 + $0xf0] sm:$0xff]
        %v5866 = vld [vmem:[#allocation11 + $0xf8] sm:$0xff]
        %v5867 = vld [vmem:[#allocation11 + $0x100] sm:$0xff]
        %v5868 = vld [vmem:[#allocation11 + $0x108] sm:$0xff]
        %v5869 = vld [vmem:[#allocation11 + $0x110] sm:$0xff]
        %v5870 = vld [vmem:[#allocation11 + $0x118] sm:$0xff]
        %v5871 = vld [vmem:[#allocation11 + $0x120] sm:$0xff]
        %v5872 = vld [vmem:[#allocation11 + $0x128] sm:$0xff]
        %v5873 = vld [vmem:[#allocation11 + $0x130] sm:$0xff]
        %v5874 = vld [vmem:[#allocation11 + $0x138] sm:$0xff]
        %v5875 = vld [vmem:[#allocation11 + $0x140] sm:$0xff]
        %v5876 = vld [vmem:[#allocation11 + $0x148] sm:$0xff]
        %v5877 = vld [vmem:[#allocation11 + $0x150] sm:$0xff]
        %v5878 = vld [vmem:[#allocation11 + $0x158] sm:$0xff]
        %v5879 = vld [vmem:[#allocation11 + $0x160] sm:$0xff]
        %v5880 = vld [vmem:[#allocation11 + $0x168] sm:$0xff]
        %v5881 = vld [vmem:[#allocation11 + $0x170] sm:$0xff]
        %v5882 = vld [vmem:[#allocation11 + $0x178] sm:$0xff]
        %v5883 = vld [vmem:[#allocation11 + $0x180] sm:$0xff]
        %v5884 = vld [vmem:[#allocation11 + $0x188] sm:$0xff]
        %v5885 = vld [vmem:[#allocation11 + $0x190] sm:$0xff]
        %v5886 = vld [vmem:[#allocation11 + $0x198] sm:$0xff]
        %v5887 = vld [vmem:[#allocation11 + $0x1a0] sm:$0xff]
        %v5888 = vld [vmem:[#allocation11 + $0x1a8] sm:$0xff]
        %v5889 = vld [vmem:[#allocation11 + $0x1b0] sm:$0xff]
        %v5890 = vld [vmem:[#allocation11 + $0x1b8] sm:$0xff]
        %v5891 = vld [vmem:[#allocation11 + $0x1c0] sm:$0xff]
        %v5892 = vld [vmem:[#allocation11 + $0x1c8] sm:$0xff]
        %v5893 = vld [vmem:[#allocation11 + $0x1d0] sm:$0xff]
        %v5894 = vld [vmem:[#allocation11 + $0x1d8] sm:$0xff]
        %v5895 = vld [vmem:[#allocation11 + $0x1e0] sm:$0xff]
        %v5896 = vld [vmem:[#allocation11 + $0x1e8] sm:$0xff]
        %v5897 = vld [vmem:[#allocation11 + $0x1f0] sm:$0xff]
        %v5898 = vld [vmem:[#allocation11 + $0x1f8] sm:$0xff]
        %v5963 = vunpack.c.l.b16 %v5835
        %v5964 = vunpack.c.h.b16 %v5835
        %v5965 = vunpack.c.l.b16 %v5836
        %v5966 = vunpack.c.h.b16 %v5836
        %v5967 = vunpack.c.l.b16 %v5837
        %v5968 = vunpack.c.h.b16 %v5837
        %v5969 = vunpack.c.l.b16 %v5838
        %v5970 = vunpack.c.h.b16 %v5838
        %v5971 = vunpack.c.l.b16 %v5839
        %v5972 = vunpack.c.h.b16 %v5839
        %v5973 = vunpack.c.l.b16 %v5840
        %v5974 = vunpack.c.h.b16 %v5840
        %v5975 = vunpack.c.l.b16 %v5841
        %v5976 = vunpack.c.h.b16 %v5841
        %v5977 = vunpack.c.l.b16 %v5842
        %v5978 = vunpack.c.h.b16 %v5842
        %v5979 = vunpack.c.l.b16 %v5843
        %v5980 = vunpack.c.h.b16 %v5843
        %v5981 = vunpack.c.l.b16 %v5844
        %v5982 = vunpack.c.h.b16 %v5844
        %v5983 = vunpack.c.l.b16 %v5845
        %v5984 = vunpack.c.h.b16 %v5845
        %v5985 = vunpack.c.l.b16 %v5846
        %v5986 = vunpack.c.h.b16 %v5846
        %v5987 = vunpack.c.l.b16 %v5847
        %v5988 = vunpack.c.h.b16 %v5847
        %v5989 = vunpack.c.l.b16 %v5848
        %v5990 = vunpack.c.h.b16 %v5848
        %v5991 = vunpack.c.l.b16 %v5849
        %v5992 = vunpack.c.h.b16 %v5849
        %v5993 = vunpack.c.l.b16 %v5850
        %v5994 = vunpack.c.h.b16 %v5850
        %v5995 = vunpack.c.l.b16 %v5851
        %v5996 = vunpack.c.h.b16 %v5851
        %v5997 = vunpack.c.l.b16 %v5852
        %v5998 = vunpack.c.h.b16 %v5852
        %v5999 = vunpack.c.l.b16 %v5853
        %v6000 = vunpack.c.h.b16 %v5853
        %v6001 = vunpack.c.l.b16 %v5854
        %v6002 = vunpack.c.h.b16 %v5854
        %v6003 = vunpack.c.l.b16 %v5855
        %v6004 = vunpack.c.h.b16 %v5855
        %v6005 = vunpack.c.l.b16 %v5856
        %v6006 = vunpack.c.h.b16 %v5856
        %v6007 = vunpack.c.l.b16 %v5857
        %v6008 = vunpack.c.h.b16 %v5857
        %v6009 = vunpack.c.l.b16 %v5858
        %v6010 = vunpack.c.h.b16 %v5858
        %v6011 = vunpack.c.l.b16 %v5859
        %v6012 = vunpack.c.h.b16 %v5859
        %v6013 = vunpack.c.l.b16 %v5860
        %v6014 = vunpack.c.h.b16 %v5860
        %v6015 = vunpack.c.l.b16 %v5861
        %v6016 = vunpack.c.h.b16 %v5861
        %v6017 = vunpack.c.l.b16 %v5862
        %v6018 = vunpack.c.h.b16 %v5862
        %v6019 = vunpack.c.l.b16 %v5863
        %v6020 = vunpack.c.h.b16 %v5863
        %v6021 = vunpack.c.l.b16 %v5864
        %v6022 = vunpack.c.h.b16 %v5864
        %v6023 = vunpack.c.l.b16 %v5865
        %v6024 = vunpack.c.h.b16 %v5865
        %v6025 = vunpack.c.l.b16 %v5866
        %v6026 = vunpack.c.h.b16 %v5866
        %v6027 = vunpack.c.l.b16 %v5867
        %v6028 = vunpack.c.h.b16 %v5867
        %v6029 = vunpack.c.l.b16 %v5868
        %v6030 = vunpack.c.h.b16 %v5868
        %v6031 = vunpack.c.l.b16 %v5869
        %v6032 = vunpack.c.h.b16 %v5869
        %v6033 = vunpack.c.l.b16 %v5870
        %v6034 = vunpack.c.h.b16 %v5870
        %v6035 = vunpack.c.l.b16 %v5871
        %v6036 = vunpack.c.h.b16 %v5871
        %v6037 = vunpack.c.l.b16 %v5872
        %v6038 = vunpack.c.h.b16 %v5872
        %v6039 = vunpack.c.l.b16 %v5873
        %v6040 = vunpack.c.h.b16 %v5873
        %v6041 = vunpack.c.l.b16 %v5874
        %v6042 = vunpack.c.h.b16 %v5874
        %v6043 = vunpack.c.l.b16 %v5875
        %v6044 = vunpack.c.h.b16 %v5875
        %v6045 = vunpack.c.l.b16 %v5876
        %v6046 = vunpack.c.h.b16 %v5876
        %v6047 = vunpack.c.l.b16 %v5877
        %v6048 = vunpack.c.h.b16 %v5877
        %v6049 = vunpack.c.l.b16 %v5878
        %v6050 = vunpack.c.h.b16 %v5878
        %v6051 = vunpack.c.l.b16 %v5879
        %v6052 = vunpack.c.h.b16 %v5879
        %v6053 = vunpack.c.l.b16 %v5880
        %v6054 = vunpack.c.h.b16 %v5880
        %v6055 = vunpack.c.l.b16 %v5881
        %v6056 = vunpack.c.h.b16 %v5881
        %v6057 = vunpack.c.l.b16 %v5882
        %v6058 = vunpack.c.h.b16 %v5882
        %v6059 = vunpack.c.l.b16 %v5883
        %v6060 = vunpack.c.h.b16 %v5883
        %v6061 = vunpack.c.l.b16 %v5884
        %v6062 = vunpack.c.h.b16 %v5884
        %v6063 = vunpack.c.l.b16 %v5885
        %v6064 = vunpack.c.h.b16 %v5885
        %v6065 = vunpack.c.l.b16 %v5886
        %v6066 = vunpack.c.h.b16 %v5886
        %v6067 = vunpack.c.l.b16 %v5887
        %v6068 = vunpack.c.h.b16 %v5887
        %v6069 = vunpack.c.l.b16 %v5888
        %v6070 = vunpack.c.h.b16 %v5888
        %v6071 = vunpack.c.l.b16 %v5889
        %v6072 = vunpack.c.h.b16 %v5889
        %v6073 = vunpack.c.l.b16 %v5890
        %v6074 = vunpack.c.h.b16 %v5890
        %v6075 = vunpack.c.l.b16 %v5891
        %v6076 = vunpack.c.h.b16 %v5891
        %v6077 = vunpack.c.l.b16 %v5892
        %v6078 = vunpack.c.h.b16 %v5892
        %v6079 = vunpack.c.l.b16 %v5893
        %v6080 = vunpack.c.h.b16 %v5893
        %v6081 = vunpack.c.l.b16 %v5894
        %v6082 = vunpack.c.h.b16 %v5894
        %v6083 = vunpack.c.l.b16 %v5895
        %v6084 = vunpack.c.h.b16 %v5895
        %v6085 = vunpack.c.l.b16 %v5896
        %v6086 = vunpack.c.h.b16 %v5896
        %v6087 = vunpack.c.l.b16 %v5897
        %v6088 = vunpack.c.h.b16 %v5897
        %v6089 = vunpack.c.l.b16 %v5898
        %v6090 = vunpack.c.h.b16 %v5898
        %v6091 = vpack.c.b16 %v5965, %v5963
        %v6092 = vpack.c.b16 %v5966, %v5964
        %v6093 = vpack.c.b16 %v5969, %v5967
        %v6094 = vpack.c.b16 %v5970, %v5968
        %v6095 = vpack.c.b16 %v5973, %v5971
        %v6096 = vpack.c.b16 %v5974, %v5972
        %v6097 = vpack.c.b16 %v5977, %v5975
        %v6098 = vpack.c.b16 %v5978, %v5976
        %v6099 = vpack.c.b16 %v5981, %v5979
        %v6100 = vpack.c.b16 %v5982, %v5980
        %v6101 = vpack.c.b16 %v5985, %v5983
        %v6102 = vpack.c.b16 %v5986, %v5984
        %v6103 = vpack.c.b16 %v5989, %v5987
        %v6104 = vpack.c.b16 %v5990, %v5988
        %v6105 = vpack.c.b16 %v5993, %v5991
        %v6106 = vpack.c.b16 %v5994, %v5992
        %v6107 = vpack.c.b16 %v5997, %v5995
        %v6108 = vpack.c.b16 %v5998, %v5996
        %v6109 = vpack.c.b16 %v6001, %v5999
        %v6110 = vpack.c.b16 %v6002, %v6000
        %v6111 = vpack.c.b16 %v6005, %v6003
        %v6112 = vpack.c.b16 %v6006, %v6004
        %v6113 = vpack.c.b16 %v6009, %v6007
        %v6114 = vpack.c.b16 %v6010, %v6008
        %v6115 = vpack.c.b16 %v6013, %v6011
        %v6116 = vpack.c.b16 %v6014, %v6012
        %v6117 = vpack.c.b16 %v6017, %v6015
        %v6118 = vpack.c.b16 %v6018, %v6016
        %v6119 = vpack.c.b16 %v6021, %v6019
        %v6120 = vpack.c.b16 %v6022, %v6020
        %v6121 = vpack.c.b16 %v6025, %v6023
        %v6122 = vpack.c.b16 %v6026, %v6024
        %v6123 = vpack.c.b16 %v6029, %v6027
        %v6124 = vpack.c.b16 %v6030, %v6028
        %v6125 = vpack.c.b16 %v6033, %v6031
        %v6126 = vpack.c.b16 %v6034, %v6032
        %v6127 = vpack.c.b16 %v6037, %v6035
        %v6128 = vpack.c.b16 %v6038, %v6036
        %v6129 = vpack.c.b16 %v6041, %v6039
        %v6130 = vpack.c.b16 %v6042, %v6040
        %v6131 = vpack.c.b16 %v6045, %v6043
        %v6132 = vpack.c.b16 %v6046, %v6044
        %v6133 = vpack.c.b16 %v6049, %v6047
        %v6134 = vpack.c.b16 %v6050, %v6048
        %v6135 = vpack.c.b16 %v6053, %v6051
        %v6136 = vpack.c.b16 %v6054, %v6052
        %v6137 = vpack.c.b16 %v6057, %v6055
        %v6138 = vpack.c.b16 %v6058, %v6056
        %v6139 = vpack.c.b16 %v6061, %v6059
        %v6140 = vpack.c.b16 %v6062, %v6060
        %v6141 = vpack.c.b16 %v6065, %v6063
        %v6142 = vpack.c.b16 %v6066, %v6064
        %v6143 = vpack.c.b16 %v6069, %v6067
        %v6144 = vpack.c.b16 %v6070, %v6068
        %v6145 = vpack.c.b16 %v6073, %v6071
        %v6146 = vpack.c.b16 %v6074, %v6072
        %v6147 = vpack.c.b16 %v6077, %v6075
        %v6148 = vpack.c.b16 %v6078, %v6076
        %v6149 = vpack.c.b16 %v6081, %v6079
        %v6150 = vpack.c.b16 %v6082, %v6080
        %v6151 = vpack.c.b16 %v6085, %v6083
        %v6152 = vpack.c.b16 %v6086, %v6084
        %v6153 = vpack.c.b16 %v6089, %v6087
        %v6154 = vpack.c.b16 %v6090, %v6088
        %6219 = vmatpush.bf16.msra.mxu0 %v6105
        %6220 = vmatpush.bf16.msra.mxu0 %v6103
        %6221 = vmatpush.bf16.msra.mxu0 %v6101
        %6222 = vmatpush.bf16.msra.mxu0 %v6099
        %6223 = vmatpush.bf16.msra.mxu0 %v6097
        %6224 = vmatpush.bf16.msra.mxu0 %v6095
        %6225 = vmatpush.bf16.msra.mxu0 %v6093
        %6226 = vmatpush.bf16.msra.mxu0 %v6091
        %6227 = vmatmul.bf16.gmra.mxu0 %v5831
        %v6228 = vpop.f32.mrf.mxu0
        %v6229 = vadd.f32 0.0, %v6228
        %v6230 = vpop.f32.mrf.mxu0
        %6231 = vdwg.mxu0
        %6232 = vmatpush.bf16.msra.mxu0 %v6121
        %6233 = vmatpush.bf16.msra.mxu0 %v6119
        %6234 = vmatpush.bf16.msra.mxu0 %v6117
        %6235 = vmatpush.bf16.msra.mxu0 %v6115
        %6236 = vmatpush.bf16.msra.mxu0 %v6113
        %6237 = vmatpush.bf16.msra.mxu0 %v6111
        %6238 = vmatpush.bf16.msra.mxu0 %v6109
        %6239 = vmatpush.bf16.msra.mxu0 %v6107
        %6240 = vmatmul.bf16.gmra.mxu0 %v5832
        %v6241 = vpop.f32.mrf.mxu0
        %v6242 = vadd.f32 %v6229, %v6241
        %v6243 = vpop.f32.mrf.mxu0
        %6244 = vdwg.mxu0
        %6245 = vmatpush.bf16.msra.mxu0 %v6137
        %6246 = vmatpush.bf16.msra.mxu0 %v6135
        %6247 = vmatpush.bf16.msra.mxu0 %v6133
        %6248 = vmatpush.bf16.msra.mxu0 %v6131
        %6249 = vmatpush.bf16.msra.mxu0 %v6129
        %6250 = vmatpush.bf16.msra.mxu0 %v6127
        %6251 = vmatpush.bf16.msra.mxu0 %v6125
        %6252 = vmatpush.bf16.msra.mxu0 %v6123
        %6253 = vmatmul.bf16.gmra.mxu0 %v5833
        %v6254 = vpop.f32.mrf.mxu0
        %v6255 = vadd.f32 %v6242, %v6254
        %v6256 = vpop.f32.mrf.mxu0
        %6257 = vdwg.mxu0
        %6258 = vmatpush.bf16.msra.mxu0 %v6153
        %6259 = vmatpush.bf16.msra.mxu0 %v6151
        %6260 = vmatpush.bf16.msra.mxu0 %v6149
        %6261 = vmatpush.bf16.msra.mxu0 %v6147
        %6262 = vmatpush.bf16.msra.mxu0 %v6145
        %6263 = vmatpush.bf16.msra.mxu0 %v6143
        %6264 = vmatpush.bf16.msra.mxu0 %v6141
        %6265 = vmatpush.bf16.msra.mxu0 %v6139
        %6266 = vmatmul.bf16.gmra.mxu0 %v5834
        %v6267 = vpop.f32.mrf.mxu0
        %v6268 = vadd.f32 %v6255, %v6267
        %v6269 = vpop.f32.mrf.mxu0
        %6270 = vdwg.mxu0
        %6271 = vmatpush.bf16.msra.mxu0 %v6106
        %6272 = vmatpush.bf16.msra.mxu0 %v6104
        %6273 = vmatpush.bf16.msra.mxu0 %v6102
        %6274 = vmatpush.bf16.msra.mxu0 %v6100
        %6275 = vmatpush.bf16.msra.mxu0 %v6098
        %6276 = vmatpush.bf16.msra.mxu0 %v6096
        %6277 = vmatpush.bf16.msra.mxu0 %v6094
        %6278 = vmatpush.bf16.msra.mxu0 %v6092
        %6279 = vmatmul.bf16.gmra.mxu0 %v5831
        %v6280 = vpop.f32.mrf.mxu0
        %v6281 = vadd.f32 0.0, %v6280
        %v6282 = vpop.f32.mrf.mxu0
        %6283 = vdwg.mxu0
        %6284 = vmatpush.bf16.msra.mxu0 %v6122
        %6285 = vmatpush.bf16.msra.mxu0 %v6120
        %6286 = vmatpush.bf16.msra.mxu0 %v6118
        %6287 = vmatpush.bf16.msra.mxu0 %v6116
        %6288 = vmatpush.bf16.msra.mxu0 %v6114
        %6289 = vmatpush.bf16.msra.mxu0 %v6112
        %6290 = vmatpush.bf16.msra.mxu0 %v6110
        %6291 = vmatpush.bf16.msra.mxu0 %v6108
        %6292 = vmatmul.bf16.gmra.mxu0 %v5832
        %v6293 = vpop.f32.mrf.mxu0
        %v6294 = vadd.f32 %v6281, %v6293
        %v6295 = vpop.f32.mrf.mxu0
        %6296 = vdwg.mxu0
        %6297 = vmatpush.bf16.msra.mxu0 %v6138
        %6298 = vmatpush.bf16.msra.mxu0 %v6136
        %6299 = vmatpush.bf16.msra.mxu0 %v6134
        %6300 = vmatpush.bf16.msra.mxu0 %v6132
        %6301 = vmatpush.bf16.msra.mxu0 %v6130
        %6302 = vmatpush.bf16.msra.mxu0 %v6128
        %6303 = vmatpush.bf16.msra.mxu0 %v6126
        %6304 = vmatpush.bf16.msra.mxu0 %v6124
        %6305 = vmatmul.bf16.gmra.mxu0 %v5833
        %v6306 = vpop.f32.mrf.mxu0
        %v6307 = vadd.f32 %v6294, %v6306
        %v6308 = vpop.f32.mrf.mxu0
        %6309 = vdwg.mxu0
        %6310 = vmatpush.bf16.msra.mxu0 %v6154
        %6311 = vmatpush.bf16.msra.mxu0 %v6152
        %6312 = vmatpush.bf16.msra.mxu0 %v6150
        %6313 = vmatpush.bf16.msra.mxu0 %v6148
        %6314 = vmatpush.bf16.msra.mxu0 %v6146
        %6315 = vmatpush.bf16.msra.mxu0 %v6144
        %6316 = vmatpush.bf16.msra.mxu0 %v6142
        %6317 = vmatpush.bf16.msra.mxu0 %v6140
        %6318 = vmatmul.bf16.gmra.mxu0 %v5834
        %v6319 = vpop.f32.mrf.mxu0
        %v6320 = vadd.f32 %v6307, %v6319
        %v6321 = vpop.f32.mrf.mxu0
        %6322 = vdwg.mxu0
        %v6323 = vrot.slane %v6268, 4
        %v6324 = vadd.f32 %v6268, %v6323
        %v6325 = vrot.slane %v6324, 2
        %v6326 = vadd.f32 %v6324, %v6325
        %v6327 = vrot.slane %v6326, 1
        %v6328 = vadd.f32 %v6326, %v6327
        %v6329 = vrot.slane %v6320, 4
        %v6330 = vadd.f32 %v6320, %v6329
        %v6331 = vrot.slane %v6330, 2
        %v6332 = vadd.f32 %v6330, %v6331
        %v6333 = vrot.slane %v6332, 1
        %v6334 = vadd.f32 %v6332, %v6333
        %v6335 = vmul.f32 %v6328, %v716
        %v6336 = vmul.f32 %v6334, %v716
        %v6337 = vmul.f32 %v6268, %v6268
        %v6338 = vmul.f32 %v6320, %v6320
        %v6339 = vrot.slane %v6337, 4
        %v6340 = vadd.f32 %v6337, %v6339
        %v6341 = vrot.slane %v6340, 2
        %v6342 = vadd.f32 %v6340, %v6341
        %v6343 = vrot.slane %v6342, 1
        %v6344 = vadd.f32 %v6342, %v6343
        %v6345 = vrot.slane %v6338, 4
        %v6346 = vadd.f32 %v6338, %v6345
        %v6347 = vrot.slane %v6346, 2
        %v6348 = vadd.f32 %v6346, %v6347
        %v6349 = vrot.slane %v6348, 1
        %v6350 = vadd.f32 %v6348, %v6349
        %v6351 = vmul.f32 %v6344, %v716
        %v6352 = vmul.f32 %v6350, %v716
        %v6353 = vmul.f32 %v6335, %v6335
        %v6354 = vmul.f32 %v6336, %v6336
        %v6355 = vsub.f32 %v6351, %v6353
        %v6356 = vsub.f32 %v6352, %v6354
        %v6357 = vmax.f32 %v6355, 0.0
        %v6358 = vmax.f32 %v6356, 0.0
        %v6359 = vadd.f32 %v6357, 1e-05
        %v6360 = vadd.f32 %v6358, 1e-05
        %v6361 = vrsqrt.pop %v6359
        %v6362 = vmul.f32 %v6361, %v6359
        %v6363 = vmul.f32 %v6362, %v6361
        %v6364 = vmul.f32 0.5, %v6363
        %v6365 = vsub.f32 1.5, %v6364
        %v6366 = vmul.f32 %v6361, %v6365
        %vm6367 = vweird.f32 %v6359
        %vm6368 = vweird.f32 %v6361
        %vm6369 = vmor %vm6367, %vm6368
        %v6370 = vsel %vm6369, %v6361, %v6366
        %v6371 = vrsqrt.pop %v6360
        %v6372 = vmul.f32 %v6371, %v6360
        %v6373 = vmul.f32 %v6372, %v6371
        %v6374 = vmul.f32 0.5, %v6373
        %v6375 = vsub.f32 1.5, %v6374
        %v6376 = vmul.f32 %v6371, %v6375
        %vm6377 = vweird.f32 %v6360
        %vm6378 = vweird.f32 %v6371
        %vm6379 = vmor %vm6377, %vm6378
        %v6380 = vsel %vm6379, %v6371, %v6376
        %v6381 = vmul.f32 %v448, %v6370
        %v6382 = vmul.f32 %v449, %v6380
        %v6383 = vmul.f32 %v6335, %v6381
        %v6384 = vmul.f32 %v6336, %v6382
        %v6387 = vrot.slane %v6383, 7
        %v6388 = vrot.slane %v6384, 7
        %v6391 = vsub.f32 %v448, %v6387
        %v6392 = vsub.f32 %v449, %v6388
        %v6393 = vperm.slane %v6381, 0
        %v6394 = vperm.slane %v6382, 0
        %v6395 = vmul.f32 %v6268, %v6393
        %v6396 = vmul.f32 %v6320, %v6394
        %v6397 = vperm.slane %v6391, 1
        %v6398 = vperm.slane %v6392, 1
        %v6399 = vadd.f32 %v6395, %v6397
        %v6400 = vadd.f32 %v6396, %v6398
        %v6401 = vmax.f32 %v6399, 0.0
        %v6402 = vmax.f32 %v6400, 0.0
        %v6403 = vpack.c.bf16 %v6401, %v6401
        %v6404 = vpack.c.bf16 %v6402, %v6402
        %v6405 = vld [vmem:[#allocation13] sm:$0xf]
        %v6406 = vld [vmem:[#allocation13 + $0x4] sm:$0xf]
        %v6407 = vld [vmem:[#allocation13 + $0x8] sm:$0xf]
        %v6408 = vld [vmem:[#allocation13 + $0xc] sm:$0xf]
        %v6409 = vld [vmem:[#allocation13 + $0x10] sm:$0xf]
        %v6410 = vld [vmem:[#allocation13 + $0x14] sm:$0xf]
        %v6411 = vld [vmem:[#allocation13 + $0x18] sm:$0xf]
        %v6412 = vld [vmem:[#allocation13 + $0x1c] sm:$0xf]
        %v6413 = vld [vmem:[#allocation13 + $0x20] sm:$0xf]
        %v6414 = vld [vmem:[#allocation13 + $0x24] sm:$0xf]
        %v6415 = vld [vmem:[#allocation13 + $0x28] sm:$0xf]
        %v6416 = vld [vmem:[#allocation13 + $0x2c] sm:$0xf]
        %v6417 = vld [vmem:[#allocation13 + $0x30] sm:$0xf]
        %v6418 = vld [vmem:[#allocation13 + $0x34] sm:$0xf]
        %v6419 = vld [vmem:[#allocation13 + $0x38] sm:$0xf]
        %v6420 = vld [vmem:[#allocation13 + $0x3c] sm:$0xf]
        %v6421 = vld [vmem:[#allocation13 + $0x40] sm:$0xf]
        %v6422 = vld [vmem:[#allocation13 + $0x44] sm:$0xf]
        %v6423 = vld [vmem:[#allocation13 + $0x48] sm:$0xf]
        %v6424 = vld [vmem:[#allocation13 + $0x4c] sm:$0xf]
        %v6425 = vld [vmem:[#allocation13 + $0x50] sm:$0xf]
        %v6426 = vld [vmem:[#allocation13 + $0x54] sm:$0xf]
        %v6427 = vld [vmem:[#allocation13 + $0x58] sm:$0xf]
        %v6428 = vld [vmem:[#allocation13 + $0x5c] sm:$0xf]
        %v6429 = vld [vmem:[#allocation13 + $0x60] sm:$0xf]
        %v6430 = vld [vmem:[#allocation13 + $0x64] sm:$0xf]
        %v6431 = vld [vmem:[#allocation13 + $0x68] sm:$0xf]
        %v6432 = vld [vmem:[#allocation13 + $0x6c] sm:$0xf]
        %v6433 = vld [vmem:[#allocation13 + $0x70] sm:$0xf]
        %v6434 = vld [vmem:[#allocation13 + $0x74] sm:$0xf]
        %v6435 = vld [vmem:[#allocation13 + $0x78] sm:$0xf]
        %v6436 = vld [vmem:[#allocation13 + $0x7c] sm:$0xf]
        %v6437 = vperm.slane %v448, 2
        %v6470 = vunpack.c.l.b16 %v6405
        %v6471 = vunpack.c.l.b16 %v6406
        %v6472 = vunpack.c.l.b16 %v6407
        %v6473 = vunpack.c.l.b16 %v6408
        %v6474 = vunpack.c.l.b16 %v6409
        %v6475 = vunpack.c.l.b16 %v6410
        %v6476 = vunpack.c.l.b16 %v6411
        %v6477 = vunpack.c.l.b16 %v6412
        %v6478 = vunpack.c.l.b16 %v6413
        %v6479 = vunpack.c.l.b16 %v6414
        %v6480 = vunpack.c.l.b16 %v6415
        %v6481 = vunpack.c.l.b16 %v6416
        %v6482 = vunpack.c.l.b16 %v6417
        %v6483 = vunpack.c.l.b16 %v6418
        %v6484 = vunpack.c.l.b16 %v6419
        %v6485 = vunpack.c.l.b16 %v6420
        %v6486 = vunpack.c.l.b16 %v6421
        %v6487 = vunpack.c.l.b16 %v6422
        %v6488 = vunpack.c.l.b16 %v6423
        %v6489 = vunpack.c.l.b16 %v6424
        %v6490 = vunpack.c.l.b16 %v6425
        %v6491 = vunpack.c.l.b16 %v6426
        %v6492 = vunpack.c.l.b16 %v6427
        %v6493 = vunpack.c.l.b16 %v6428
        %v6494 = vunpack.c.l.b16 %v6429
        %v6495 = vunpack.c.l.b16 %v6430
        %v6496 = vunpack.c.l.b16 %v6431
        %v6497 = vunpack.c.l.b16 %v6432
        %v6498 = vunpack.c.l.b16 %v6433
        %v6499 = vunpack.c.l.b16 %v6434
        %v6500 = vunpack.c.l.b16 %v6435
        %v6501 = vunpack.c.l.b16 %v6436
        %v6502 = vpack.c.b16 %v6471, %v6470
        %v6503 = vpack.c.b16 %v6473, %v6472
        %v6504 = vpack.c.b16 %v6475, %v6474
        %v6505 = vpack.c.b16 %v6477, %v6476
        %v6506 = vpack.c.b16 %v6479, %v6478
        %v6507 = vpack.c.b16 %v6481, %v6480
        %v6508 = vpack.c.b16 %v6483, %v6482
        %v6509 = vpack.c.b16 %v6485, %v6484
        %v6510 = vpack.c.b16 %v6487, %v6486
        %v6511 = vpack.c.b16 %v6489, %v6488
        %v6512 = vpack.c.b16 %v6491, %v6490
        %v6513 = vpack.c.b16 %v6493, %v6492
        %v6514 = vpack.c.b16 %v6495, %v6494
        %v6515 = vpack.c.b16 %v6497, %v6496
        %v6516 = vpack.c.b16 %v6499, %v6498
        %v6517 = vpack.c.b16 %v6501, %v6500
        %6534 = vmatpush.bf16.msra.mxu0 %v6509
        %6535 = vmatpush.bf16.msra.mxu0 %v6508
        %6536 = vmatpush.bf16.msra.mxu0 %v6507
        %6537 = vmatpush.bf16.msra.mxu0 %v6506
        %6538 = vmatpush.bf16.msra.mxu0 %v6505
        %6539 = vmatpush.bf16.msra.mxu0 %v6504
        %6540 = vmatpush.bf16.msra.mxu0 %v6503
        %6541 = vmatpush.bf16.msra.mxu0 %v6502
        %6542 = vmatmul.bf16.gmra.mxu0 %v6403
        %v6543 = vpop.f32.mrf.mxu0
        %v6544 = vadd.f32 %v6437, %v6543
        %v6545 = vpop.f32.mrf.mxu0
        %6546 = vdwg.mxu0
        %6547 = vmatpush.bf16.msra.mxu0 %v6517
        %6548 = vmatpush.bf16.msra.mxu0 %v6516
        %6549 = vmatpush.bf16.msra.mxu0 %v6515
        %6550 = vmatpush.bf16.msra.mxu0 %v6514
        %6551 = vmatpush.bf16.msra.mxu0 %v6513
        %6552 = vmatpush.bf16.msra.mxu0 %v6512
        %6553 = vmatpush.bf16.msra.mxu0 %v6511
        %6554 = vmatpush.bf16.msra.mxu0 %v6510
        %6555 = vmatmul.bf16.gmra.mxu0 %v6404
        %v6556 = vpop.f32.mrf.mxu0
        %v6557 = vadd.f32 %v6544, %v6556
        %v6558 = vpop.f32.mrf.mxu0
        %6559 = vdwg.mxu0
        %6560 = vst [vmem:[%s439] sm:$0xff] %v6557
        %s6561 = sand.u32 %s210, 1
        %s6562 = scalar_lea.sflag [#allocation4], %s6561
        %s6563 = sand.u32 %s210, 1
        %s6564 = smul.addr %s6563, 8
        %s6565 = scalar_lea.vmem [#allocation16], %s6564
        // Predicated region
        $region85: #{tpu_custom_call.1} parent=51 // pred_check
          %p6566 = pneg %p220
        $region86: #{tpu_custom_call.1} parent=51 // pred_check_branch
          %6568 = sbr.rel (%p6566) target = $region88
        $region87: #{tpu_custom_call.1} parent=51 // pred_region
          %6570 = vsyncadd %s6562, 0
          %s6571 = smul.addr %s29, 8
          %s6572 = scalar_lea.hbm %s8, %s6571
          %s6574 = sshll.u32 %s6565, 4
          %s6575 = int_to_ptr.vmem [resolvable:$true] %s6574
          %s6576 = sshll.u32 %s6572, 4
          %s6577 = int_to_ptr.hbm [resolvable:$true] %s6576
          %6579 = dma.vmem_to_hbm [thread:$0]  %s6575, 128, %s6577, %s6562
        $region88: #{tpu_custom_call.1} parent=51 // pred_fallthru
          _
      $region52: #{tpu_custom_call.1} parent=5 // pred_fallthru
        _
      %p6580 = scmp.le.s32.totalorder 2, %s24
      // Predicated region
      $region89: #{tpu_custom_call.1} parent=5 // pred_check
        %p6581 = pneg %p6580
      $region90: #{tpu_custom_call.1} parent=5 // pred_check_branch
        %6583 = sbr.rel (%p6581) target = $region92
      $region91: #{tpu_custom_call.1} parent=5 // pred_region
        %s6584 = ssub.s32 %s24, 2
        // Predicated region
        $region93: #{tpu_custom_call.1} parent=91 // pred_check
          %p6585 = pneg %p226
        $region94: #{tpu_custom_call.1} parent=91 // pred_check_branch
          %6587 = sbr.rel (%p6585) target = $region96
        $region95: #{tpu_custom_call.1} parent=91 // pred_region
          %s6588 = sand.u32 %s211, 1
          %s6589 = scalar_lea.sflag [#allocation4], %s6588
          %s6590 = sand.u32 %s211, 1
          %s6591 = smul.addr %s6590, 8
          %s6592 = scalar_lea.vmem [#allocation16], %s6591
          %6594 = dma.done %s6589, 128
        $region96: #{tpu_custom_call.1} parent=91 // pred_fallthru
          _
      $region92: #{tpu_custom_call.1} parent=5 // pred_fallthru
        _
    $region6: #{tpu_custom_call.1} parent=1 // loop_footer
      %s28 = sadd.s32 1, %s24
    $region7: #{tpu_custom_call.1} parent=1 // loop_footer_branch
      %23 = sbr.rel target = $region3
    $region8: #{tpu_custom_call.1} parent=1 // loop_exit
      _
    %6595 = vsyncpa [#allocation3], 1
    %s6596 = scalar_lea.sflag [#allocation3], 1
    %6597 = vsyncpa %s6596, 1
    %6598 = vsyncpa [#allocation6], 1
    %6599 = vsyncpa [#allocation9], 1
    %6600 = vsyncpa [#allocation12], 1
    %6601 = vsyncpa [#allocation15], 1
    %6602 = vsyncpa [#allocation4], 1
    %s6603 = scalar_lea.sflag [#allocation4], 1
    %6604 = vsyncpa %s6603, 1

</llo_original>
